<compile_context>
chip_gen: v5e
topology: v5e:2x2
jax: 0.10.0
libtpu: 0.0.40
codegen_flags: <defaults>
</compile_context>

<pallas_src>
import jax
import jax.numpy as jnp
from jax.experimental import pallas as pl
from jax.experimental.pallas import tpu as pltpu

_PRE_POOL_HIDDEN = 512   # fixed by the reference: mlp_pre_pool_dims = [emb+h, 512, bottleneck]

_INPUT_NAMES = (
    "last_pos", "last_pos_rel", "h0", "c0",
    "spatial_w", "spatial_b",
    "lstm_wih", "lstm_whh", "lstm_b",
    "h2p_w", "h2p_b",
    "pn_spatial_w", "pn_spatial_b",
    "pn_w1_e", "pn_w1_h", "pn_b1", "pn_bn1_g", "pn_bn1_b",
    "pn_w2", "pn_b2", "pn_bn2_g", "pn_bn2_b",
    "mlp_w1_h", "mlp_w1_p", "mlp_b1", "mlp_bn1_g", "mlp_bn1_b",
    "mlp_w2", "mlp_b2", "mlp_bn2_g", "mlp_bn2_b",
)


# ----------------------------------------------------------------------------
# In-kernel helpers (operate on values, not refs)
# ----------------------------------------------------------------------------
def _bn_relu(x, gamma, beta):
    """Training-mode BatchNorm1d (biased variance, eps=1e-5) fused with ReLU."""
    mean = jnp.mean(x, axis=0, keepdims=True)
    var = jnp.mean((x - mean) ** 2, axis=0, keepdims=True)
    return jnp.maximum((x - mean) * jax.lax.rsqrt(var + 1e-5) * gamma + beta, 0.0)


def _bn_relu_blocks(blocks, gamma, beta):
    """BN+ReLU whose statistics span ALL rows of all blocks (one group's n^2
    pair rows), computed without materializing the concatenated matrix."""
    rows = sum(b.shape[0] for b in blocks)
    mean = sum(jnp.sum(b, axis=0, keepdims=True) for b in blocks) / rows
    var = sum(jnp.sum((b - mean) ** 2, axis=0, keepdims=True) for b in blocks) / rows
    inv = jax.lax.rsqrt(var + 1e-5)
    return [jnp.maximum((b - mean) * inv * gamma + beta, 0.0) for b in blocks]


# ----------------------------------------------------------------------------
# The fused decoder kernel (one grid step == one decode timestep)
# ----------------------------------------------------------------------------
def _make_decoder_kernel(seq_start_end, B, emb, H, bot):
    n_in = len(_INPUT_NAMES)
    f32 = jnp.float32

    def kernel(*refs):
        ins = dict(zip(_INPUT_NAMES, refs[:n_in]))
        pred_ref, hout_ref = refs[n_in], refs[n_in + 1]
        h_scr, c_scr, dec_scr, pos_scr = refs[n_in + 2:]

        t = pl.program_id(0)

        @pl.when(t == 0)
        def _init():
            h_scr[...] = ins["h0"][...]
            c_scr[...] = ins["c0"][...]
            pos_scr[...] = ins["last_pos"][...]
            dec_scr[...] = (
                jnp.dot(ins["last_pos_rel"][...], ins["spatial_w"][...],
                        preferred_element_type=f32) + ins["spatial_b"][...])

        # ------------------ LSTM cell (gate order i, f, g, o) ------------------
        x = dec_scr[...]
        h_prev = h_scr[...]
        c_prev = c_scr[...]
        gates = (jnp.dot(x, ins["lstm_wih"][...], preferred_element_type=f32)
                 + jnp.dot(h_prev, ins["lstm_whh"][...], preferred_element_type=f32)
                 + ins["lstm_b"][...])
        gi = jax.nn.sigmoid(gates[:, 0 * H:1 * H])
        gf = jax.nn.sigmoid(gates[:, 1 * H:2 * H])
        gg = jnp.tanh(gates[:, 2 * H:3 * H])
        go = jax.nn.sigmoid(gates[:, 3 * H:4 * H])
        c_new = gf * c_prev + gi * gg
        h_new = go * jnp.tanh(c_new)
        c_scr[...] = c_new

        # ------------------ hidden2pos + position update -----------------------
        rel_pos = (jnp.dot(h_new, ins["h2p_w"][...], preferred_element_type=f32)
                   + ins["h2p_b"][...])
        curr_pos = rel_pos + pos_scr[...]
        pos_scr[...] = curr_pos
        pred_ref[0] = rel_pos        # stays in VMEM until Pallas flushes the block

        # ------------------ PoolHiddenNet (all pairs built in-kernel) ----------
        # Pair row (i, j): rel = pos[j] - pos[i], hidden = hidden[j];
        # pooled row i = max over j.  BN statistics span one group's n^2 rows.
        pool_rows = []                       # (batch_row_index, (1, bot) value)
        for (start, end) in seq_start_end:
            n = end - start
            pos_g = curr_pos[start:end]      # (n, 2)
            hid_g = h_new[start:end]         # (n, H)
            hid_l1 = jnp.dot(hid_g, ins["pn_w1_h"][...],
                             preferred_element_type=f32)     # shared over all i
            blocks = []
            for i in range(n):
                rel_i = pos_g - pos_g[i:i + 1, :]            # pos[j] - pos[i]
                emb_i = (jnp.dot(rel_i, ins["pn_spatial_w"][...],
                                 preferred_element_type=f32)
                         + ins["pn_spatial_b"][...])
                blocks.append(
                    jnp.dot(emb_i, ins["pn_w1_e"][...], preferred_element_type=f32)
                    + hid_l1 + ins["pn_b1"][...])
            blocks = _bn_relu_blocks(blocks, ins["pn_bn1_g"][...], ins["pn_bn1_b"][...])
            blocks = [jnp.dot(b, ins["pn_w2"][...], preferred_element_type=f32)
                      + ins["pn_b2"][...] for b in blocks]
            blocks = _bn_relu_blocks(blocks, ins["pn_bn2_g"][...], ins["pn_bn2_b"][...])
            for i in range(n):
                pool_rows.append((start + i, jnp.max(blocks[i], axis=0, keepdims=True)))

        # Assemble (B, bottleneck) pool_h via iota-mask row placement (no scatter).
        row_id = jax.lax.broadcasted_iota(jnp.int32, (B, bot), 0)
        pool_h = jnp.zeros((B, bot), f32)
        for r, row in pool_rows:
            pool_h = jnp.where(row_id == r, row, pool_h)

        # ------------------ decoder MLP (updates the hidden state) -------------
        dh = (jnp.dot(h_new, ins["mlp_w1_h"][...], preferred_element_type=f32)
              + jnp.dot(pool_h, ins["mlp_w1_p"][...], preferred_element_type=f32)
              + ins["mlp_b1"][...])
        dh = _bn_relu(dh, ins["mlp_bn1_g"][...], ins["mlp_bn1_b"][...])
        dh = (jnp.dot(dh, ins["mlp_w2"][...], preferred_element_type=f32)
              + ins["mlp_b2"][...])
        dh = _bn_relu(dh, ins["mlp_bn2_g"][...], ins["mlp_bn2_b"][...])
        h_scr[...] = dh
        hout_ref[...] = dh

        # ------------------ next decoder input (spatial embedding) -------------
        dec_scr[...] = (jnp.dot(rel_pos, ins["spatial_w"][...],
                                preferred_element_type=f32) + ins["spatial_b"][...])

    return kernel


# ----------------------------------------------------------------------------
# Wrapper: one pallas_call for the whole decode loop
# ----------------------------------------------------------------------------
def decoder_forward(params, last_pos, last_pos_rel, state_h, state_c,
                    seq_start_end, seq_len):
    """Mirrors Decoder.forward. state_h/state_c: (num_layers=1, batch, h_dim)."""
    B = last_pos.shape[0]
    H = state_h.shape[-1]
    emb = params["spatial_w"].shape[1]
    bot = params["pn_w2"].shape[1]
    mlp_dim = params["mlp_w1_h"].shape[1]
    seq_start_end = tuple((int(s), int(e)) for (s, e) in seq_start_end)

    inputs = [last_pos, last_pos_rel, state_h[0], state_c[0]]
    inputs += [params[name] for name in _INPUT_NAMES[4:]]

    # Constant block index => each weight / initial state is DMA'd once and
    # stays VMEM-resident across all seq_len grid steps.
    in_specs = [pl.BlockSpec(x.shape, lambda t: (0, 0)) for x in inputs]

    out_shape = (jax.ShapeDtypeStruct((seq_len, B, 2), jnp.float32),
                 jax.ShapeDtypeStruct((B, H), jnp.float32))
    out_specs = (pl.BlockSpec((1, B, 2), lambda t: (t, 0, 0)),
                 pl.BlockSpec((B, H), lambda t: (0, 0)))

    scratch_shapes = [
        pltpu.VMEM((B, H), jnp.float32),    # h   (carried across timesteps)
        pltpu.VMEM((B, H), jnp.float32),    # c
        pltpu.VMEM((B, emb), jnp.float32),  # decoder input embedding
        pltpu.VMEM((B, 2), jnp.float32),    # last_pos
    ]

    # Advisory cost estimate for XLA's scheduler.
    mm = lambda m, k, n: 2 * m * k * n
    fl = mm(B, emb, 4 * H) + mm(B, H, 4 * H) + mm(B, H, 2) + mm(B, 2, emb)
    for (s, e) in seq_start_end:
        n = e - s
        fl += mm(n, H, _PRE_POOL_HIDDEN)
        fl += n * (mm(n, 2, emb) + mm(n, emb, _PRE_POOL_HIDDEN)
                   + mm(n, _PRE_POOL_HIDDEN, bot))
    fl += mm(B, H, mlp_dim) + mm(B, bot, mlp_dim) + mm(B, mlp_dim, H)
    cost = pl.CostEstimate(
        flops=int(seq_len * fl),
        transcendentals=int(seq_len * B * 5 * H),
        bytes_accessed=int(4 * (sum(x.size for x in inputs)
                                + seq_len * B * 2 + B * H)))

    kernel = _make_decoder_kernel(seq_start_end, B, emb, H, bot)

    pred, h_final = pl.pallas_call(
        kernel,
        out_shape=out_shape,
        grid_spec=pltpu.PrefetchScalarGridSpec(
            num_scalar_prefetch=0,
            grid=(seq_len,),
            in_specs=in_specs,
            out_specs=out_specs,
            scratch_shapes=scratch_shapes),
        compiler_params=pltpu.CompilerParams(
            dimension_semantics=("arbitrary",)),   # h/c/last_pos carry across steps
        cost_estimate=cost,
    )(*inputs)

    return pred, h_final[None]                     # (seq_len, B, 2), (1, B, H)


# ----------------------------------------------------------------------------
# Parameters (deterministic synthetic init; shapes follow Decoder.__init__).
# Weights of the "concat-input" Linear layers are stored split by input rows
# so a real PyTorch checkpoint maps onto them by row-slicing + transposing.
# ----------------------------------------------------------------------------
def init_params(key, emb, h, mlp_dim, bottleneck):
    ks = iter(jax.random.split(key, 32))

    def w(shape, scale=0.1):
        return scale * jax.random.normal(next(ks), shape, jnp.float32)

    pre = _PRE_POOL_HIDDEN
    p = {}
    p["spatial_w"] = w((2, emb)); p["spatial_b"] = w((1, emb))
    p["lstm_wih"] = w((emb, 4 * h)); p["lstm_whh"] = w((h, 4 * h))
    p["lstm_b"] = w((1, 4 * h))                       # b_ih + b_hh combined
    p["h2p_w"] = w((h, 2)); p["h2p_b"] = w((1, 2))
    p["pn_spatial_w"] = w((2, emb)); p["pn_spatial_b"] = w((1, emb))
    p["pn_w1_e"] = w((emb, pre)); p["pn_w1_h"] = w((h, pre)); p["pn_b1"] = w((1, pre))
    p["pn_bn1_g"] = jnp.ones((1, pre), jnp.float32)
    p["pn_bn1_b"] = jnp.zeros((1, pre), jnp.float32)
    p["pn_w2"] = w((pre, bottleneck)); p["pn_b2"] = w((1, bottleneck))
    p["pn_bn2_g"] = jnp.ones((1, bottleneck), jnp.float32)
    p["pn_bn2_b"] = jnp.zeros((1, bottleneck), jnp.float32)
    p["mlp_w1_h"] = w((h, mlp_dim)); p["mlp_w1_p"] = w((bottleneck, mlp_dim))
    p["mlp_b1"] = w((1, mlp_dim))
    p["mlp_bn1_g"] = jnp.ones((1, mlp_dim), jnp.float32)
    p["mlp_bn1_b"] = jnp.zeros((1, mlp_dim), jnp.float32)
    p["mlp_w2"] = w((mlp_dim, h)); p["mlp_b2"] = w((1, h))
    p["mlp_bn2_g"] = jnp.ones((1, h), jnp.float32)
    p["mlp_bn2_b"] = jnp.zeros((1, h), jnp.float32)
    return p


# ----------------------------------------------------------------------------
# Plain-JAX transcription of the PyTorch reference (for a numerical cross-check)
# ----------------------------------------------------------------------------
def _reference_forward(p, last_pos, last_pos_rel, state_h, state_c,
                       seq_start_end, seq_len):
    hp = jax.lax.Precision.HIGHEST

    def lin(x, w, b):
        return jnp.dot(x, w, precision=hp) + b

    def bn_relu(x, g, b):
        m = jnp.mean(x, axis=0, keepdims=True)
        v = jnp.mean((x - m) ** 2, axis=0, keepdims=True)
        return jnp.maximum((x - m) / jnp.sqrt(v + 1e-5) * g + b, 0.0)

    h, c = state_h[0], state_c[0]
    H = h.shape[1]
    dec_in = lin(last_pos_rel, p["spatial_w"], p["spatial_b"])
    pn_w1 = jnp.concatenate([p["pn_w1_e"], p["pn_w1_h"]], axis=0)
    mlp_w1 = jnp.concatenate([p["mlp_w1_h"], p["mlp_w1_p"]], axis=0)
    preds = []
    for _ in range(seq_len):
        gates = (jnp.dot(dec_in, p["lstm_wih"], precision=hp)
                 + jnp.dot(h, p["lstm_whh"], precision=hp) + p["lstm_b"])
        gi = jax.nn.sigmoid(gates[:, :H]); gf = jax.nn.sigmoid(gates[:, H:2 * H])
        gg = jnp.tanh(gates[:, 2 * H:3 * H]); go = jax.nn.sigmoid(gates[:, 3 * H:])
        c = gf * c + gi * gg
        h = go * jnp.tanh(c)
        rel_pos = lin(h, p["h2p_w"], p["h2p_b"])
        curr_pos = rel_pos + last_pos
        pool_list = []
        for (s, e) in seq_start_end:
            n = e - s
            pos_g = curr_pos[s:e]; hid_g = h[s:e]
            idx_j = jnp.tile(jnp.arange(n), n)
            idx_i = jnp.repeat(jnp.arange(n), n)
            rel = pos_g[idx_j] - pos_g[idx_i]
            emb = lin(rel, p["pn_spatial_w"], p["pn_spatial_b"])
            x = jnp.concatenate([emb, hid_g[idx_j]], axis=1)
            x = bn_relu(lin(x, pn_w1, p["pn_b1"]), p["pn_bn1_g"], p["pn_bn1_b"])
            x = bn_relu(lin(x, p["pn_w2"], p["pn_b2"]), p["pn_bn2_g"], p["pn_bn2_b"])
            pool_list.append(jnp.max(x.reshape(n, n, -1), axis=1))
        pool_h = jnp.concatenate(pool_list, axis=0)
        dh = jnp.concatenate([h, pool_h], axis=1)
        dh = bn_relu(lin(dh, mlp_w1, p["mlp_b1"]), p["mlp_bn1_g"], p["mlp_bn1_b"])
        dh = bn_relu(lin(dh, p["mlp_w2"], p["mlp_b2"]), p["mlp_bn2_g"], p["mlp_bn2_b"])
        h = dh
        dec_in = lin(rel_pos, p["spatial_w"], p["spatial_b"])
        preds.append(rel_pos)
        last_pos = curr_pos
    return jnp.stack(preds, axis=0), h[None]


# ----------------------------------------------------------------------------
if __name__ == "__main__":
    EMB, H, MLP, BOT = 32, 32, 64, 64
    SEQ_LEN = 4
    BATCH = 6
    seq_start_end = ((0, 3), (3, 6))   # two sequences of 3 pedestrians each

    key = jax.random.PRNGKey(0)
    kp, k1, k2, k3, k4 = jax.random.split(key, 5)
    params = init_params(kp, EMB, H, MLP, BOT)

    last_pos = jax.random.normal(k1, (BATCH, 2), jnp.float32)
    last_pos_rel = jax.random.normal(k2, (BATCH, 2), jnp.float32)
    state_h = jax.random.normal(k3, (1, BATCH, H), jnp.float32)
    state_c = jax.random.normal(k4, (1, BATCH, H), jnp.float32)

    pred_traj_fake_rel, final_h = decoder_forward(
        params, last_pos, last_pos_rel, state_h, state_c,
        seq_start_end, SEQ_LEN)
    jax.block_until_ready((pred_traj_fake_rel, final_h))

    assert pred_traj_fake_rel.shape == (SEQ_LEN, BATCH, 2)
    assert final_h.shape == (1, BATCH, H)
    assert bool(jnp.all(jnp.isfinite(pred_traj_fake_rel)))

    ref_pred, ref_h = _reference_forward(
        params, last_pos, last_pos_rel, state_h, state_c,
        seq_start_end, SEQ_LEN)
    assert bool(jnp.max(jnp.abs(pred_traj_fake_rel - ref_pred)) < 5e-2)
    assert bool(jnp.max(jnp.abs(final_h - ref_h)) < 5e-2)

    print("KERNEL_OK")
</pallas_src>

<mosaic_0001>
module attributes {stable_mosaic.version = 11 : i64} {
  func.func @kernel(%arg0: i32, %arg1: memref<6x2xf32, #tpu.memory_space<vmem>>, %arg2: memref<6x2xf32, #tpu.memory_space<vmem>>, %arg3: memref<6x32xf32, #tpu.memory_space<vmem>>, %arg4: memref<6x32xf32, #tpu.memory_space<vmem>>, %arg5: memref<2x32xf32, #tpu.memory_space<vmem>>, %arg6: memref<1x32xf32, #tpu.memory_space<vmem>>, %arg7: memref<32x128xf32, #tpu.memory_space<vmem>>, %arg8: memref<32x128xf32, #tpu.memory_space<vmem>>, %arg9: memref<1x128xf32, #tpu.memory_space<vmem>>, %arg10: memref<32x2xf32, #tpu.memory_space<vmem>>, %arg11: memref<1x2xf32, #tpu.memory_space<vmem>>, %arg12: memref<2x32xf32, #tpu.memory_space<vmem>>, %arg13: memref<1x32xf32, #tpu.memory_space<vmem>>, %arg14: memref<32x512xf32, #tpu.memory_space<vmem>>, %arg15: memref<32x512xf32, #tpu.memory_space<vmem>>, %arg16: memref<1x512xf32, #tpu.memory_space<vmem>>, %arg17: memref<1x512xf32, #tpu.memory_space<vmem>>, %arg18: memref<1x512xf32, #tpu.memory_space<vmem>>, %arg19: memref<512x64xf32, #tpu.memory_space<vmem>>, %arg20: memref<1x64xf32, #tpu.memory_space<vmem>>, %arg21: memref<1x64xf32, #tpu.memory_space<vmem>>, %arg22: memref<1x64xf32, #tpu.memory_space<vmem>>, %arg23: memref<32x64xf32, #tpu.memory_space<vmem>>, %arg24: memref<64x64xf32, #tpu.memory_space<vmem>>, %arg25: memref<1x64xf32, #tpu.memory_space<vmem>>, %arg26: memref<1x64xf32, #tpu.memory_space<vmem>>, %arg27: memref<1x64xf32, #tpu.memory_space<vmem>>, %arg28: memref<64x32xf32, #tpu.memory_space<vmem>>, %arg29: memref<1x32xf32, #tpu.memory_space<vmem>>, %arg30: memref<1x32xf32, #tpu.memory_space<vmem>>, %arg31: memref<1x32xf32, #tpu.memory_space<vmem>>, %arg32: memref<1x6x2xf32, #tpu.memory_space<vmem>>, %arg33: memref<6x32xf32, #tpu.memory_space<vmem>>, %arg34: memref<6x32xf32, #tpu.memory_space<vmem>>, %arg35: memref<6x32xf32, #tpu.memory_space<vmem>>, %arg36: memref<6x32xf32, #tpu.memory_space<vmem>>, %arg37: memref<6x2xf32, #tpu.memory_space<vmem>>) attributes {dimension_semantics = [#tpu.dimension_semantics<arbitrary>], iteration_bounds = array<i64: 4>, scalar_prefetch = 0 : i64, scratch_operands = 4 : i64, tpu.core_type = #tpu.core_type<tc>, window_params = [{pipeline_mode = #tpu.pipeline_mode<synchronous>, transform_indices = @transform_0, window_bounds = array<i64: 6, 2>}, {pipeline_mode = #tpu.pipeline_mode<synchronous>, transform_indices = @transform_1, window_bounds = array<i64: 6, 2>}, {pipeline_mode = #tpu.pipeline_mode<synchronous>, transform_indices = @transform_2, window_bounds = array<i64: 6, 32>}, {pipeline_mode = #tpu.pipeline_mode<synchronous>, transform_indices = @transform_3, window_bounds = array<i64: 6, 32>}, {pipeline_mode = #tpu.pipeline_mode<synchronous>, transform_indices = @transform_4, window_bounds = array<i64: 2, 32>}, {pipeline_mode = #tpu.pipeline_mode<synchronous>, transform_indices = @transform_5, window_bounds = array<i64: 1, 32>}, {pipeline_mode = #tpu.pipeline_mode<synchronous>, transform_indices = @transform_6, window_bounds = array<i64: 32, 128>}, {pipeline_mode = #tpu.pipeline_mode<synchronous>, transform_indices = @transform_7, window_bounds = array<i64: 32, 128>}, {pipeline_mode = #tpu.pipeline_mode<synchronous>, transform_indices = @transform_8, window_bounds = array<i64: 1, 128>}, {pipeline_mode = #tpu.pipeline_mode<synchronous>, transform_indices = @transform_9, window_bounds = array<i64: 32, 2>}, {pipeline_mode = #tpu.pipeline_mode<synchronous>, transform_indices = @transform_10, window_bounds = array<i64: 1, 2>}, {pipeline_mode = #tpu.pipeline_mode<synchronous>, transform_indices = @transform_11, window_bounds = array<i64: 2, 32>}, {pipeline_mode = #tpu.pipeline_mode<synchronous>, transform_indices = @transform_12, window_bounds = array<i64: 1, 32>}, {pipeline_mode = #tpu.pipeline_mode<synchronous>, transform_indices = @transform_13, window_bounds = array<i64: 32, 512>}, {pipeline_mode = #tpu.pipeline_mode<synchronous>, transform_indices = @transform_14, window_bounds = array<i64: 32, 512>}, {pipeline_mode = #tpu.pipeline_mode<synchronous>, transform_indices = @transform_15, window_bounds = array<i64: 1, 512>}, {pipeline_mode = #tpu.pipeline_mode<synchronous>, transform_indices = @transform_16, window_bounds = array<i64: 1, 512>}, {pipeline_mode = #tpu.pipeline_mode<synchronous>, transform_indices = @transform_17, window_bounds = array<i64: 1, 512>}, {pipeline_mode = #tpu.pipeline_mode<synchronous>, transform_indices = @transform_18, window_bounds = array<i64: 512, 64>}, {pipeline_mode = #tpu.pipeline_mode<synchronous>, transform_indices = @transform_19, window_bounds = array<i64: 1, 64>}, {pipeline_mode = #tpu.pipeline_mode<synchronous>, transform_indices = @transform_20, window_bounds = array<i64: 1, 64>}, {pipeline_mode = #tpu.pipeline_mode<synchronous>, transform_indices = @transform_21, window_bounds = array<i64: 1, 64>}, {pipeline_mode = #tpu.pipeline_mode<synchronous>, transform_indices = @transform_22, window_bounds = array<i64: 32, 64>}, {pipeline_mode = #tpu.pipeline_mode<synchronous>, transform_indices = @transform_23, window_bounds = array<i64: 64, 64>}, {pipeline_mode = #tpu.pipeline_mode<synchronous>, transform_indices = @transform_24, window_bounds = array<i64: 1, 64>}, {pipeline_mode = #tpu.pipeline_mode<synchronous>, transform_indices = @transform_25, window_bounds = array<i64: 1, 64>}, {pipeline_mode = #tpu.pipeline_mode<synchronous>, transform_indices = @transform_26, window_bounds = array<i64: 1, 64>}, {pipeline_mode = #tpu.pipeline_mode<synchronous>, transform_indices = @transform_27, window_bounds = array<i64: 64, 32>}, {pipeline_mode = #tpu.pipeline_mode<synchronous>, transform_indices = @transform_28, window_bounds = array<i64: 1, 32>}, {pipeline_mode = #tpu.pipeline_mode<synchronous>, transform_indices = @transform_29, window_bounds = array<i64: 1, 32>}, {pipeline_mode = #tpu.pipeline_mode<synchronous>, transform_indices = @transform_30, window_bounds = array<i64: 1, 32>}, {transform_indices = @transform_31, window_bounds = array<i64: 1, 6, 2>}, {pipeline_mode = #tpu.pipeline_mode<synchronous>, transform_indices = @transform_32, window_bounds = array<i64: 6, 32>}]} {
    %c0_i32 = arith.constant 0 : i32
    %0 = arith.cmpi eq, %arg0, %c0_i32 : i32
    %1 = arith.extui %0 : i1 to i32
    %c0_i32_0 = arith.constant 0 : i32
    %2 = arith.cmpi ne, %1, %c0_i32_0 : i32
    scf.if %2 {
      %c0_250 = arith.constant 0 : index
      %c0_251 = arith.constant 0 : index
      %562 = vector.load %arg3[%c0_250, %c0_251] : memref<6x32xf32, #tpu.memory_space<vmem>>, vector<6x32xf32>
      %c0_252 = arith.constant 0 : index
      %c0_253 = arith.constant 0 : index
      %563 = vector.load %arg34[%c0_252, %c0_253] : memref<6x32xf32, #tpu.memory_space<vmem>>, vector<6x32xf32>
      tpu.vector_store %arg34[%c0_252, %c0_253], %562 {strides = array<i32>} : memref<6x32xf32, #tpu.memory_space<vmem>>, vector<6x32xf32>,
      %c0_254 = arith.constant 0 : index
      %c0_255 = arith.constant 0 : index
      %564 = vector.load %arg4[%c0_254, %c0_255] : memref<6x32xf32, #tpu.memory_space<vmem>>, vector<6x32xf32>
      %c0_256 = arith.constant 0 : index
      %c0_257 = arith.constant 0 : index
      %565 = vector.load %arg35[%c0_256, %c0_257] : memref<6x32xf32, #tpu.memory_space<vmem>>, vector<6x32xf32>
      tpu.vector_store %arg35[%c0_256, %c0_257], %564 {strides = array<i32>} : memref<6x32xf32, #tpu.memory_space<vmem>>, vector<6x32xf32>,
      %c0_258 = arith.constant 0 : index
      %c0_259 = arith.constant 0 : index
      %566 = vector.load %arg1[%c0_258, %c0_259] : memref<6x2xf32, #tpu.memory_space<vmem>>, vector<6x2xf32>
      %c0_260 = arith.constant 0 : index
      %c0_261 = arith.constant 0 : index
      %567 = vector.load %arg37[%c0_260, %c0_261] : memref<6x2xf32, #tpu.memory_space<vmem>>, vector<6x2xf32>
      tpu.vector_store %arg37[%c0_260, %c0_261], %566 {strides = array<i32>} : memref<6x2xf32, #tpu.memory_space<vmem>>, vector<6x2xf32>,
      %c0_262 = arith.constant 0 : index
      %c0_263 = arith.constant 0 : index
      %568 = vector.load %arg2[%c0_262, %c0_263] : memref<6x2xf32, #tpu.memory_space<vmem>>, vector<6x2xf32>
      %c0_264 = arith.constant 0 : index
      %c0_265 = arith.constant 0 : index
      %569 = vector.load %arg5[%c0_264, %c0_265] : memref<2x32xf32, #tpu.memory_space<vmem>>, vector<2x32xf32>
      %cst_266 = arith.constant dense<0.000000e+00> : vector<6x32xf32>
      %570 = tpu.matmul %568, %569, %cst_266 {dimension_numbers = #tpu.dot_dimension_numbers<[1], [0], [0], [1], [0, 0, 1, 1], [], []>} : vector<6x2xf32>, vector<2x32xf32>, vector<6x32xf32> -> vector<6x32xf32>
      %c0_267 = arith.constant 0 : index
      %c0_268 = arith.constant 0 : index
      %571 = vector.load %arg6[%c0_267, %c0_268] : memref<1x32xf32, #tpu.memory_space<vmem>>, vector<1x32xf32>
      %572 = vector.broadcast %571 : vector<1x32xf32> to vector<6x32xf32>
      %573 = arith.addf %570, %572 : vector<6x32xf32>
      %c0_269 = arith.constant 0 : index
      %c0_270 = arith.constant 0 : index
      %574 = vector.load %arg36[%c0_269, %c0_270] : memref<6x32xf32, #tpu.memory_space<vmem>>, vector<6x32xf32>
      tpu.vector_store %arg36[%c0_269, %c0_270], %573 {strides = array<i32>} : memref<6x32xf32, #tpu.memory_space<vmem>>, vector<6x32xf32>,
    } else {
    }
    %c0 = arith.constant 0 : index
    %c0_1 = arith.constant 0 : index
    %3 = vector.load %arg36[%c0, %c0_1] : memref<6x32xf32, #tpu.memory_space<vmem>>, vector<6x32xf32>
    %c0_2 = arith.constant 0 : index
    %c0_3 = arith.constant 0 : index
    %4 = vector.load %arg34[%c0_2, %c0_3] : memref<6x32xf32, #tpu.memory_space<vmem>>, vector<6x32xf32>
    %c0_4 = arith.constant 0 : index
    %c0_5 = arith.constant 0 : index
    %5 = vector.load %arg35[%c0_4, %c0_5] : memref<6x32xf32, #tpu.memory_space<vmem>>, vector<6x32xf32>
    %c0_6 = arith.constant 0 : index
    %c0_7 = arith.constant 0 : index
    %6 = vector.load %arg7[%c0_6, %c0_7] : memref<32x128xf32, #tpu.memory_space<vmem>>, vector<32x128xf32>
    %cst = arith.constant dense<0.000000e+00> : vector<6x128xf32>
    %7 = tpu.matmul %3, %6, %cst {dimension_numbers = #tpu.dot_dimension_numbers<[1], [0], [0], [1], [0, 0, 1, 1], [], []>} : vector<6x32xf32>, vector<32x128xf32>, vector<6x128xf32> -> vector<6x128xf32>
    %c0_8 = arith.constant 0 : index
    %c0_9 = arith.constant 0 : index
    %8 = vector.load %arg8[%c0_8, %c0_9] : memref<32x128xf32, #tpu.memory_space<vmem>>, vector<32x128xf32>
    %cst_10 = arith.constant dense<0.000000e+00> : vector<6x128xf32>
    %9 = tpu.matmul %4, %8, %cst_10 {dimension_numbers = #tpu.dot_dimension_numbers<[1], [0], [0], [1], [0, 0, 1, 1], [], []>} : vector<6x32xf32>, vector<32x128xf32>, vector<6x128xf32> -> vector<6x128xf32>
    %10 = arith.addf %7, %9 : vector<6x128xf32>
    %c0_11 = arith.constant 0 : index
    %c0_12 = arith.constant 0 : index
    %11 = vector.load %arg9[%c0_11, %c0_12] : memref<1x128xf32, #tpu.memory_space<vmem>>, vector<1x128xf32>
    %12 = vector.broadcast %11 : vector<1x128xf32> to vector<6x128xf32>
    %13 = arith.addf %10, %12 : vector<6x128xf32>
    %14 = vector.extract_strided_slice %13 {offsets = [0, 0], sizes = [6, 32], strides = [1, 1]} : vector<6x128xf32> to vector<6x32xf32>
    %15 = arith.negf %14 : vector<6x32xf32>
    %16 = math.exp %15 : vector<6x32xf32>
    %cst_13 = arith.constant 1.000000e+00 : f32
    %17 = vector.broadcast %cst_13 : f32 to vector<6x32xf32>
    %18 = arith.addf %17, %16 : vector<6x32xf32>
    %19 = arith.divf %17, %18 : vector<6x32xf32>
    %20 = vector.extract_strided_slice %13 {offsets = [0, 32], sizes = [6, 32], strides = [1, 1]} : vector<6x128xf32> to vector<6x32xf32>
    %21 = arith.negf %20 : vector<6x32xf32>
    %22 = math.exp %21 : vector<6x32xf32>
    %cst_14 = arith.constant 1.000000e+00 : f32
    %23 = vector.broadcast %cst_14 : f32 to vector<6x32xf32>
    %24 = arith.addf %23, %22 : vector<6x32xf32>
    %25 = arith.divf %23, %24 : vector<6x32xf32>
    %26 = vector.extract_strided_slice %13 {offsets = [0, 64], sizes = [6, 32], strides = [1, 1]} : vector<6x128xf32> to vector<6x32xf32>
    %27 = math.tanh %26 : vector<6x32xf32>
    %28 = vector.extract_strided_slice %13 {offsets = [0, 96], sizes = [6, 32], strides = [1, 1]} : vector<6x128xf32> to vector<6x32xf32>
    %29 = arith.negf %28 : vector<6x32xf32>
    %30 = math.exp %29 : vector<6x32xf32>
    %cst_15 = arith.constant 1.000000e+00 : f32
    %31 = vector.broadcast %cst_15 : f32 to vector<6x32xf32>
    %32 = arith.addf %31, %30 : vector<6x32xf32>
    %33 = arith.divf %31, %32 : vector<6x32xf32>
    %34 = arith.mulf %25, %5 : vector<6x32xf32>
    %35 = arith.mulf %19, %27 : vector<6x32xf32>
    %36 = arith.addf %34, %35 : vector<6x32xf32>
    %37 = math.tanh %36 : vector<6x32xf32>
    %38 = arith.mulf %33, %37 : vector<6x32xf32>
    %c0_16 = arith.constant 0 : index
    %c0_17 = arith.constant 0 : index
    %39 = vector.load %arg35[%c0_16, %c0_17] : memref<6x32xf32, #tpu.memory_space<vmem>>, vector<6x32xf32>
    tpu.vector_store %arg35[%c0_16, %c0_17], %36 {strides = array<i32>} : memref<6x32xf32, #tpu.memory_space<vmem>>, vector<6x32xf32>,
    %c0_18 = arith.constant 0 : index
    %c0_19 = arith.constant 0 : index
    %40 = vector.load %arg10[%c0_18, %c0_19] : memref<32x2xf32, #tpu.memory_space<vmem>>, vector<32x2xf32>
    %cst_20 = arith.constant dense<0.000000e+00> : vector<6x2xf32>
    %41 = tpu.matmul %38, %40, %cst_20 {dimension_numbers = #tpu.dot_dimension_numbers<[1], [0], [0], [1], [0, 0, 1, 1], [], []>} : vector<6x32xf32>, vector<32x2xf32>, vector<6x2xf32> -> vector<6x2xf32>
    %c0_21 = arith.constant 0 : index
    %c0_22 = arith.constant 0 : index
    %42 = vector.load %arg11[%c0_21, %c0_22] : memref<1x2xf32, #tpu.memory_space<vmem>>, vector<1x2xf32>
    %43 = vector.broadcast %42 : vector<1x2xf32> to vector<6x2xf32>
    %44 = arith.addf %41, %43 : vector<6x2xf32>
    %c0_23 = arith.constant 0 : index
    %c0_24 = arith.constant 0 : index
    %45 = vector.load %arg37[%c0_23, %c0_24] : memref<6x2xf32, #tpu.memory_space<vmem>>, vector<6x2xf32>
    %46 = arith.addf %44, %45 : vector<6x2xf32>
    %c0_25 = arith.constant 0 : index
    %c0_26 = arith.constant 0 : index
    %47 = vector.load %arg37[%c0_25, %c0_26] : memref<6x2xf32, #tpu.memory_space<vmem>>, vector<6x2xf32>
    tpu.vector_store %arg37[%c0_25, %c0_26], %46 {strides = array<i32>} : memref<6x2xf32, #tpu.memory_space<vmem>>, vector<6x2xf32>,
    %c0_27 = arith.constant 0 : index
    %c0_28 = arith.constant 0 : index
    %c0_29 = arith.constant 0 : index
    %48 = vector.load %arg32[%c0_27, %c0_28, %c0_29] : memref<1x6x2xf32, #tpu.memory_space<vmem>>, vector<1x6x2xf32>
    %49 = vector.shape_cast %48 : vector<1x6x2xf32> to vector<6x2xf32>
    %50 = vector.shape_cast %44 : vector<6x2xf32> to vector<1x6x2xf32>
    tpu.vector_store %arg32[%c0_27, %c0_28, %c0_29], %50 {strides = array<i32>} : memref<1x6x2xf32, #tpu.memory_space<vmem>>, vector<1x6x2xf32>,
    %51 = vector.extract_strided_slice %46 {offsets = [0, 0], sizes = [3, 2], strides = [1, 1]} : vector<6x2xf32> to vector<3x2xf32>
    %52 = vector.extract_strided_slice %38 {offsets = [0, 0], sizes = [3, 32], strides = [1, 1]} : vector<6x32xf32> to vector<3x32xf32>
    %c0_30 = arith.constant 0 : index
    %c0_31 = arith.constant 0 : index
    %53 = vector.load %arg15[%c0_30, %c0_31] : memref<32x512xf32, #tpu.memory_space<vmem>>, vector<32x512xf32>
    %cst_32 = arith.constant dense<0.000000e+00> : vector<3x512xf32>
    %54 = tpu.matmul %52, %53, %cst_32 {dimension_numbers = #tpu.dot_dimension_numbers<[1], [0], [0], [1], [0, 0, 1, 1], [], []>} : vector<3x32xf32>, vector<32x512xf32>, vector<3x512xf32> -> vector<3x512xf32>
    %55 = vector.extract_strided_slice %51 {offsets = [0, 0], sizes = [1, 2], strides = [1, 1]} : vector<3x2xf32> to vector<1x2xf32>
    %56 = vector.broadcast %55 : vector<1x2xf32> to vector<3x2xf32>
    %57 = arith.subf %51, %56 : vector<3x2xf32>
    %c0_33 = arith.constant 0 : index
    %c0_34 = arith.constant 0 : index
    %58 = vector.load %arg12[%c0_33, %c0_34] : memref<2x32xf32, #tpu.memory_space<vmem>>, vector<2x32xf32>
    %cst_35 = arith.constant dense<0.000000e+00> : vector<3x32xf32>
    %59 = tpu.matmul %57, %58, %cst_35 {dimension_numbers = #tpu.dot_dimension_numbers<[1], [0], [0], [1], [0, 0, 1, 1], [], []>} : vector<3x2xf32>, vector<2x32xf32>, vector<3x32xf32> -> vector<3x32xf32>
    %c0_36 = arith.constant 0 : index
    %c0_37 = arith.constant 0 : index
    %60 = vector.load %arg13[%c0_36, %c0_37] : memref<1x32xf32, #tpu.memory_space<vmem>>, vector<1x32xf32>
    %61 = vector.broadcast %60 : vector<1x32xf32> to vector<3x32xf32>
    %62 = arith.addf %59, %61 : vector<3x32xf32>
    %c0_38 = arith.constant 0 : index
    %c0_39 = arith.constant 0 : index
    %63 = vector.load %arg14[%c0_38, %c0_39] : memref<32x512xf32, #tpu.memory_space<vmem>>, vector<32x512xf32>
    %cst_40 = arith.constant dense<0.000000e+00> : vector<3x512xf32>
    %64 = tpu.matmul %62, %63, %cst_40 {dimension_numbers = #tpu.dot_dimension_numbers<[1], [0], [0], [1], [0, 0, 1, 1], [], []>} : vector<3x32xf32>, vector<32x512xf32>, vector<3x512xf32> -> vector<3x512xf32>
    %65 = arith.addf %64, %54 : vector<3x512xf32>
    %c0_41 = arith.constant 0 : index
    %c0_42 = arith.constant 0 : index
    %66 = vector.load %arg16[%c0_41, %c0_42] : memref<1x512xf32, #tpu.memory_space<vmem>>, vector<1x512xf32>
    %67 = vector.broadcast %66 : vector<1x512xf32> to vector<3x512xf32>
    %68 = arith.addf %65, %67 : vector<3x512xf32>
    %69 = vector.extract_strided_slice %51 {offsets = [1, 0], sizes = [1, 2], strides = [1, 1]} : vector<3x2xf32> to vector<1x2xf32>
    %70 = vector.broadcast %69 : vector<1x2xf32> to vector<3x2xf32>
    %71 = arith.subf %51, %70 : vector<3x2xf32>
    %c0_43 = arith.constant 0 : index
    %c0_44 = arith.constant 0 : index
    %72 = vector.load %arg12[%c0_43, %c0_44] : memref<2x32xf32, #tpu.memory_space<vmem>>, vector<2x32xf32>
    %cst_45 = arith.constant dense<0.000000e+00> : vector<3x32xf32>
    %73 = tpu.matmul %71, %72, %cst_45 {dimension_numbers = #tpu.dot_dimension_numbers<[1], [0], [0], [1], [0, 0, 1, 1], [], []>} : vector<3x2xf32>, vector<2x32xf32>, vector<3x32xf32> -> vector<3x32xf32>
    %c0_46 = arith.constant 0 : index
    %c0_47 = arith.constant 0 : index
    %74 = vector.load %arg13[%c0_46, %c0_47] : memref<1x32xf32, #tpu.memory_space<vmem>>, vector<1x32xf32>
    %75 = vector.broadcast %74 : vector<1x32xf32> to vector<3x32xf32>
    %76 = arith.addf %73, %75 : vector<3x32xf32>
    %c0_48 = arith.constant 0 : index
    %c0_49 = arith.constant 0 : index
    %77 = vector.load %arg14[%c0_48, %c0_49] : memref<32x512xf32, #tpu.memory_space<vmem>>, vector<32x512xf32>
    %cst_50 = arith.constant dense<0.000000e+00> : vector<3x512xf32>
    %78 = tpu.matmul %76, %77, %cst_50 {dimension_numbers = #tpu.dot_dimension_numbers<[1], [0], [0], [1], [0, 0, 1, 1], [], []>} : vector<3x32xf32>, vector<32x512xf32>, vector<3x512xf32> -> vector<3x512xf32>
    %79 = arith.addf %78, %54 : vector<3x512xf32>
    %c0_51 = arith.constant 0 : index
    %c0_52 = arith.constant 0 : index
    %80 = vector.load %arg16[%c0_51, %c0_52] : memref<1x512xf32, #tpu.memory_space<vmem>>, vector<1x512xf32>
    %81 = vector.broadcast %80 : vector<1x512xf32> to vector<3x512xf32>
    %82 = arith.addf %79, %81 : vector<3x512xf32>
    %83 = vector.extract_strided_slice %51 {offsets = [2, 0], sizes = [1, 2], strides = [1, 1]} : vector<3x2xf32> to vector<1x2xf32>
    %84 = vector.broadcast %83 : vector<1x2xf32> to vector<3x2xf32>
    %85 = arith.subf %51, %84 : vector<3x2xf32>
    %c0_53 = arith.constant 0 : index
    %c0_54 = arith.constant 0 : index
    %86 = vector.load %arg12[%c0_53, %c0_54] : memref<2x32xf32, #tpu.memory_space<vmem>>, vector<2x32xf32>
    %cst_55 = arith.constant dense<0.000000e+00> : vector<3x32xf32>
    %87 = tpu.matmul %85, %86, %cst_55 {dimension_numbers = #tpu.dot_dimension_numbers<[1], [0], [0], [1], [0, 0, 1, 1], [], []>} : vector<3x2xf32>, vector<2x32xf32>, vector<3x32xf32> -> vector<3x32xf32>
    %c0_56 = arith.constant 0 : index
    %c0_57 = arith.constant 0 : index
    %88 = vector.load %arg13[%c0_56, %c0_57] : memref<1x32xf32, #tpu.memory_space<vmem>>, vector<1x32xf32>
    %89 = vector.broadcast %88 : vector<1x32xf32> to vector<3x32xf32>
    %90 = arith.addf %87, %89 : vector<3x32xf32>
    %c0_58 = arith.constant 0 : index
    %c0_59 = arith.constant 0 : index
    %91 = vector.load %arg14[%c0_58, %c0_59] : memref<32x512xf32, #tpu.memory_space<vmem>>, vector<32x512xf32>
    %cst_60 = arith.constant dense<0.000000e+00> : vector<3x512xf32>
    %92 = tpu.matmul %90, %91, %cst_60 {dimension_numbers = #tpu.dot_dimension_numbers<[1], [0], [0], [1], [0, 0, 1, 1], [], []>} : vector<3x32xf32>, vector<32x512xf32>, vector<3x512xf32> -> vector<3x512xf32>
    %93 = arith.addf %92, %54 : vector<3x512xf32>
    %c0_61 = arith.constant 0 : index
    %c0_62 = arith.constant 0 : index
    %94 = vector.load %arg16[%c0_61, %c0_62] : memref<1x512xf32, #tpu.memory_space<vmem>>, vector<1x512xf32>
    %95 = vector.broadcast %94 : vector<1x512xf32> to vector<3x512xf32>
    %96 = arith.addf %93, %95 : vector<3x512xf32>
    %c0_63 = arith.constant 0 : index
    %c0_64 = arith.constant 0 : index
    %97 = vector.load %arg17[%c0_63, %c0_64] : memref<1x512xf32, #tpu.memory_space<vmem>>, vector<1x512xf32>
    %c0_65 = arith.constant 0 : index
    %c0_66 = arith.constant 0 : index
    %98 = vector.load %arg18[%c0_65, %c0_66] : memref<1x512xf32, #tpu.memory_space<vmem>>, vector<1x512xf32>
    %cst_67 = arith.constant dense<0.000000e+00> : vector<512xf32>
    %99 = vector.multi_reduction <add>, %68, %cst_67 [0] : vector<3x512xf32> to vector<512xf32>
    %100 = vector.shape_cast %99 : vector<512xf32> to vector<1x512xf32>
    %cst_68 = arith.constant 0.000000e+00 : f32
    %101 = vector.broadcast %cst_68 : f32 to vector<1x512xf32>
    %102 = arith.addf %101, %100 : vector<1x512xf32>
    %cst_69 = arith.constant dense<0.000000e+00> : vector<512xf32>
    %103 = vector.multi_reduction <add>, %82, %cst_69 [0] : vector<3x512xf32> to vector<512xf32>
    %104 = vector.shape_cast %103 : vector<512xf32> to vector<1x512xf32>
    %105 = arith.addf %102, %104 : vector<1x512xf32>
    %cst_70 = arith.constant dense<0.000000e+00> : vector<512xf32>
    %106 = vector.multi_reduction <add>, %96, %cst_70 [0] : vector<3x512xf32> to vector<512xf32>
    %107 = vector.shape_cast %106 : vector<512xf32> to vector<1x512xf32>
    %108 = arith.addf %105, %107 : vector<1x512xf32>
    %cst_71 = arith.constant 9.000000e+00 : f32
    %109 = vector.broadcast %cst_71 : f32 to vector<1x512xf32>
    %110 = arith.divf %108, %109 : vector<1x512xf32>
    %111 = vector.broadcast %110 : vector<1x512xf32> to vector<3x512xf32>
    %112 = arith.subf %68, %111 : vector<3x512xf32>
    %113 = arith.mulf %112, %112 : vector<3x512xf32>
    %cst_72 = arith.constant dense<0.000000e+00> : vector<512xf32>
    %114 = vector.multi_reduction <add>, %113, %cst_72 [0] : vector<3x512xf32> to vector<512xf32>
    %115 = vector.shape_cast %114 : vector<512xf32> to vector<1x512xf32>
    %cst_73 = arith.constant 0.000000e+00 : f32
    %116 = vector.broadcast %cst_73 : f32 to vector<1x512xf32>
    %117 = arith.addf %116, %115 : vector<1x512xf32>
    %118 = vector.broadcast %110 : vector<1x512xf32> to vector<3x512xf32>
    %119 = arith.subf %82, %118 : vector<3x512xf32>
    %120 = arith.mulf %119, %119 : vector<3x512xf32>
    %cst_74 = arith.constant dense<0.000000e+00> : vector<512xf32>
    %121 = vector.multi_reduction <add>, %120, %cst_74 [0] : vector<3x512xf32> to vector<512xf32>
    %122 = vector.shape_cast %121 : vector<512xf32> to vector<1x512xf32>
    %123 = arith.addf %117, %122 : vector<1x512xf32>
    %124 = vector.broadcast %110 : vector<1x512xf32> to vector<3x512xf32>
    %125 = arith.subf %96, %124 : vector<3x512xf32>
    %126 = arith.mulf %125, %125 : vector<3x512xf32>
    %cst_75 = arith.constant dense<0.000000e+00> : vector<512xf32>
    %127 = vector.multi_reduction <add>, %126, %cst_75 [0] : vector<3x512xf32> to vector<512xf32>
    %128 = vector.shape_cast %127 : vector<512xf32> to vector<1x512xf32>
    %129 = arith.addf %123, %128 : vector<1x512xf32>
    %cst_76 = arith.constant 9.000000e+00 : f32
    %130 = vector.broadcast %cst_76 : f32 to vector<1x512xf32>
    %131 = arith.divf %129, %130 : vector<1x512xf32>
    %cst_77 = arith.constant 9.99999974E-6 : f32
    %132 = vector.broadcast %cst_77 : f32 to vector<1x512xf32>
    %133 = arith.addf %131, %132 : vector<1x512xf32>
    %134 = math.rsqrt %133 : vector<1x512xf32>
    %135 = vector.broadcast %110 : vector<1x512xf32> to vector<3x512xf32>
    %136 = arith.subf %68, %135 : vector<3x512xf32>
    %137 = vector.broadcast %134 : vector<1x512xf32> to vector<3x512xf32>
    %138 = arith.mulf %136, %137 : vector<3x512xf32>
    %139 = vector.broadcast %97 : vector<1x512xf32> to vector<3x512xf32>
    %140 = arith.mulf %138, %139 : vector<3x512xf32>
    %141 = vector.broadcast %98 : vector<1x512xf32> to vector<3x512xf32>
    %142 = arith.addf %140, %141 : vector<3x512xf32>
    %cst_78 = arith.constant 0.000000e+00 : f32
    %143 = vector.broadcast %cst_78 : f32 to vector<3x512xf32>
    %144 = arith.maximumf %142, %143 : vector<3x512xf32>
    %145 = vector.broadcast %110 : vector<1x512xf32> to vector<3x512xf32>
    %146 = arith.subf %82, %145 : vector<3x512xf32>
    %147 = vector.broadcast %134 : vector<1x512xf32> to vector<3x512xf32>
    %148 = arith.mulf %146, %147 : vector<3x512xf32>
    %149 = vector.broadcast %97 : vector<1x512xf32> to vector<3x512xf32>
    %150 = arith.mulf %148, %149 : vector<3x512xf32>
    %151 = vector.broadcast %98 : vector<1x512xf32> to vector<3x512xf32>
    %152 = arith.addf %150, %151 : vector<3x512xf32>
    %cst_79 = arith.constant 0.000000e+00 : f32
    %153 = vector.broadcast %cst_79 : f32 to vector<3x512xf32>
    %154 = arith.maximumf %152, %153 : vector<3x512xf32>
    %155 = vector.broadcast %110 : vector<1x512xf32> to vector<3x512xf32>
    %156 = arith.subf %96, %155 : vector<3x512xf32>
    %157 = vector.broadcast %134 : vector<1x512xf32> to vector<3x512xf32>
    %158 = arith.mulf %156, %157 : vector<3x512xf32>
    %159 = vector.broadcast %97 : vector<1x512xf32> to vector<3x512xf32>
    %160 = arith.mulf %158, %159 : vector<3x512xf32>
    %161 = vector.broadcast %98 : vector<1x512xf32> to vector<3x512xf32>
    %162 = arith.addf %160, %161 : vector<3x512xf32>
    %cst_80 = arith.constant 0.000000e+00 : f32
    %163 = vector.broadcast %cst_80 : f32 to vector<3x512xf32>
    %164 = arith.maximumf %162, %163 : vector<3x512xf32>
    %c0_81 = arith.constant 0 : index
    %c0_82 = arith.constant 0 : index
    %165 = vector.load %arg19[%c0_81, %c0_82] : memref<512x64xf32, #tpu.memory_space<vmem>>, vector<512x64xf32>
    %cst_83 = arith.constant dense<0.000000e+00> : vector<3x64xf32>
    %166 = tpu.matmul %144, %165, %cst_83 {dimension_numbers = #tpu.dot_dimension_numbers<[1], [0], [0], [1], [0, 0, 1, 1], [], []>} : vector<3x512xf32>, vector<512x64xf32>, vector<3x64xf32> -> vector<3x64xf32>
    %c0_84 = arith.constant 0 : index
    %c0_85 = arith.constant 0 : index
    %167 = vector.load %arg20[%c0_84, %c0_85] : memref<1x64xf32, #tpu.memory_space<vmem>>, vector<1x64xf32>
    %168 = vector.broadcast %167 : vector<1x64xf32> to vector<3x64xf32>
    %169 = arith.addf %166, %168 : vector<3x64xf32>
    %c0_86 = arith.constant 0 : index
    %c0_87 = arith.constant 0 : index
    %170 = vector.load %arg19[%c0_86, %c0_87] : memref<512x64xf32, #tpu.memory_space<vmem>>, vector<512x64xf32>
    %cst_88 = arith.constant dense<0.000000e+00> : vector<3x64xf32>
    %171 = tpu.matmul %154, %170, %cst_88 {dimension_numbers = #tpu.dot_dimension_numbers<[1], [0], [0], [1], [0, 0, 1, 1], [], []>} : vector<3x512xf32>, vector<512x64xf32>, vector<3x64xf32> -> vector<3x64xf32>
    %c0_89 = arith.constant 0 : index
    %c0_90 = arith.constant 0 : index
    %172 = vector.load %arg20[%c0_89, %c0_90] : memref<1x64xf32, #tpu.memory_space<vmem>>, vector<1x64xf32>
    %173 = vector.broadcast %172 : vector<1x64xf32> to vector<3x64xf32>
    %174 = arith.addf %171, %173 : vector<3x64xf32>
    %c0_91 = arith.constant 0 : index
    %c0_92 = arith.constant 0 : index
    %175 = vector.load %arg19[%c0_91, %c0_92] : memref<512x64xf32, #tpu.memory_space<vmem>>, vector<512x64xf32>
    %cst_93 = arith.constant dense<0.000000e+00> : vector<3x64xf32>
    %176 = tpu.matmul %164, %175, %cst_93 {dimension_numbers = #tpu.dot_dimension_numbers<[1], [0], [0], [1], [0, 0, 1, 1], [], []>} : vector<3x512xf32>, vector<512x64xf32>, vector<3x64xf32> -> vector<3x64xf32>
    %c0_94 = arith.constant 0 : index
    %c0_95 = arith.constant 0 : index
    %177 = vector.load %arg20[%c0_94, %c0_95] : memref<1x64xf32, #tpu.memory_space<vmem>>, vector<1x64xf32>
    %178 = vector.broadcast %177 : vector<1x64xf32> to vector<3x64xf32>
    %179 = arith.addf %176, %178 : vector<3x64xf32>
    %c0_96 = arith.constant 0 : index
    %c0_97 = arith.constant 0 : index
    %180 = vector.load %arg21[%c0_96, %c0_97] : memref<1x64xf32, #tpu.memory_space<vmem>>, vector<1x64xf32>
    %c0_98 = arith.constant 0 : index
    %c0_99 = arith.constant 0 : index
    %181 = vector.load %arg22[%c0_98, %c0_99] : memref<1x64xf32, #tpu.memory_space<vmem>>, vector<1x64xf32>
    %cst_100 = arith.constant dense<0.000000e+00> : vector<64xf32>
    %182 = vector.multi_reduction <add>, %169, %cst_100 [0] : vector<3x64xf32> to vector<64xf32>
    %183 = vector.shape_cast %182 : vector<64xf32> to vector<1x64xf32>
    %cst_101 = arith.constant 0.000000e+00 : f32
    %184 = vector.broadcast %cst_101 : f32 to vector<1x64xf32>
    %185 = arith.addf %184, %183 : vector<1x64xf32>
    %cst_102 = arith.constant dense<0.000000e+00> : vector<64xf32>
    %186 = vector.multi_reduction <add>, %174, %cst_102 [0] : vector<3x64xf32> to vector<64xf32>
    %187 = vector.shape_cast %186 : vector<64xf32> to vector<1x64xf32>
    %188 = arith.addf %185, %187 : vector<1x64xf32>
    %cst_103 = arith.constant dense<0.000000e+00> : vector<64xf32>
    %189 = vector.multi_reduction <add>, %179, %cst_103 [0] : vector<3x64xf32> to vector<64xf32>
    %190 = vector.shape_cast %189 : vector<64xf32> to vector<1x64xf32>
    %191 = arith.addf %188, %190 : vector<1x64xf32>
    %cst_104 = arith.constant 9.000000e+00 : f32
    %192 = vector.broadcast %cst_104 : f32 to vector<1x64xf32>
    %193 = arith.divf %191, %192 : vector<1x64xf32>
    %194 = vector.broadcast %193 : vector<1x64xf32> to vector<3x64xf32>
    %195 = arith.subf %169, %194 : vector<3x64xf32>
    %196 = arith.mulf %195, %195 : vector<3x64xf32>
    %cst_105 = arith.constant dense<0.000000e+00> : vector<64xf32>
    %197 = vector.multi_reduction <add>, %196, %cst_105 [0] : vector<3x64xf32> to vector<64xf32>
    %198 = vector.shape_cast %197 : vector<64xf32> to vector<1x64xf32>
    %cst_106 = arith.constant 0.000000e+00 : f32
    %199 = vector.broadcast %cst_106 : f32 to vector<1x64xf32>
    %200 = arith.addf %199, %198 : vector<1x64xf32>
    %201 = vector.broadcast %193 : vector<1x64xf32> to vector<3x64xf32>
    %202 = arith.subf %174, %201 : vector<3x64xf32>
    %203 = arith.mulf %202, %202 : vector<3x64xf32>
    %cst_107 = arith.constant dense<0.000000e+00> : vector<64xf32>
    %204 = vector.multi_reduction <add>, %203, %cst_107 [0] : vector<3x64xf32> to vector<64xf32>
    %205 = vector.shape_cast %204 : vector<64xf32> to vector<1x64xf32>
    %206 = arith.addf %200, %205 : vector<1x64xf32>
    %207 = vector.broadcast %193 : vector<1x64xf32> to vector<3x64xf32>
    %208 = arith.subf %179, %207 : vector<3x64xf32>
    %209 = arith.mulf %208, %208 : vector<3x64xf32>
    %cst_108 = arith.constant dense<0.000000e+00> : vector<64xf32>
    %210 = vector.multi_reduction <add>, %209, %cst_108 [0] : vector<3x64xf32> to vector<64xf32>
    %211 = vector.shape_cast %210 : vector<64xf32> to vector<1x64xf32>
    %212 = arith.addf %206, %211 : vector<1x64xf32>
    %cst_109 = arith.constant 9.000000e+00 : f32
    %213 = vector.broadcast %cst_109 : f32 to vector<1x64xf32>
    %214 = arith.divf %212, %213 : vector<1x64xf32>
    %cst_110 = arith.constant 9.99999974E-6 : f32
    %215 = vector.broadcast %cst_110 : f32 to vector<1x64xf32>
    %216 = arith.addf %214, %215 : vector<1x64xf32>
    %217 = math.rsqrt %216 : vector<1x64xf32>
    %218 = vector.broadcast %193 : vector<1x64xf32> to vector<3x64xf32>
    %219 = arith.subf %169, %218 : vector<3x64xf32>
    %220 = vector.broadcast %217 : vector<1x64xf32> to vector<3x64xf32>
    %221 = arith.mulf %219, %220 : vector<3x64xf32>
    %222 = vector.broadcast %180 : vector<1x64xf32> to vector<3x64xf32>
    %223 = arith.mulf %221, %222 : vector<3x64xf32>
    %224 = vector.broadcast %181 : vector<1x64xf32> to vector<3x64xf32>
    %225 = arith.addf %223, %224 : vector<3x64xf32>
    %cst_111 = arith.constant 0.000000e+00 : f32
    %226 = vector.broadcast %cst_111 : f32 to vector<3x64xf32>
    %227 = arith.maximumf %225, %226 : vector<3x64xf32>
    %228 = vector.broadcast %193 : vector<1x64xf32> to vector<3x64xf32>
    %229 = arith.subf %174, %228 : vector<3x64xf32>
    %230 = vector.broadcast %217 : vector<1x64xf32> to vector<3x64xf32>
    %231 = arith.mulf %229, %230 : vector<3x64xf32>
    %232 = vector.broadcast %180 : vector<1x64xf32> to vector<3x64xf32>
    %233 = arith.mulf %231, %232 : vector<3x64xf32>
    %234 = vector.broadcast %181 : vector<1x64xf32> to vector<3x64xf32>
    %235 = arith.addf %233, %234 : vector<3x64xf32>
    %cst_112 = arith.constant 0.000000e+00 : f32
    %236 = vector.broadcast %cst_112 : f32 to vector<3x64xf32>
    %237 = arith.maximumf %235, %236 : vector<3x64xf32>
    %238 = vector.broadcast %193 : vector<1x64xf32> to vector<3x64xf32>
    %239 = arith.subf %179, %238 : vector<3x64xf32>
    %240 = vector.broadcast %217 : vector<1x64xf32> to vector<3x64xf32>
    %241 = arith.mulf %239, %240 : vector<3x64xf32>
    %242 = vector.broadcast %180 : vector<1x64xf32> to vector<3x64xf32>
    %243 = arith.mulf %241, %242 : vector<3x64xf32>
    %244 = vector.broadcast %181 : vector<1x64xf32> to vector<3x64xf32>
    %245 = arith.addf %243, %244 : vector<3x64xf32>
    %cst_113 = arith.constant 0.000000e+00 : f32
    %246 = vector.broadcast %cst_113 : f32 to vector<3x64xf32>
    %247 = arith.maximumf %245, %246 : vector<3x64xf32>
    %cst_114 = arith.constant dense<0xFF800000> : vector<64xf32>
    %248 = vector.multi_reduction <maximumf>, %227, %cst_114 [0] : vector<3x64xf32> to vector<64xf32>
    %249 = vector.shape_cast %248 : vector<64xf32> to vector<1x64xf32>
    %cst_115 = arith.constant dense<0xFF800000> : vector<64xf32>
    %250 = vector.multi_reduction <maximumf>, %237, %cst_115 [0] : vector<3x64xf32> to vector<64xf32>
    %251 = vector.shape_cast %250 : vector<64xf32> to vector<1x64xf32>
    %cst_116 = arith.constant dense<0xFF800000> : vector<64xf32>
    %252 = vector.multi_reduction <maximumf>, %247, %cst_116 [0] : vector<3x64xf32> to vector<64xf32>
    %253 = vector.shape_cast %252 : vector<64xf32> to vector<1x64xf32>
    %254 = vector.extract_strided_slice %46 {offsets = [3, 0], sizes = [3, 2], strides = [1, 1]} : vector<6x2xf32> to vector<3x2xf32>
    %255 = vector.extract_strided_slice %38 {offsets = [3, 0], sizes = [3, 32], strides = [1, 1]} : vector<6x32xf32> to vector<3x32xf32>
    %c0_117 = arith.constant 0 : index
    %c0_118 = arith.constant 0 : index
    %256 = vector.load %arg15[%c0_117, %c0_118] : memref<32x512xf32, #tpu.memory_space<vmem>>, vector<32x512xf32>
    %cst_119 = arith.constant dense<0.000000e+00> : vector<3x512xf32>
    %257 = tpu.matmul %255, %256, %cst_119 {dimension_numbers = #tpu.dot_dimension_numbers<[1], [0], [0], [1], [0, 0, 1, 1], [], []>} : vector<3x32xf32>, vector<32x512xf32>, vector<3x512xf32> -> vector<3x512xf32>
    %258 = vector.extract_strided_slice %254 {offsets = [0, 0], sizes = [1, 2], strides = [1, 1]} : vector<3x2xf32> to vector<1x2xf32>
    %259 = vector.broadcast %258 : vector<1x2xf32> to vector<3x2xf32>
    %260 = arith.subf %254, %259 : vector<3x2xf32>
    %c0_120 = arith.constant 0 : index
    %c0_121 = arith.constant 0 : index
    %261 = vector.load %arg12[%c0_120, %c0_121] : memref<2x32xf32, #tpu.memory_space<vmem>>, vector<2x32xf32>
    %cst_122 = arith.constant dense<0.000000e+00> : vector<3x32xf32>
    %262 = tpu.matmul %260, %261, %cst_122 {dimension_numbers = #tpu.dot_dimension_numbers<[1], [0], [0], [1], [0, 0, 1, 1], [], []>} : vector<3x2xf32>, vector<2x32xf32>, vector<3x32xf32> -> vector<3x32xf32>
    %c0_123 = arith.constant 0 : index
    %c0_124 = arith.constant 0 : index
    %263 = vector.load %arg13[%c0_123, %c0_124] : memref<1x32xf32, #tpu.memory_space<vmem>>, vector<1x32xf32>
    %264 = vector.broadcast %263 : vector<1x32xf32> to vector<3x32xf32>
    %265 = arith.addf %262, %264 : vector<3x32xf32>
    %c0_125 = arith.constant 0 : index
    %c0_126 = arith.constant 0 : index
    %266 = vector.load %arg14[%c0_125, %c0_126] : memref<32x512xf32, #tpu.memory_space<vmem>>, vector<32x512xf32>
    %cst_127 = arith.constant dense<0.000000e+00> : vector<3x512xf32>
    %267 = tpu.matmul %265, %266, %cst_127 {dimension_numbers = #tpu.dot_dimension_numbers<[1], [0], [0], [1], [0, 0, 1, 1], [], []>} : vector<3x32xf32>, vector<32x512xf32>, vector<3x512xf32> -> vector<3x512xf32>
    %268 = arith.addf %267, %257 : vector<3x512xf32>
    %c0_128 = arith.constant 0 : index
    %c0_129 = arith.constant 0 : index
    %269 = vector.load %arg16[%c0_128, %c0_129] : memref<1x512xf32, #tpu.memory_space<vmem>>, vector<1x512xf32>
    %270 = vector.broadcast %269 : vector<1x512xf32> to vector<3x512xf32>
    %271 = arith.addf %268, %270 : vector<3x512xf32>
    %272 = vector.extract_strided_slice %254 {offsets = [1, 0], sizes = [1, 2], strides = [1, 1]} : vector<3x2xf32> to vector<1x2xf32>
    %273 = vector.broadcast %272 : vector<1x2xf32> to vector<3x2xf32>
    %274 = arith.subf %254, %273 : vector<3x2xf32>
    %c0_130 = arith.constant 0 : index
    %c0_131 = arith.constant 0 : index
    %275 = vector.load %arg12[%c0_130, %c0_131] : memref<2x32xf32, #tpu.memory_space<vmem>>, vector<2x32xf32>
    %cst_132 = arith.constant dense<0.000000e+00> : vector<3x32xf32>
    %276 = tpu.matmul %274, %275, %cst_132 {dimension_numbers = #tpu.dot_dimension_numbers<[1], [0], [0], [1], [0, 0, 1, 1], [], []>} : vector<3x2xf32>, vector<2x32xf32>, vector<3x32xf32> -> vector<3x32xf32>
    %c0_133 = arith.constant 0 : index
    %c0_134 = arith.constant 0 : index
    %277 = vector.load %arg13[%c0_133, %c0_134] : memref<1x32xf32, #tpu.memory_space<vmem>>, vector<1x32xf32>
    %278 = vector.broadcast %277 : vector<1x32xf32> to vector<3x32xf32>
    %279 = arith.addf %276, %278 : vector<3x32xf32>
    %c0_135 = arith.constant 0 : index
    %c0_136 = arith.constant 0 : index
    %280 = vector.load %arg14[%c0_135, %c0_136] : memref<32x512xf32, #tpu.memory_space<vmem>>, vector<32x512xf32>
    %cst_137 = arith.constant dense<0.000000e+00> : vector<3x512xf32>
    %281 = tpu.matmul %279, %280, %cst_137 {dimension_numbers = #tpu.dot_dimension_numbers<[1], [0], [0], [1], [0, 0, 1, 1], [], []>} : vector<3x32xf32>, vector<32x512xf32>, vector<3x512xf32> -> vector<3x512xf32>
    %282 = arith.addf %281, %257 : vector<3x512xf32>
    %c0_138 = arith.constant 0 : index
    %c0_139 = arith.constant 0 : index
    %283 = vector.load %arg16[%c0_138, %c0_139] : memref<1x512xf32, #tpu.memory_space<vmem>>, vector<1x512xf32>
    %284 = vector.broadcast %283 : vector<1x512xf32> to vector<3x512xf32>
    %285 = arith.addf %282, %284 : vector<3x512xf32>
    %286 = vector.extract_strided_slice %254 {offsets = [2, 0], sizes = [1, 2], strides = [1, 1]} : vector<3x2xf32> to vector<1x2xf32>
    %287 = vector.broadcast %286 : vector<1x2xf32> to vector<3x2xf32>
    %288 = arith.subf %254, %287 : vector<3x2xf32>
    %c0_140 = arith.constant 0 : index
    %c0_141 = arith.constant 0 : index
    %289 = vector.load %arg12[%c0_140, %c0_141] : memref<2x32xf32, #tpu.memory_space<vmem>>, vector<2x32xf32>
    %cst_142 = arith.constant dense<0.000000e+00> : vector<3x32xf32>
    %290 = tpu.matmul %288, %289, %cst_142 {dimension_numbers = #tpu.dot_dimension_numbers<[1], [0], [0], [1], [0, 0, 1, 1], [], []>} : vector<3x2xf32>, vector<2x32xf32>, vector<3x32xf32> -> vector<3x32xf32>
    %c0_143 = arith.constant 0 : index
    %c0_144 = arith.constant 0 : index
    %291 = vector.load %arg13[%c0_143, %c0_144] : memref<1x32xf32, #tpu.memory_space<vmem>>, vector<1x32xf32>
    %292 = vector.broadcast %291 : vector<1x32xf32> to vector<3x32xf32>
    %293 = arith.addf %290, %292 : vector<3x32xf32>
    %c0_145 = arith.constant 0 : index
    %c0_146 = arith.constant 0 : index
    %294 = vector.load %arg14[%c0_145, %c0_146] : memref<32x512xf32, #tpu.memory_space<vmem>>, vector<32x512xf32>
    %cst_147 = arith.constant dense<0.000000e+00> : vector<3x512xf32>
    %295 = tpu.matmul %293, %294, %cst_147 {dimension_numbers = #tpu.dot_dimension_numbers<[1], [0], [0], [1], [0, 0, 1, 1], [], []>} : vector<3x32xf32>, vector<32x512xf32>, vector<3x512xf32> -> vector<3x512xf32>
    %296 = arith.addf %295, %257 : vector<3x512xf32>
    %c0_148 = arith.constant 0 : index
    %c0_149 = arith.constant 0 : index
    %297 = vector.load %arg16[%c0_148, %c0_149] : memref<1x512xf32, #tpu.memory_space<vmem>>, vector<1x512xf32>
    %298 = vector.broadcast %297 : vector<1x512xf32> to vector<3x512xf32>
    %299 = arith.addf %296, %298 : vector<3x512xf32>
    %c0_150 = arith.constant 0 : index
    %c0_151 = arith.constant 0 : index
    %300 = vector.load %arg17[%c0_150, %c0_151] : memref<1x512xf32, #tpu.memory_space<vmem>>, vector<1x512xf32>
    %c0_152 = arith.constant 0 : index
    %c0_153 = arith.constant 0 : index
    %301 = vector.load %arg18[%c0_152, %c0_153] : memref<1x512xf32, #tpu.memory_space<vmem>>, vector<1x512xf32>
    %cst_154 = arith.constant dense<0.000000e+00> : vector<512xf32>
    %302 = vector.multi_reduction <add>, %271, %cst_154 [0] : vector<3x512xf32> to vector<512xf32>
    %303 = vector.shape_cast %302 : vector<512xf32> to vector<1x512xf32>
    %cst_155 = arith.constant 0.000000e+00 : f32
    %304 = vector.broadcast %cst_155 : f32 to vector<1x512xf32>
    %305 = arith.addf %304, %303 : vector<1x512xf32>
    %cst_156 = arith.constant dense<0.000000e+00> : vector<512xf32>
    %306 = vector.multi_reduction <add>, %285, %cst_156 [0] : vector<3x512xf32> to vector<512xf32>
    %307 = vector.shape_cast %306 : vector<512xf32> to vector<1x512xf32>
    %308 = arith.addf %305, %307 : vector<1x512xf32>
    %cst_157 = arith.constant dense<0.000000e+00> : vector<512xf32>
    %309 = vector.multi_reduction <add>, %299, %cst_157 [0] : vector<3x512xf32> to vector<512xf32>
    %310 = vector.shape_cast %309 : vector<512xf32> to vector<1x512xf32>
    %311 = arith.addf %308, %310 : vector<1x512xf32>
    %cst_158 = arith.constant 9.000000e+00 : f32
    %312 = vector.broadcast %cst_158 : f32 to vector<1x512xf32>
    %313 = arith.divf %311, %312 : vector<1x512xf32>
    %314 = vector.broadcast %313 : vector<1x512xf32> to vector<3x512xf32>
    %315 = arith.subf %271, %314 : vector<3x512xf32>
    %316 = arith.mulf %315, %315 : vector<3x512xf32>
    %cst_159 = arith.constant dense<0.000000e+00> : vector<512xf32>
    %317 = vector.multi_reduction <add>, %316, %cst_159 [0] : vector<3x512xf32> to vector<512xf32>
    %318 = vector.shape_cast %317 : vector<512xf32> to vector<1x512xf32>
    %cst_160 = arith.constant 0.000000e+00 : f32
    %319 = vector.broadcast %cst_160 : f32 to vector<1x512xf32>
    %320 = arith.addf %319, %318 : vector<1x512xf32>
    %321 = vector.broadcast %313 : vector<1x512xf32> to vector<3x512xf32>
    %322 = arith.subf %285, %321 : vector<3x512xf32>
    %323 = arith.mulf %322, %322 : vector<3x512xf32>
    %cst_161 = arith.constant dense<0.000000e+00> : vector<512xf32>
    %324 = vector.multi_reduction <add>, %323, %cst_161 [0] : vector<3x512xf32> to vector<512xf32>
    %325 = vector.shape_cast %324 : vector<512xf32> to vector<1x512xf32>
    %326 = arith.addf %320, %325 : vector<1x512xf32>
    %327 = vector.broadcast %313 : vector<1x512xf32> to vector<3x512xf32>
    %328 = arith.subf %299, %327 : vector<3x512xf32>
    %329 = arith.mulf %328, %328 : vector<3x512xf32>
    %cst_162 = arith.constant dense<0.000000e+00> : vector<512xf32>
    %330 = vector.multi_reduction <add>, %329, %cst_162 [0] : vector<3x512xf32> to vector<512xf32>
    %331 = vector.shape_cast %330 : vector<512xf32> to vector<1x512xf32>
    %332 = arith.addf %326, %331 : vector<1x512xf32>
    %cst_163 = arith.constant 9.000000e+00 : f32
    %333 = vector.broadcast %cst_163 : f32 to vector<1x512xf32>
    %334 = arith.divf %332, %333 : vector<1x512xf32>
    %cst_164 = arith.constant 9.99999974E-6 : f32
    %335 = vector.broadcast %cst_164 : f32 to vector<1x512xf32>
    %336 = arith.addf %334, %335 : vector<1x512xf32>
    %337 = math.rsqrt %336 : vector<1x512xf32>
    %338 = vector.broadcast %313 : vector<1x512xf32> to vector<3x512xf32>
    %339 = arith.subf %271, %338 : vector<3x512xf32>
    %340 = vector.broadcast %337 : vector<1x512xf32> to vector<3x512xf32>
    %341 = arith.mulf %339, %340 : vector<3x512xf32>
    %342 = vector.broadcast %300 : vector<1x512xf32> to vector<3x512xf32>
    %343 = arith.mulf %341, %342 : vector<3x512xf32>
    %344 = vector.broadcast %301 : vector<1x512xf32> to vector<3x512xf32>
    %345 = arith.addf %343, %344 : vector<3x512xf32>
    %cst_165 = arith.constant 0.000000e+00 : f32
    %346 = vector.broadcast %cst_165 : f32 to vector<3x512xf32>
    %347 = arith.maximumf %345, %346 : vector<3x512xf32>
    %348 = vector.broadcast %313 : vector<1x512xf32> to vector<3x512xf32>
    %349 = arith.subf %285, %348 : vector<3x512xf32>
    %350 = vector.broadcast %337 : vector<1x512xf32> to vector<3x512xf32>
    %351 = arith.mulf %349, %350 : vector<3x512xf32>
    %352 = vector.broadcast %300 : vector<1x512xf32> to vector<3x512xf32>
    %353 = arith.mulf %351, %352 : vector<3x512xf32>
    %354 = vector.broadcast %301 : vector<1x512xf32> to vector<3x512xf32>
    %355 = arith.addf %353, %354 : vector<3x512xf32>
    %cst_166 = arith.constant 0.000000e+00 : f32
    %356 = vector.broadcast %cst_166 : f32 to vector<3x512xf32>
    %357 = arith.maximumf %355, %356 : vector<3x512xf32>
    %358 = vector.broadcast %313 : vector<1x512xf32> to vector<3x512xf32>
    %359 = arith.subf %299, %358 : vector<3x512xf32>
    %360 = vector.broadcast %337 : vector<1x512xf32> to vector<3x512xf32>
    %361 = arith.mulf %359, %360 : vector<3x512xf32>
    %362 = vector.broadcast %300 : vector<1x512xf32> to vector<3x512xf32>
    %363 = arith.mulf %361, %362 : vector<3x512xf32>
    %364 = vector.broadcast %301 : vector<1x512xf32> to vector<3x512xf32>
    %365 = arith.addf %363, %364 : vector<3x512xf32>
    %cst_167 = arith.constant 0.000000e+00 : f32
    %366 = vector.broadcast %cst_167 : f32 to vector<3x512xf32>
    %367 = arith.maximumf %365, %366 : vector<3x512xf32>
    %c0_168 = arith.constant 0 : index
    %c0_169 = arith.constant 0 : index
    %368 = vector.load %arg19[%c0_168, %c0_169] : memref<512x64xf32, #tpu.memory_space<vmem>>, vector<512x64xf32>
    %cst_170 = arith.constant dense<0.000000e+00> : vector<3x64xf32>
    %369 = tpu.matmul %347, %368, %cst_170 {dimension_numbers = #tpu.dot_dimension_numbers<[1], [0], [0], [1], [0, 0, 1, 1], [], []>} : vector<3x512xf32>, vector<512x64xf32>, vector<3x64xf32> -> vector<3x64xf32>
    %c0_171 = arith.constant 0 : index
    %c0_172 = arith.constant 0 : index
    %370 = vector.load %arg20[%c0_171, %c0_172] : memref<1x64xf32, #tpu.memory_space<vmem>>, vector<1x64xf32>
    %371 = vector.broadcast %370 : vector<1x64xf32> to vector<3x64xf32>
    %372 = arith.addf %369, %371 : vector<3x64xf32>
    %c0_173 = arith.constant 0 : index
    %c0_174 = arith.constant 0 : index
    %373 = vector.load %arg19[%c0_173, %c0_174] : memref<512x64xf32, #tpu.memory_space<vmem>>, vector<512x64xf32>
    %cst_175 = arith.constant dense<0.000000e+00> : vector<3x64xf32>
    %374 = tpu.matmul %357, %373, %cst_175 {dimension_numbers = #tpu.dot_dimension_numbers<[1], [0], [0], [1], [0, 0, 1, 1], [], []>} : vector<3x512xf32>, vector<512x64xf32>, vector<3x64xf32> -> vector<3x64xf32>
    %c0_176 = arith.constant 0 : index
    %c0_177 = arith.constant 0 : index
    %375 = vector.load %arg20[%c0_176, %c0_177] : memref<1x64xf32, #tpu.memory_space<vmem>>, vector<1x64xf32>
    %376 = vector.broadcast %375 : vector<1x64xf32> to vector<3x64xf32>
    %377 = arith.addf %374, %376 : vector<3x64xf32>
    %c0_178 = arith.constant 0 : index
    %c0_179 = arith.constant 0 : index
    %378 = vector.load %arg19[%c0_178, %c0_179] : memref<512x64xf32, #tpu.memory_space<vmem>>, vector<512x64xf32>
    %cst_180 = arith.constant dense<0.000000e+00> : vector<3x64xf32>
    %379 = tpu.matmul %367, %378, %cst_180 {dimension_numbers = #tpu.dot_dimension_numbers<[1], [0], [0], [1], [0, 0, 1, 1], [], []>} : vector<3x512xf32>, vector<512x64xf32>, vector<3x64xf32> -> vector<3x64xf32>
    %c0_181 = arith.constant 0 : index
    %c0_182 = arith.constant 0 : index
    %380 = vector.load %arg20[%c0_181, %c0_182] : memref<1x64xf32, #tpu.memory_space<vmem>>, vector<1x64xf32>
    %381 = vector.broadcast %380 : vector<1x64xf32> to vector<3x64xf32>
    %382 = arith.addf %379, %381 : vector<3x64xf32>
    %c0_183 = arith.constant 0 : index
    %c0_184 = arith.constant 0 : index
    %383 = vector.load %arg21[%c0_183, %c0_184] : memref<1x64xf32, #tpu.memory_space<vmem>>, vector<1x64xf32>
    %c0_185 = arith.constant 0 : index
    %c0_186 = arith.constant 0 : index
    %384 = vector.load %arg22[%c0_185, %c0_186] : memref<1x64xf32, #tpu.memory_space<vmem>>, vector<1x64xf32>
    %cst_187 = arith.constant dense<0.000000e+00> : vector<64xf32>
    %385 = vector.multi_reduction <add>, %372, %cst_187 [0] : vector<3x64xf32> to vector<64xf32>
    %386 = vector.shape_cast %385 : vector<64xf32> to vector<1x64xf32>
    %cst_188 = arith.constant 0.000000e+00 : f32
    %387 = vector.broadcast %cst_188 : f32 to vector<1x64xf32>
    %388 = arith.addf %387, %386 : vector<1x64xf32>
    %cst_189 = arith.constant dense<0.000000e+00> : vector<64xf32>
    %389 = vector.multi_reduction <add>, %377, %cst_189 [0] : vector<3x64xf32> to vector<64xf32>
    %390 = vector.shape_cast %389 : vector<64xf32> to vector<1x64xf32>
    %391 = arith.addf %388, %390 : vector<1x64xf32>
    %cst_190 = arith.constant dense<0.000000e+00> : vector<64xf32>
    %392 = vector.multi_reduction <add>, %382, %cst_190 [0] : vector<3x64xf32> to vector<64xf32>
    %393 = vector.shape_cast %392 : vector<64xf32> to vector<1x64xf32>
    %394 = arith.addf %391, %393 : vector<1x64xf32>
    %cst_191 = arith.constant 9.000000e+00 : f32
    %395 = vector.broadcast %cst_191 : f32 to vector<1x64xf32>
    %396 = arith.divf %394, %395 : vector<1x64xf32>
    %397 = vector.broadcast %396 : vector<1x64xf32> to vector<3x64xf32>
    %398 = arith.subf %372, %397 : vector<3x64xf32>
    %399 = arith.mulf %398, %398 : vector<3x64xf32>
    %cst_192 = arith.constant dense<0.000000e+00> : vector<64xf32>
    %400 = vector.multi_reduction <add>, %399, %cst_192 [0] : vector<3x64xf32> to vector<64xf32>
    %401 = vector.shape_cast %400 : vector<64xf32> to vector<1x64xf32>
    %cst_193 = arith.constant 0.000000e+00 : f32
    %402 = vector.broadcast %cst_193 : f32 to vector<1x64xf32>
    %403 = arith.addf %402, %401 : vector<1x64xf32>
    %404 = vector.broadcast %396 : vector<1x64xf32> to vector<3x64xf32>
    %405 = arith.subf %377, %404 : vector<3x64xf32>
    %406 = arith.mulf %405, %405 : vector<3x64xf32>
    %cst_194 = arith.constant dense<0.000000e+00> : vector<64xf32>
    %407 = vector.multi_reduction <add>, %406, %cst_194 [0] : vector<3x64xf32> to vector<64xf32>
    %408 = vector.shape_cast %407 : vector<64xf32> to vector<1x64xf32>
    %409 = arith.addf %403, %408 : vector<1x64xf32>
    %410 = vector.broadcast %396 : vector<1x64xf32> to vector<3x64xf32>
    %411 = arith.subf %382, %410 : vector<3x64xf32>
    %412 = arith.mulf %411, %411 : vector<3x64xf32>
    %cst_195 = arith.constant dense<0.000000e+00> : vector<64xf32>
    %413 = vector.multi_reduction <add>, %412, %cst_195 [0] : vector<3x64xf32> to vector<64xf32>
    %414 = vector.shape_cast %413 : vector<64xf32> to vector<1x64xf32>
    %415 = arith.addf %409, %414 : vector<1x64xf32>
    %cst_196 = arith.constant 9.000000e+00 : f32
    %416 = vector.broadcast %cst_196 : f32 to vector<1x64xf32>
    %417 = arith.divf %415, %416 : vector<1x64xf32>
    %cst_197 = arith.constant 9.99999974E-6 : f32
    %418 = vector.broadcast %cst_197 : f32 to vector<1x64xf32>
    %419 = arith.addf %417, %418 : vector<1x64xf32>
    %420 = math.rsqrt %419 : vector<1x64xf32>
    %421 = vector.broadcast %396 : vector<1x64xf32> to vector<3x64xf32>
    %422 = arith.subf %372, %421 : vector<3x64xf32>
    %423 = vector.broadcast %420 : vector<1x64xf32> to vector<3x64xf32>
    %424 = arith.mulf %422, %423 : vector<3x64xf32>
    %425 = vector.broadcast %383 : vector<1x64xf32> to vector<3x64xf32>
    %426 = arith.mulf %424, %425 : vector<3x64xf32>
    %427 = vector.broadcast %384 : vector<1x64xf32> to vector<3x64xf32>
    %428 = arith.addf %426, %427 : vector<3x64xf32>
    %cst_198 = arith.constant 0.000000e+00 : f32
    %429 = vector.broadcast %cst_198 : f32 to vector<3x64xf32>
    %430 = arith.maximumf %428, %429 : vector<3x64xf32>
    %431 = vector.broadcast %396 : vector<1x64xf32> to vector<3x64xf32>
    %432 = arith.subf %377, %431 : vector<3x64xf32>
    %433 = vector.broadcast %420 : vector<1x64xf32> to vector<3x64xf32>
    %434 = arith.mulf %432, %433 : vector<3x64xf32>
    %435 = vector.broadcast %383 : vector<1x64xf32> to vector<3x64xf32>
    %436 = arith.mulf %434, %435 : vector<3x64xf32>
    %437 = vector.broadcast %384 : vector<1x64xf32> to vector<3x64xf32>
    %438 = arith.addf %436, %437 : vector<3x64xf32>
    %cst_199 = arith.constant 0.000000e+00 : f32
    %439 = vector.broadcast %cst_199 : f32 to vector<3x64xf32>
    %440 = arith.maximumf %438, %439 : vector<3x64xf32>
    %441 = vector.broadcast %396 : vector<1x64xf32> to vector<3x64xf32>
    %442 = arith.subf %382, %441 : vector<3x64xf32>
    %443 = vector.broadcast %420 : vector<1x64xf32> to vector<3x64xf32>
    %444 = arith.mulf %442, %443 : vector<3x64xf32>
    %445 = vector.broadcast %383 : vector<1x64xf32> to vector<3x64xf32>
    %446 = arith.mulf %444, %445 : vector<3x64xf32>
    %447 = vector.broadcast %384 : vector<1x64xf32> to vector<3x64xf32>
    %448 = arith.addf %446, %447 : vector<3x64xf32>
    %cst_200 = arith.constant 0.000000e+00 : f32
    %449 = vector.broadcast %cst_200 : f32 to vector<3x64xf32>
    %450 = arith.maximumf %448, %449 : vector<3x64xf32>
    %cst_201 = arith.constant dense<0xFF800000> : vector<64xf32>
    %451 = vector.multi_reduction <maximumf>, %430, %cst_201 [0] : vector<3x64xf32> to vector<64xf32>
    %452 = vector.shape_cast %451 : vector<64xf32> to vector<1x64xf32>
    %cst_202 = arith.constant dense<0xFF800000> : vector<64xf32>
    %453 = vector.multi_reduction <maximumf>, %440, %cst_202 [0] : vector<3x64xf32> to vector<64xf32>
    %454 = vector.shape_cast %453 : vector<64xf32> to vector<1x64xf32>
    %cst_203 = arith.constant dense<0xFF800000> : vector<64xf32>
    %455 = vector.multi_reduction <maximumf>, %450, %cst_203 [0] : vector<3x64xf32> to vector<64xf32>
    %456 = vector.shape_cast %455 : vector<64xf32> to vector<1x64xf32>
    %457 = tpu.iota {dimensions = array<i32: 0>} : vector<6x64xi32>
    %cst_204 = arith.constant 0.000000e+00 : f32
    %458 = vector.broadcast %cst_204 : f32 to vector<6x64xf32>
    %c0_i32_205 = arith.constant 0 : i32
    %459 = vector.broadcast %c0_i32_205 : i32 to vector<6x64xi32>
    %460 = arith.cmpi eq, %457, %459 : vector<6x64xi32>
    %461 = vector.shape_cast %249 : vector<1x64xf32> to vector<1x64xf32>
    %462 = vector.broadcast %461 : vector<1x64xf32> to vector<6x64xf32>
    %463 = arith.select %460, %462, %458 : vector<6x64xi1>, vector<6x64xf32>
    %c1_i32 = arith.constant 1 : i32
    %464 = vector.broadcast %c1_i32 : i32 to vector<6x64xi32>
    %465 = arith.cmpi eq, %457, %464 : vector<6x64xi32>
    %466 = vector.shape_cast %251 : vector<1x64xf32> to vector<1x64xf32>
    %467 = vector.broadcast %466 : vector<1x64xf32> to vector<6x64xf32>
    %468 = arith.select %465, %467, %463 : vector<6x64xi1>, vector<6x64xf32>
    %c2_i32 = arith.constant 2 : i32
    %469 = vector.broadcast %c2_i32 : i32 to vector<6x64xi32>
    %470 = arith.cmpi eq, %457, %469 : vector<6x64xi32>
    %471 = vector.shape_cast %253 : vector<1x64xf32> to vector<1x64xf32>
    %472 = vector.broadcast %471 : vector<1x64xf32> to vector<6x64xf32>
    %473 = arith.select %470, %472, %468 : vector<6x64xi1>, vector<6x64xf32>
    %c3_i32 = arith.constant 3 : i32
    %474 = vector.broadcast %c3_i32 : i32 to vector<6x64xi32>
    %475 = arith.cmpi eq, %457, %474 : vector<6x64xi32>
    %476 = vector.shape_cast %452 : vector<1x64xf32> to vector<1x64xf32>
    %477 = vector.broadcast %476 : vector<1x64xf32> to vector<6x64xf32>
    %478 = arith.select %475, %477, %473 : vector<6x64xi1>, vector<6x64xf32>
    %c4_i32 = arith.constant 4 : i32
    %479 = vector.broadcast %c4_i32 : i32 to vector<6x64xi32>
    %480 = arith.cmpi eq, %457, %479 : vector<6x64xi32>
    %481 = vector.shape_cast %454 : vector<1x64xf32> to vector<1x64xf32>
    %482 = vector.broadcast %481 : vector<1x64xf32> to vector<6x64xf32>
    %483 = arith.select %480, %482, %478 : vector<6x64xi1>, vector<6x64xf32>
    %c5_i32 = arith.constant 5 : i32
    %484 = vector.broadcast %c5_i32 : i32 to vector<6x64xi32>
    %485 = arith.cmpi eq, %457, %484 : vector<6x64xi32>
    %486 = vector.shape_cast %456 : vector<1x64xf32> to vector<1x64xf32>
    %487 = vector.broadcast %486 : vector<1x64xf32> to vector<6x64xf32>
    %488 = arith.select %485, %487, %483 : vector<6x64xi1>, vector<6x64xf32>
    %c0_206 = arith.constant 0 : index
    %c0_207 = arith.constant 0 : index
    %489 = vector.load %arg23[%c0_206, %c0_207] : memref<32x64xf32, #tpu.memory_space<vmem>>, vector<32x64xf32>
    %cst_208 = arith.constant dense<0.000000e+00> : vector<6x64xf32>
    %490 = tpu.matmul %38, %489, %cst_208 {dimension_numbers = #tpu.dot_dimension_numbers<[1], [0], [0], [1], [0, 0, 1, 1], [], []>} : vector<6x32xf32>, vector<32x64xf32>, vector<6x64xf32> -> vector<6x64xf32>
    %c0_209 = arith.constant 0 : index
    %c0_210 = arith.constant 0 : index
    %491 = vector.load %arg24[%c0_209, %c0_210] : memref<64x64xf32, #tpu.memory_space<vmem>>, vector<64x64xf32>
    %cst_211 = arith.constant dense<0.000000e+00> : vector<6x64xf32>
    %492 = tpu.matmul %488, %491, %cst_211 {dimension_numbers = #tpu.dot_dimension_numbers<[1], [0], [0], [1], [0, 0, 1, 1], [], []>} : vector<6x64xf32>, vector<64x64xf32>, vector<6x64xf32> -> vector<6x64xf32>
    %493 = arith.addf %490, %492 : vector<6x64xf32>
    %c0_212 = arith.constant 0 : index
    %c0_213 = arith.constant 0 : index
    %494 = vector.load %arg25[%c0_212, %c0_213] : memref<1x64xf32, #tpu.memory_space<vmem>>, vector<1x64xf32>
    %495 = vector.broadcast %494 : vector<1x64xf32> to vector<6x64xf32>
    %496 = arith.addf %493, %495 : vector<6x64xf32>
    %c0_214 = arith.constant 0 : index
    %c0_215 = arith.constant 0 : index
    %497 = vector.load %arg26[%c0_214, %c0_215] : memref<1x64xf32, #tpu.memory_space<vmem>>, vector<1x64xf32>
    %c0_216 = arith.constant 0 : index
    %c0_217 = arith.constant 0 : index
    %498 = vector.load %arg27[%c0_216, %c0_217] : memref<1x64xf32, #tpu.memory_space<vmem>>, vector<1x64xf32>
    %cst_218 = arith.constant dense<0.000000e+00> : vector<64xf32>
    %499 = vector.multi_reduction <add>, %496, %cst_218 [0] : vector<6x64xf32> to vector<64xf32>
    %500 = vector.shape_cast %499 : vector<64xf32> to vector<1x64xf32>
    %cst_219 = arith.constant 6.000000e+00 : f32
    %501 = vector.broadcast %cst_219 : f32 to vector<1x64xf32>
    %502 = arith.divf %500, %501 : vector<1x64xf32>
    %503 = vector.broadcast %502 : vector<1x64xf32> to vector<6x64xf32>
    %504 = arith.subf %496, %503 : vector<6x64xf32>
    %505 = arith.mulf %504, %504 : vector<6x64xf32>
    %cst_220 = arith.constant dense<0.000000e+00> : vector<64xf32>
    %506 = vector.multi_reduction <add>, %505, %cst_220 [0] : vector<6x64xf32> to vector<64xf32>
    %507 = vector.shape_cast %506 : vector<64xf32> to vector<1x64xf32>
    %cst_221 = arith.constant 6.000000e+00 : f32
    %508 = vector.broadcast %cst_221 : f32 to vector<1x64xf32>
    %509 = arith.divf %507, %508 : vector<1x64xf32>
    %510 = vector.broadcast %502 : vector<1x64xf32> to vector<6x64xf32>
    %511 = arith.subf %496, %510 : vector<6x64xf32>
    %cst_222 = arith.constant 9.99999974E-6 : f32
    %512 = vector.broadcast %cst_222 : f32 to vector<1x64xf32>
    %513 = arith.addf %509, %512 : vector<1x64xf32>
    %514 = math.rsqrt %513 : vector<1x64xf32>
    %515 = vector.broadcast %514 : vector<1x64xf32> to vector<6x64xf32>
    %516 = arith.mulf %511, %515 : vector<6x64xf32>
    %517 = vector.broadcast %497 : vector<1x64xf32> to vector<6x64xf32>
    %518 = arith.mulf %516, %517 : vector<6x64xf32>
    %519 = vector.broadcast %498 : vector<1x64xf32> to vector<6x64xf32>
    %520 = arith.addf %518, %519 : vector<6x64xf32>
    %cst_223 = arith.constant 0.000000e+00 : f32
    %521 = vector.broadcast %cst_223 : f32 to vector<6x64xf32>
    %522 = arith.maximumf %520, %521 : vector<6x64xf32>
    %c0_224 = arith.constant 0 : index
    %c0_225 = arith.constant 0 : index
    %523 = vector.load %arg28[%c0_224, %c0_225] : memref<64x32xf32, #tpu.memory_space<vmem>>, vector<64x32xf32>
    %cst_226 = arith.constant dense<0.000000e+00> : vector<6x32xf32>
    %524 = tpu.matmul %522, %523, %cst_226 {dimension_numbers = #tpu.dot_dimension_numbers<[1], [0], [0], [1], [0, 0, 1, 1], [], []>} : vector<6x64xf32>, vector<64x32xf32>, vector<6x32xf32> -> vector<6x32xf32>
    %c0_227 = arith.constant 0 : index
    %c0_228 = arith.constant 0 : index
    %525 = vector.load %arg29[%c0_227, %c0_228] : memref<1x32xf32, #tpu.memory_space<vmem>>, vector<1x32xf32>
    %526 = vector.broadcast %525 : vector<1x32xf32> to vector<6x32xf32>
    %527 = arith.addf %524, %526 : vector<6x32xf32>
    %c0_229 = arith.constant 0 : index
    %c0_230 = arith.constant 0 : index
    %528 = vector.load %arg30[%c0_229, %c0_230] : memref<1x32xf32, #tpu.memory_space<vmem>>, vector<1x32xf32>
    %c0_231 = arith.constant 0 : index
    %c0_232 = arith.constant 0 : index
    %529 = vector.load %arg31[%c0_231, %c0_232] : memref<1x32xf32, #tpu.memory_space<vmem>>, vector<1x32xf32>
    %cst_233 = arith.constant dense<0.000000e+00> : vector<32xf32>
    %530 = vector.multi_reduction <add>, %527, %cst_233 [0] : vector<6x32xf32> to vector<32xf32>
    %531 = vector.shape_cast %530 : vector<32xf32> to vector<1x32xf32>
    %cst_234 = arith.constant 6.000000e+00 : f32
    %532 = vector.broadcast %cst_234 : f32 to vector<1x32xf32>
    %533 = arith.divf %531, %532 : vector<1x32xf32>
    %534 = vector.broadcast %533 : vector<1x32xf32> to vector<6x32xf32>
    %535 = arith.subf %527, %534 : vector<6x32xf32>
    %536 = arith.mulf %535, %535 : vector<6x32xf32>
    %cst_235 = arith.constant dense<0.000000e+00> : vector<32xf32>
    %537 = vector.multi_reduction <add>, %536, %cst_235 [0] : vector<6x32xf32> to vector<32xf32>
    %538 = vector.shape_cast %537 : vector<32xf32> to vector<1x32xf32>
    %cst_236 = arith.constant 6.000000e+00 : f32
    %539 = vector.broadcast %cst_236 : f32 to vector<1x32xf32>
    %540 = arith.divf %538, %539 : vector<1x32xf32>
    %541 = vector.broadcast %533 : vector<1x32xf32> to vector<6x32xf32>
    %542 = arith.subf %527, %541 : vector<6x32xf32>
    %cst_237 = arith.constant 9.99999974E-6 : f32
    %543 = vector.broadcast %cst_237 : f32 to vector<1x32xf32>
    %544 = arith.addf %540, %543 : vector<1x32xf32>
    %545 = math.rsqrt %544 : vector<1x32xf32>
    %546 = vector.broadcast %545 : vector<1x32xf32> to vector<6x32xf32>
    %547 = arith.mulf %542, %546 : vector<6x32xf32>
    %548 = vector.broadcast %528 : vector<1x32xf32> to vector<6x32xf32>
    %549 = arith.mulf %547, %548 : vector<6x32xf32>
    %550 = vector.broadcast %529 : vector<1x32xf32> to vector<6x32xf32>
    %551 = arith.addf %549, %550 : vector<6x32xf32>
    %cst_238 = arith.constant 0.000000e+00 : f32
    %552 = vector.broadcast %cst_238 : f32 to vector<6x32xf32>
    %553 = arith.maximumf %551, %552 : vector<6x32xf32>
    %c0_239 = arith.constant 0 : index
    %c0_240 = arith.constant 0 : index
    %554 = vector.load %arg34[%c0_239, %c0_240] : memref<6x32xf32, #tpu.memory_space<vmem>>, vector<6x32xf32>
    tpu.vector_store %arg34[%c0_239, %c0_240], %553 {strides = array<i32>} : memref<6x32xf32, #tpu.memory_space<vmem>>, vector<6x32xf32>,
    %c0_241 = arith.constant 0 : index
    %c0_242 = arith.constant 0 : index
    %555 = vector.load %arg33[%c0_241, %c0_242] : memref<6x32xf32, #tpu.memory_space<vmem>>, vector<6x32xf32>
    tpu.vector_store %arg33[%c0_241, %c0_242], %553 {strides = array<i32>} : memref<6x32xf32, #tpu.memory_space<vmem>>, vector<6x32xf32>,
    %c0_243 = arith.constant 0 : index
    %c0_244 = arith.constant 0 : index
    %556 = vector.load %arg5[%c0_243, %c0_244] : memref<2x32xf32, #tpu.memory_space<vmem>>, vector<2x32xf32>
    %cst_245 = arith.constant dense<0.000000e+00> : vector<6x32xf32>
    %557 = tpu.matmul %44, %556, %cst_245 {dimension_numbers = #tpu.dot_dimension_numbers<[1], [0], [0], [1], [0, 0, 1, 1], [], []>} : vector<6x2xf32>, vector<2x32xf32>, vector<6x32xf32> -> vector<6x32xf32>
    %c0_246 = arith.constant 0 : index
    %c0_247 = arith.constant 0 : index
    %558 = vector.load %arg6[%c0_246, %c0_247] : memref<1x32xf32, #tpu.memory_space<vmem>>, vector<1x32xf32>
    %559 = vector.broadcast %558 : vector<1x32xf32> to vector<6x32xf32>
    %560 = arith.addf %557, %559 : vector<6x32xf32>
    %c0_248 = arith.constant 0 : index
    %c0_249 = arith.constant 0 : index
    %561 = vector.load %arg36[%c0_248, %c0_249] : memref<6x32xf32, #tpu.memory_space<vmem>>, vector<6x32xf32>
    tpu.vector_store %arg36[%c0_248, %c0_249], %560 {strides = array<i32>} : memref<6x32xf32, #tpu.memory_space<vmem>>, vector<6x32xf32>,
    return
  }
  func.func @transform_0(%arg0: i32) -> (i32, i32) {
    %c0_i32 = arith.constant 0 : i32
    %c0_i32_0 = arith.constant 0 : i32
    %c0_i32_1 = arith.constant 0 : i32
    return %c0_i32, %c0_i32_0 : i32, i32
  }
  func.func @transform_1(%arg0: i32) -> (i32, i32) {
    %c0_i32 = arith.constant 0 : i32
    %c0_i32_0 = arith.constant 0 : i32
    %c0_i32_1 = arith.constant 0 : i32
    return %c0_i32, %c0_i32_0 : i32, i32
  }
  func.func @transform_2(%arg0: i32) -> (i32, i32) {
    %c0_i32 = arith.constant 0 : i32
    %c0_i32_0 = arith.constant 0 : i32
    %c0_i32_1 = arith.constant 0 : i32
    return %c0_i32, %c0_i32_0 : i32, i32
  }
  func.func @transform_3(%arg0: i32) -> (i32, i32) {
    %c0_i32 = arith.constant 0 : i32
    %c0_i32_0 = arith.constant 0 : i32
    %c0_i32_1 = arith.constant 0 : i32
    return %c0_i32, %c0_i32_0 : i32, i32
  }
  func.func @transform_4(%arg0: i32) -> (i32, i32) {
    %c0_i32 = arith.constant 0 : i32
    %c0_i32_0 = arith.constant 0 : i32
    %c0_i32_1 = arith.constant 0 : i32
    return %c0_i32, %c0_i32_0 : i32, i32
  }
  func.func @transform_5(%arg0: i32) -> (i32, i32) {
    %c0_i32 = arith.constant 0 : i32
    %c0_i32_0 = arith.constant 0 : i32
    %c0_i32_1 = arith.constant 0 : i32
    return %c0_i32, %c0_i32_0 : i32, i32
  }
  func.func @transform_6(%arg0: i32) -> (i32, i32) {
    %c0_i32 = arith.constant 0 : i32
    %c0_i32_0 = arith.constant 0 : i32
    %c0_i32_1 = arith.constant 0 : i32
    return %c0_i32, %c0_i32_0 : i32, i32
  }
  func.func @transform_7(%arg0: i32) -> (i32, i32) {
    %c0_i32 = arith.constant 0 : i32
    %c0_i32_0 = arith.constant 0 : i32
    %c0_i32_1 = arith.constant 0 : i32
    return %c0_i32, %c0_i32_0 : i32, i32
  }
  func.func @transform_8(%arg0: i32) -> (i32, i32) {
    %c0_i32 = arith.constant 0 : i32
    %c0_i32_0 = arith.constant 0 : i32
    %c0_i32_1 = arith.constant 0 : i32
    return %c0_i32, %c0_i32_0 : i32, i32
  }
  func.func @transform_9(%arg0: i32) -> (i32, i32) {
    %c0_i32 = arith.constant 0 : i32
    %c0_i32_0 = arith.constant 0 : i32
    %c0_i32_1 = arith.constant 0 : i32
    return %c0_i32, %c0_i32_0 : i32, i32
  }
  func.func @transform_10(%arg0: i32) -> (i32, i32) {
    %c0_i32 = arith.constant 0 : i32
    %c0_i32_0 = arith.constant 0 : i32
    %c0_i32_1 = arith.constant 0 : i32
    return %c0_i32, %c0_i32_0 : i32, i32
  }
  func.func @transform_11(%arg0: i32) -> (i32, i32) {
    %c0_i32 = arith.constant 0 : i32
    %c0_i32_0 = arith.constant 0 : i32
    %c0_i32_1 = arith.constant 0 : i32
    return %c0_i32, %c0_i32_0 : i32, i32
  }
  func.func @transform_12(%arg0: i32) -> (i32, i32) {
    %c0_i32 = arith.constant 0 : i32
    %c0_i32_0 = arith.constant 0 : i32
    %c0_i32_1 = arith.constant 0 : i32
    return %c0_i32, %c0_i32_0 : i32, i32
  }
  func.func @transform_13(%arg0: i32) -> (i32, i32) {
    %c0_i32 = arith.constant 0 : i32
    %c0_i32_0 = arith.constant 0 : i32
    %c0_i32_1 = arith.constant 0 : i32
    return %c0_i32, %c0_i32_0 : i32, i32
  }
  func.func @transform_14(%arg0: i32) -> (i32, i32) {
    %c0_i32 = arith.constant 0 : i32
    %c0_i32_0 = arith.constant 0 : i32
    %c0_i32_1 = arith.constant 0 : i32
    return %c0_i32, %c0_i32_0 : i32, i32
  }
  func.func @transform_15(%arg0: i32) -> (i32, i32) {
    %c0_i32 = arith.constant 0 : i32
    %c0_i32_0 = arith.constant 0 : i32
    %c0_i32_1 = arith.constant 0 : i32
    return %c0_i32, %c0_i32_0 : i32, i32
  }
  func.func @transform_16(%arg0: i32) -> (i32, i32) {
    %c0_i32 = arith.constant 0 : i32
    %c0_i32_0 = arith.constant 0 : i32
    %c0_i32_1 = arith.constant 0 : i32
    return %c0_i32, %c0_i32_0 : i32, i32
  }
  func.func @transform_17(%arg0: i32) -> (i32, i32) {
    %c0_i32 = arith.constant 0 : i32
    %c0_i32_0 = arith.constant 0 : i32
    %c0_i32_1 = arith.constant 0 : i32
    return %c0_i32, %c0_i32_0 : i32, i32
  }
  func.func @transform_18(%arg0: i32) -> (i32, i32) {
    %c0_i32 = arith.constant 0 : i32
    %c0_i32_0 = arith.constant 0 : i32
    %c0_i32_1 = arith.constant 0 : i32
    return %c0_i32, %c0_i32_0 : i32, i32
  }
  func.func @transform_19(%arg0: i32) -> (i32, i32) {
    %c0_i32 = arith.constant 0 : i32
    %c0_i32_0 = arith.constant 0 : i32
    %c0_i32_1 = arith.constant 0 : i32
    return %c0_i32, %c0_i32_0 : i32, i32
  }
  func.func @transform_20(%arg0: i32) -> (i32, i32) {
    %c0_i32 = arith.constant 0 : i32
    %c0_i32_0 = arith.constant 0 : i32
    %c0_i32_1 = arith.constant 0 : i32
    return %c0_i32, %c0_i32_0 : i32, i32
  }
  func.func @transform_21(%arg0: i32) -> (i32, i32) {
    %c0_i32 = arith.constant 0 : i32
    %c0_i32_0 = arith.constant 0 : i32
    %c0_i32_1 = arith.constant 0 : i32
    return %c0_i32, %c0_i32_0 : i32, i32
  }
  func.func @transform_22(%arg0: i32) -> (i32, i32) {
    %c0_i32 = arith.constant 0 : i32
    %c0_i32_0 = arith.constant 0 : i32
    %c0_i32_1 = arith.constant 0 : i32
    return %c0_i32, %c0_i32_0 : i32, i32
  }
  func.func @transform_23(%arg0: i32) -> (i32, i32) {
    %c0_i32 = arith.constant 0 : i32
    %c0_i32_0 = arith.constant 0 : i32
    %c0_i32_1 = arith.constant 0 : i32
    return %c0_i32, %c0_i32_0 : i32, i32
  }
  func.func @transform_24(%arg0: i32) -> (i32, i32) {
    %c0_i32 = arith.constant 0 : i32
    %c0_i32_0 = arith.constant 0 : i32
    %c0_i32_1 = arith.constant 0 : i32
    return %c0_i32, %c0_i32_0 : i32, i32
  }
  func.func @transform_25(%arg0: i32) -> (i32, i32) {
    %c0_i32 = arith.constant 0 : i32
    %c0_i32_0 = arith.constant 0 : i32
    %c0_i32_1 = arith.constant 0 : i32
    return %c0_i32, %c0_i32_0 : i32, i32
  }
  func.func @transform_26(%arg0: i32) -> (i32, i32) {
    %c0_i32 = arith.constant 0 : i32
    %c0_i32_0 = arith.constant 0 : i32
    %c0_i32_1 = arith.constant 0 : i32
    return %c0_i32, %c0_i32_0 : i32, i32
  }
  func.func @transform_27(%arg0: i32) -> (i32, i32) {
    %c0_i32 = arith.constant 0 : i32
    %c0_i32_0 = arith.constant 0 : i32
    %c0_i32_1 = arith.constant 0 : i32
    return %c0_i32, %c0_i32_0 : i32, i32
  }
  func.func @transform_28(%arg0: i32) -> (i32, i32) {
    %c0_i32 = arith.constant 0 : i32
    %c0_i32_0 = arith.constant 0 : i32
    %c0_i32_1 = arith.constant 0 : i32
    return %c0_i32, %c0_i32_0 : i32, i32
  }
  func.func @transform_29(%arg0: i32) -> (i32, i32) {
    %c0_i32 = arith.constant 0 : i32
    %c0_i32_0 = arith.constant 0 : i32
    %c0_i32_1 = arith.constant 0 : i32
    return %c0_i32, %c0_i32_0 : i32, i32
  }
  func.func @transform_30(%arg0: i32) -> (i32, i32) {
    %c0_i32 = arith.constant 0 : i32
    %c0_i32_0 = arith.constant 0 : i32
    %c0_i32_1 = arith.constant 0 : i32
    return %c0_i32, %c0_i32_0 : i32, i32
  }
  func.func @transform_31(%arg0: i32) -> (i32, i32, i32) {
    %c0_i32 = arith.constant 0 : i32
    %c0_i32_0 = arith.constant 0 : i32
    %c0_i32_1 = arith.constant 0 : i32
    return %arg0, %c0_i32, %c0_i32_0 : i32, i32, i32
  }
  func.func @transform_32(%arg0: i32) -> (i32, i32) {
    %c0_i32 = arith.constant 0 : i32
    %c0_i32_0 = arith.constant 0 : i32
    %c0_i32_1 = arith.constant 0 : i32
    return %c0_i32, %c0_i32_0 : i32, i32
  }
}

</mosaic_0001>

<llo_original>
// kernel: tpu_custom_call.1
$region0: #{tpu_custom_call.1}
  #allocation0 [shape = 'u32[]', space=smem, size = 0x4, offset = 0x4, fixed_abs, tag = 'smem constant byte address 0x4 - core index']
  #allocation1 [shape = 'u32[72,128]{1,0:T(1,128)}', space=vmem, size = 0x9000, scoped, tag = 'internal scratch']
  #allocation2 [shape = 'f32[6,32]{1,0:T(8,128)}', space=vmem, size = 0x1000, scoped, tag = 'scratch operand']
  #allocation3 [shape = 'f32[6,32]{1,0:T(8,128)}', space=vmem, size = 0x1000, scoped, tag = 'scratch operand']
  #allocation4 [shape = 'f32[6,32]{1,0:T(8,128)}', space=vmem, size = 0x1000, scoped, tag = 'scratch operand']
  #allocation5 [shape = 'f32[6,2]{1,0:T(8,128)}', space=vmem, size = 0x1000, scoped, tag = 'scratch operand']
  %s0 = inlined_call_operand.smem [shape: u32[33], index: -1, kind: input, shape index: {}]
  %s1 = sld [smem:[%s0]]
  %s2 = scalar_lea.smem %s0, 1
  %s3 = sld [smem:[%s2]]
  %s4 = scalar_lea.smem %s0, 2
  %s5 = sld [smem:[%s4]]
  %s6 = scalar_lea.smem %s0, 3
  %s7 = sld [smem:[%s6]]
  %s8 = scalar_lea.smem %s0, 4
  %s9 = sld [smem:[%s8]]
  %s10 = scalar_lea.smem %s0, 5
  %s11 = sld [smem:[%s10]]
  %s12 = scalar_lea.smem %s0, 6
  %s13 = sld [smem:[%s12]]
  %s14 = scalar_lea.smem %s0, 7
  %s15 = sld [smem:[%s14]]
  %s16 = scalar_lea.smem %s0, 8
  %s17 = sld [smem:[%s16]]
  %s18 = scalar_lea.smem %s0, 9
  %s19 = sld [smem:[%s18]]
  %s20 = scalar_lea.smem %s0, 10
  %s21 = sld [smem:[%s20]]
  %s22 = scalar_lea.smem %s0, 11
  %s23 = sld [smem:[%s22]]
  %s24 = scalar_lea.smem %s0, 12
  %s25 = sld [smem:[%s24]]
  %s26 = scalar_lea.smem %s0, 13
  %s27 = sld [smem:[%s26]]
  %s28 = scalar_lea.smem %s0, 14
  %s29 = sld [smem:[%s28]]
  %s30 = scalar_lea.smem %s0, 15
  %s31 = sld [smem:[%s30]]
  %s32 = scalar_lea.smem %s0, 16
  %s33 = sld [smem:[%s32]]
  %s34 = scalar_lea.smem %s0, 17
  %s35 = sld [smem:[%s34]]
  %s36 = scalar_lea.smem %s0, 18
  %s37 = sld [smem:[%s36]]
  %s38 = scalar_lea.smem %s0, 19
  %s39 = sld [smem:[%s38]]
  %s40 = scalar_lea.smem %s0, 20
  %s41 = sld [smem:[%s40]]
  %s42 = scalar_lea.smem %s0, 21
  %s43 = sld [smem:[%s42]]
  %s44 = scalar_lea.smem %s0, 22
  %s45 = sld [smem:[%s44]]
  %s46 = scalar_lea.smem %s0, 23
  %s47 = sld [smem:[%s46]]
  %s48 = scalar_lea.smem %s0, 24
  %s49 = sld [smem:[%s48]]
  %s50 = scalar_lea.smem %s0, 25
  %s51 = sld [smem:[%s50]]
  %s52 = scalar_lea.smem %s0, 26
  %s53 = sld [smem:[%s52]]
  %s54 = scalar_lea.smem %s0, 27
  %s55 = sld [smem:[%s54]]
  %s56 = scalar_lea.smem %s0, 28
  %s57 = sld [smem:[%s56]]
  %s58 = scalar_lea.smem %s0, 29
  %s59 = sld [smem:[%s58]]
  %s60 = scalar_lea.smem %s0, 30
  %s61 = sld [smem:[%s60]]
  %s62 = scalar_lea.smem %s0, 31
  %s63 = sld [smem:[%s62]]
  %s64 = scalar_lea.smem %s0, 32
  %s65 = sld [smem:[%s64]]
  %66 = xla_tuple %s63, %s65
  %s67 = sld [smem:[#allocation0]]
  $region169: #{tpu_custom_call.1} parent=0
    _
  %s69 = ssub.s32 1, %s67
  %s70 = scalar_select 0, %s69, %s67
  $region1: #{tpu_custom_call.1} parent=0
    #allocation6 [shape = 'u8[4096]{0}', space=vmem, size = 0x1000, scoped, tag = 'output window, operand 1, single buffered']
    #allocation7 [shape = 's32[2]{0}', space=sflag, size = 0x8, scoped, tag = 'scoped memory for tpu_custom_call.1']
    %71 = vsyncpa [#allocation7], 0
    loop: start=0, step=1, limit=6
    $region2: #{tpu_custom_call.1} parent=1 // loop_pre_header
      _
    $region3: #{tpu_custom_call.1} parent=1 // loop_header
      %s73 = sphi 0, %s77
      %p74 = scmp.ge.s32.totalorder %s73, 6
      %s81 = sphi 0, %s81
      %s83 = sphi 0, %s81
      %s84 = sphi 0, %s83
      %s98 = sphi 0, %s84
      %s102 = sphi 0, %s102
      %s104 = sphi 0, %s102
      %s105 = sphi 0, %s104
      %s119 = sphi 0, %s105
      %s123 = sphi 0, %s123
      %s125 = sphi 0, %s123
      %s126 = sphi 0, %s125
      %s140 = sphi 0, %s126
      %s144 = sphi 0, %s144
      %s146 = sphi 0, %s144
      %s147 = sphi 0, %s146
      %s161 = sphi 0, %s147
      %s165 = sphi 0, %s165
      %s167 = sphi 0, %s165
      %s168 = sphi 0, %s167
      %s182 = sphi 0, %s168
      %s186 = sphi 0, %s186
      %s188 = sphi 0, %s186
      %s189 = sphi 0, %s188
      %s203 = sphi 0, %s189
      %s207 = sphi 0, %s207
      %s209 = sphi 0, %s207
      %s210 = sphi 0, %s209
      %s224 = sphi 0, %s210
      %s228 = sphi 0, %s228
      %s230 = sphi 0, %s228
      %s231 = sphi 0, %s230
      %s245 = sphi 0, %s231
      %s249 = sphi 0, %s249
      %s251 = sphi 0, %s249
      %s252 = sphi 0, %s251
      %s266 = sphi 0, %s252
      %s270 = sphi 0, %s270
      %s272 = sphi 0, %s270
      %s273 = sphi 0, %s272
      %s287 = sphi 0, %s273
      %s291 = sphi 0, %s291
      %s293 = sphi 0, %s291
      %s294 = sphi 0, %s293
      %s308 = sphi 0, %s294
      %s312 = sphi 0, %s312
      %s314 = sphi 0, %s312
      %s315 = sphi 0, %s314
      %s329 = sphi 0, %s315
      %s333 = sphi 0, %s333
      %s335 = sphi 0, %s333
      %s336 = sphi 0, %s335
      %s350 = sphi 0, %s336
      %s354 = sphi 0, %s354
      %s356 = sphi 0, %s354
      %s357 = sphi 0, %s356
      %s371 = sphi 0, %s357
      %s375 = sphi 0, %s375
      %s377 = sphi 0, %s375
      %s378 = sphi 0, %s377
      %s392 = sphi 0, %s378
      %s396 = sphi 0, %s396
      %s398 = sphi 0, %s396
      %s399 = sphi 0, %s398
      %s413 = sphi 0, %s399
      %s417 = sphi 0, %s417
      %s419 = sphi 0, %s417
      %s420 = sphi 0, %s419
      %s434 = sphi 0, %s420
      %s438 = sphi 0, %s438
      %s440 = sphi 0, %s438
      %s441 = sphi 0, %s440
      %s455 = sphi 0, %s441
      %s459 = sphi 0, %s459
      %s461 = sphi 0, %s459
      %s462 = sphi 0, %s461
      %s476 = sphi 0, %s462
      %s480 = sphi 0, %s480
      %s482 = sphi 0, %s480
      %s483 = sphi 0, %s482
      %s497 = sphi 0, %s483
      %s501 = sphi 0, %s501
      %s503 = sphi 0, %s501
      %s504 = sphi 0, %s503
      %s518 = sphi 0, %s504
      %s522 = sphi 0, %s522
      %s524 = sphi 0, %s522
      %s525 = sphi 0, %s524
      %s539 = sphi 0, %s525
      %s543 = sphi 0, %s543
      %s545 = sphi 0, %s543
      %s546 = sphi 0, %s545
      %s560 = sphi 0, %s546
      %s564 = sphi 0, %s564
      %s566 = sphi 0, %s564
      %s567 = sphi 0, %s566
      %s581 = sphi 0, %s567
      %s585 = sphi 0, %s585
      %s587 = sphi 0, %s585
      %s588 = sphi 0, %s587
      %s602 = sphi 0, %s588
      %s606 = sphi 0, %s606
      %s608 = sphi 0, %s606
      %s609 = sphi 0, %s608
      %s623 = sphi 0, %s609
      %s627 = sphi 0, %s627
      %s629 = sphi 0, %s627
      %s630 = sphi 0, %s629
      %s644 = sphi 0, %s630
      %s648 = sphi 0, %s648
      %s650 = sphi 0, %s648
      %s651 = sphi 0, %s650
      %s665 = sphi 0, %s651
      %s669 = sphi 0, %s669
      %s671 = sphi 0, %s669
      %s672 = sphi 0, %s671
      %s686 = sphi 0, %s672
      %s690 = sphi 0, %s690
      %s692 = sphi 0, %s690
      %s693 = sphi 0, %s692
      %s707 = sphi 0, %s693
      %s711 = sphi 0, %s711
      %s713 = sphi 0, %s711
      %s714 = sphi 0, %s713
      %s728 = sphi 0, %s714
      %s734 = sphi 0, %s736
      %s737 = sphi 0, %s734
      %s738 = sphi 0, %s737
      %s754 = sphi 0, %s738
      %s758 = sphi 0, %s758
      %s760 = sphi 0, %s758
      %s761 = sphi 0, %s760
      %s775 = sphi 0, %s761
    $region4: #{tpu_custom_call.1} parent=1 // loop_header_branch
      %76 = sbr.rel (%p74) target = $region8
    $region5: #{tpu_custom_call.1} parent=1 // loop_body
      %s78 = ssub.s32 %s73, 1
      %s79 = ssub.s32 %s73, 2
      %s80 = sadd.s32 %s73, 1
      %s82 = sadd.s32 %s81, 1
      %p85 = scmp.eq.s32.totalorder %s73, 3
      %p86 = scmp.ne.s32.totalorder %s81, %s83
      %p87 = scmp.eq.s32.totalorder %s73, 0
      %p88 = por %p86, %p87
      %p89 = scmp.ne.s32.totalorder %s81, %s83
      %p90 = scmp.eq.s32.totalorder %s78, 3
      %p91 = por %p89, %p90
      %p92 = scmp.ne.s32.totalorder %s83, %s84
      %p93 = scmp.eq.s32.totalorder %s78, 0
      %p94 = por %p92, %p93
      %p95 = scmp.ne.s32.totalorder %s83, %s84
      %p96 = scmp.eq.s32.totalorder %s79, 3
      %p97 = por %p95, %p96
      %p99 = scmp.ne.s32.totalorder %s84, %s98
      %p100 = scmp.eq.s32.totalorder %s79, 0
      %p101 = por %p99, %p100
      %s103 = sadd.s32 %s102, 1
      %p106 = scmp.eq.s32.totalorder %s73, 3
      %p107 = scmp.ne.s32.totalorder %s102, %s104
      %p108 = scmp.eq.s32.totalorder %s73, 0
      %p109 = por %p107, %p108
      %p110 = scmp.ne.s32.totalorder %s102, %s104
      %p111 = scmp.eq.s32.totalorder %s78, 3
      %p112 = por %p110, %p111
      %p113 = scmp.ne.s32.totalorder %s104, %s105
      %p114 = scmp.eq.s32.totalorder %s78, 0
      %p115 = por %p113, %p114
      %p116 = scmp.ne.s32.totalorder %s104, %s105
      %p117 = scmp.eq.s32.totalorder %s79, 3
      %p118 = por %p116, %p117
      %p120 = scmp.ne.s32.totalorder %s105, %s119
      %p121 = scmp.eq.s32.totalorder %s79, 0
      %p122 = por %p120, %p121
      %s124 = sadd.s32 %s123, 1
      %p127 = scmp.eq.s32.totalorder %s73, 3
      %p128 = scmp.ne.s32.totalorder %s123, %s125
      %p129 = scmp.eq.s32.totalorder %s73, 0
      %p130 = por %p128, %p129
      %p131 = scmp.ne.s32.totalorder %s123, %s125
      %p132 = scmp.eq.s32.totalorder %s78, 3
      %p133 = por %p131, %p132
      %p134 = scmp.ne.s32.totalorder %s125, %s126
      %p135 = scmp.eq.s32.totalorder %s78, 0
      %p136 = por %p134, %p135
      %p137 = scmp.ne.s32.totalorder %s125, %s126
      %p138 = scmp.eq.s32.totalorder %s79, 3
      %p139 = por %p137, %p138
      %p141 = scmp.ne.s32.totalorder %s126, %s140
      %p142 = scmp.eq.s32.totalorder %s79, 0
      %p143 = por %p141, %p142
      %s145 = sadd.s32 %s144, 1
      %p148 = scmp.eq.s32.totalorder %s73, 3
      %p149 = scmp.ne.s32.totalorder %s144, %s146
      %p150 = scmp.eq.s32.totalorder %s73, 0
      %p151 = por %p149, %p150
      %p152 = scmp.ne.s32.totalorder %s144, %s146
      %p153 = scmp.eq.s32.totalorder %s78, 3
      %p154 = por %p152, %p153
      %p155 = scmp.ne.s32.totalorder %s146, %s147
      %p156 = scmp.eq.s32.totalorder %s78, 0
      %p157 = por %p155, %p156
      %p158 = scmp.ne.s32.totalorder %s146, %s147
      %p159 = scmp.eq.s32.totalorder %s79, 3
      %p160 = por %p158, %p159
      %p162 = scmp.ne.s32.totalorder %s147, %s161
      %p163 = scmp.eq.s32.totalorder %s79, 0
      %p164 = por %p162, %p163
      %s166 = sadd.s32 %s165, 1
      %p169 = scmp.eq.s32.totalorder %s73, 3
      %p170 = scmp.ne.s32.totalorder %s165, %s167
      %p171 = scmp.eq.s32.totalorder %s73, 0
      %p172 = por %p170, %p171
      %p173 = scmp.ne.s32.totalorder %s165, %s167
      %p174 = scmp.eq.s32.totalorder %s78, 3
      %p175 = por %p173, %p174
      %p176 = scmp.ne.s32.totalorder %s167, %s168
      %p177 = scmp.eq.s32.totalorder %s78, 0
      %p178 = por %p176, %p177
      %p179 = scmp.ne.s32.totalorder %s167, %s168
      %p180 = scmp.eq.s32.totalorder %s79, 3
      %p181 = por %p179, %p180
      %p183 = scmp.ne.s32.totalorder %s168, %s182
      %p184 = scmp.eq.s32.totalorder %s79, 0
      %p185 = por %p183, %p184
      %s187 = sadd.s32 %s186, 1
      %p190 = scmp.eq.s32.totalorder %s73, 3
      %p191 = scmp.ne.s32.totalorder %s186, %s188
      %p192 = scmp.eq.s32.totalorder %s73, 0
      %p193 = por %p191, %p192
      %p194 = scmp.ne.s32.totalorder %s186, %s188
      %p195 = scmp.eq.s32.totalorder %s78, 3
      %p196 = por %p194, %p195
      %p197 = scmp.ne.s32.totalorder %s188, %s189
      %p198 = scmp.eq.s32.totalorder %s78, 0
      %p199 = por %p197, %p198
      %p200 = scmp.ne.s32.totalorder %s188, %s189
      %p201 = scmp.eq.s32.totalorder %s79, 3
      %p202 = por %p200, %p201
      %p204 = scmp.ne.s32.totalorder %s189, %s203
      %p205 = scmp.eq.s32.totalorder %s79, 0
      %p206 = por %p204, %p205
      %s208 = sadd.s32 %s207, 1
      %p211 = scmp.eq.s32.totalorder %s73, 3
      %p212 = scmp.ne.s32.totalorder %s207, %s209
      %p213 = scmp.eq.s32.totalorder %s73, 0
      %p214 = por %p212, %p213
      %p215 = scmp.ne.s32.totalorder %s207, %s209
      %p216 = scmp.eq.s32.totalorder %s78, 3
      %p217 = por %p215, %p216
      %p218 = scmp.ne.s32.totalorder %s209, %s210
      %p219 = scmp.eq.s32.totalorder %s78, 0
      %p220 = por %p218, %p219
      %p221 = scmp.ne.s32.totalorder %s209, %s210
      %p222 = scmp.eq.s32.totalorder %s79, 3
      %p223 = por %p221, %p222
      %p225 = scmp.ne.s32.totalorder %s210, %s224
      %p226 = scmp.eq.s32.totalorder %s79, 0
      %p227 = por %p225, %p226
      %s229 = sadd.s32 %s228, 1
      %p232 = scmp.eq.s32.totalorder %s73, 3
      %p233 = scmp.ne.s32.totalorder %s228, %s230
      %p234 = scmp.eq.s32.totalorder %s73, 0
      %p235 = por %p233, %p234
      %p236 = scmp.ne.s32.totalorder %s228, %s230
      %p237 = scmp.eq.s32.totalorder %s78, 3
      %p238 = por %p236, %p237
      %p239 = scmp.ne.s32.totalorder %s230, %s231
      %p240 = scmp.eq.s32.totalorder %s78, 0
      %p241 = por %p239, %p240
      %p242 = scmp.ne.s32.totalorder %s230, %s231
      %p243 = scmp.eq.s32.totalorder %s79, 3
      %p244 = por %p242, %p243
      %p246 = scmp.ne.s32.totalorder %s231, %s245
      %p247 = scmp.eq.s32.totalorder %s79, 0
      %p248 = por %p246, %p247
      %s250 = sadd.s32 %s249, 1
      %p253 = scmp.eq.s32.totalorder %s73, 3
      %p254 = scmp.ne.s32.totalorder %s249, %s251
      %p255 = scmp.eq.s32.totalorder %s73, 0
      %p256 = por %p254, %p255
      %p257 = scmp.ne.s32.totalorder %s249, %s251
      %p258 = scmp.eq.s32.totalorder %s78, 3
      %p259 = por %p257, %p258
      %p260 = scmp.ne.s32.totalorder %s251, %s252
      %p261 = scmp.eq.s32.totalorder %s78, 0
      %p262 = por %p260, %p261
      %p263 = scmp.ne.s32.totalorder %s251, %s252
      %p264 = scmp.eq.s32.totalorder %s79, 3
      %p265 = por %p263, %p264
      %p267 = scmp.ne.s32.totalorder %s252, %s266
      %p268 = scmp.eq.s32.totalorder %s79, 0
      %p269 = por %p267, %p268
      %s271 = sadd.s32 %s270, 1
      %p274 = scmp.eq.s32.totalorder %s73, 3
      %p275 = scmp.ne.s32.totalorder %s270, %s272
      %p276 = scmp.eq.s32.totalorder %s73, 0
      %p277 = por %p275, %p276
      %p278 = scmp.ne.s32.totalorder %s270, %s272
      %p279 = scmp.eq.s32.totalorder %s78, 3
      %p280 = por %p278, %p279
      %p281 = scmp.ne.s32.totalorder %s272, %s273
      %p282 = scmp.eq.s32.totalorder %s78, 0
      %p283 = por %p281, %p282
      %p284 = scmp.ne.s32.totalorder %s272, %s273
      %p285 = scmp.eq.s32.totalorder %s79, 3
      %p286 = por %p284, %p285
      %p288 = scmp.ne.s32.totalorder %s273, %s287
      %p289 = scmp.eq.s32.totalorder %s79, 0
      %p290 = por %p288, %p289
      %s292 = sadd.s32 %s291, 1
      %p295 = scmp.eq.s32.totalorder %s73, 3
      %p296 = scmp.ne.s32.totalorder %s291, %s293
      %p297 = scmp.eq.s32.totalorder %s73, 0
      %p298 = por %p296, %p297
      %p299 = scmp.ne.s32.totalorder %s291, %s293
      %p300 = scmp.eq.s32.totalorder %s78, 3
      %p301 = por %p299, %p300
      %p302 = scmp.ne.s32.totalorder %s293, %s294
      %p303 = scmp.eq.s32.totalorder %s78, 0
      %p304 = por %p302, %p303
      %p305 = scmp.ne.s32.totalorder %s293, %s294
      %p306 = scmp.eq.s32.totalorder %s79, 3
      %p307 = por %p305, %p306
      %p309 = scmp.ne.s32.totalorder %s294, %s308
      %p310 = scmp.eq.s32.totalorder %s79, 0
      %p311 = por %p309, %p310
      %s313 = sadd.s32 %s312, 1
      %p316 = scmp.eq.s32.totalorder %s73, 3
      %p317 = scmp.ne.s32.totalorder %s312, %s314
      %p318 = scmp.eq.s32.totalorder %s73, 0
      %p319 = por %p317, %p318
      %p320 = scmp.ne.s32.totalorder %s312, %s314
      %p321 = scmp.eq.s32.totalorder %s78, 3
      %p322 = por %p320, %p321
      %p323 = scmp.ne.s32.totalorder %s314, %s315
      %p324 = scmp.eq.s32.totalorder %s78, 0
      %p325 = por %p323, %p324
      %p326 = scmp.ne.s32.totalorder %s314, %s315
      %p327 = scmp.eq.s32.totalorder %s79, 3
      %p328 = por %p326, %p327
      %p330 = scmp.ne.s32.totalorder %s315, %s329
      %p331 = scmp.eq.s32.totalorder %s79, 0
      %p332 = por %p330, %p331
      %s334 = sadd.s32 %s333, 1
      %p337 = scmp.eq.s32.totalorder %s73, 3
      %p338 = scmp.ne.s32.totalorder %s333, %s335
      %p339 = scmp.eq.s32.totalorder %s73, 0
      %p340 = por %p338, %p339
      %p341 = scmp.ne.s32.totalorder %s333, %s335
      %p342 = scmp.eq.s32.totalorder %s78, 3
      %p343 = por %p341, %p342
      %p344 = scmp.ne.s32.totalorder %s335, %s336
      %p345 = scmp.eq.s32.totalorder %s78, 0
      %p346 = por %p344, %p345
      %p347 = scmp.ne.s32.totalorder %s335, %s336
      %p348 = scmp.eq.s32.totalorder %s79, 3
      %p349 = por %p347, %p348
      %p351 = scmp.ne.s32.totalorder %s336, %s350
      %p352 = scmp.eq.s32.totalorder %s79, 0
      %p353 = por %p351, %p352
      %s355 = sadd.s32 %s354, 1
      %p358 = scmp.eq.s32.totalorder %s73, 3
      %p359 = scmp.ne.s32.totalorder %s354, %s356
      %p360 = scmp.eq.s32.totalorder %s73, 0
      %p361 = por %p359, %p360
      %p362 = scmp.ne.s32.totalorder %s354, %s356
      %p363 = scmp.eq.s32.totalorder %s78, 3
      %p364 = por %p362, %p363
      %p365 = scmp.ne.s32.totalorder %s356, %s357
      %p366 = scmp.eq.s32.totalorder %s78, 0
      %p367 = por %p365, %p366
      %p368 = scmp.ne.s32.totalorder %s356, %s357
      %p369 = scmp.eq.s32.totalorder %s79, 3
      %p370 = por %p368, %p369
      %p372 = scmp.ne.s32.totalorder %s357, %s371
      %p373 = scmp.eq.s32.totalorder %s79, 0
      %p374 = por %p372, %p373
      %s376 = sadd.s32 %s375, 1
      %p379 = scmp.eq.s32.totalorder %s73, 3
      %p380 = scmp.ne.s32.totalorder %s375, %s377
      %p381 = scmp.eq.s32.totalorder %s73, 0
      %p382 = por %p380, %p381
      %p383 = scmp.ne.s32.totalorder %s375, %s377
      %p384 = scmp.eq.s32.totalorder %s78, 3
      %p385 = por %p383, %p384
      %p386 = scmp.ne.s32.totalorder %s377, %s378
      %p387 = scmp.eq.s32.totalorder %s78, 0
      %p388 = por %p386, %p387
      %p389 = scmp.ne.s32.totalorder %s377, %s378
      %p390 = scmp.eq.s32.totalorder %s79, 3
      %p391 = por %p389, %p390
      %p393 = scmp.ne.s32.totalorder %s378, %s392
      %p394 = scmp.eq.s32.totalorder %s79, 0
      %p395 = por %p393, %p394
      %s397 = sadd.s32 %s396, 1
      %p400 = scmp.eq.s32.totalorder %s73, 3
      %p401 = scmp.ne.s32.totalorder %s396, %s398
      %p402 = scmp.eq.s32.totalorder %s73, 0
      %p403 = por %p401, %p402
      %p404 = scmp.ne.s32.totalorder %s396, %s398
      %p405 = scmp.eq.s32.totalorder %s78, 3
      %p406 = por %p404, %p405
      %p407 = scmp.ne.s32.totalorder %s398, %s399
      %p408 = scmp.eq.s32.totalorder %s78, 0
      %p409 = por %p407, %p408
      %p410 = scmp.ne.s32.totalorder %s398, %s399
      %p411 = scmp.eq.s32.totalorder %s79, 3
      %p412 = por %p410, %p411
      %p414 = scmp.ne.s32.totalorder %s399, %s413
      %p415 = scmp.eq.s32.totalorder %s79, 0
      %p416 = por %p414, %p415
      %s418 = sadd.s32 %s417, 1
      %p421 = scmp.eq.s32.totalorder %s73, 3
      %p422 = scmp.ne.s32.totalorder %s417, %s419
      %p423 = scmp.eq.s32.totalorder %s73, 0
      %p424 = por %p422, %p423
      %p425 = scmp.ne.s32.totalorder %s417, %s419
      %p426 = scmp.eq.s32.totalorder %s78, 3
      %p427 = por %p425, %p426
      %p428 = scmp.ne.s32.totalorder %s419, %s420
      %p429 = scmp.eq.s32.totalorder %s78, 0
      %p430 = por %p428, %p429
      %p431 = scmp.ne.s32.totalorder %s419, %s420
      %p432 = scmp.eq.s32.totalorder %s79, 3
      %p433 = por %p431, %p432
      %p435 = scmp.ne.s32.totalorder %s420, %s434
      %p436 = scmp.eq.s32.totalorder %s79, 0
      %p437 = por %p435, %p436
      %s439 = sadd.s32 %s438, 1
      %p442 = scmp.eq.s32.totalorder %s73, 3
      %p443 = scmp.ne.s32.totalorder %s438, %s440
      %p444 = scmp.eq.s32.totalorder %s73, 0
      %p445 = por %p443, %p444
      %p446 = scmp.ne.s32.totalorder %s438, %s440
      %p447 = scmp.eq.s32.totalorder %s78, 3
      %p448 = por %p446, %p447
      %p449 = scmp.ne.s32.totalorder %s440, %s441
      %p450 = scmp.eq.s32.totalorder %s78, 0
      %p451 = por %p449, %p450
      %p452 = scmp.ne.s32.totalorder %s440, %s441
      %p453 = scmp.eq.s32.totalorder %s79, 3
      %p454 = por %p452, %p453
      %p456 = scmp.ne.s32.totalorder %s441, %s455
      %p457 = scmp.eq.s32.totalorder %s79, 0
      %p458 = por %p456, %p457
      %s460 = sadd.s32 %s459, 1
      %p463 = scmp.eq.s32.totalorder %s73, 3
      %p464 = scmp.ne.s32.totalorder %s459, %s461
      %p465 = scmp.eq.s32.totalorder %s73, 0
      %p466 = por %p464, %p465
      %p467 = scmp.ne.s32.totalorder %s459, %s461
      %p468 = scmp.eq.s32.totalorder %s78, 3
      %p469 = por %p467, %p468
      %p470 = scmp.ne.s32.totalorder %s461, %s462
      %p471 = scmp.eq.s32.totalorder %s78, 0
      %p472 = por %p470, %p471
      %p473 = scmp.ne.s32.totalorder %s461, %s462
      %p474 = scmp.eq.s32.totalorder %s79, 3
      %p475 = por %p473, %p474
      %p477 = scmp.ne.s32.totalorder %s462, %s476
      %p478 = scmp.eq.s32.totalorder %s79, 0
      %p479 = por %p477, %p478
      %s481 = sadd.s32 %s480, 1
      %p484 = scmp.eq.s32.totalorder %s73, 3
      %p485 = scmp.ne.s32.totalorder %s480, %s482
      %p486 = scmp.eq.s32.totalorder %s73, 0
      %p487 = por %p485, %p486
      %p488 = scmp.ne.s32.totalorder %s480, %s482
      %p489 = scmp.eq.s32.totalorder %s78, 3
      %p490 = por %p488, %p489
      %p491 = scmp.ne.s32.totalorder %s482, %s483
      %p492 = scmp.eq.s32.totalorder %s78, 0
      %p493 = por %p491, %p492
      %p494 = scmp.ne.s32.totalorder %s482, %s483
      %p495 = scmp.eq.s32.totalorder %s79, 3
      %p496 = por %p494, %p495
      %p498 = scmp.ne.s32.totalorder %s483, %s497
      %p499 = scmp.eq.s32.totalorder %s79, 0
      %p500 = por %p498, %p499
      %s502 = sadd.s32 %s501, 1
      %p505 = scmp.eq.s32.totalorder %s73, 3
      %p506 = scmp.ne.s32.totalorder %s501, %s503
      %p507 = scmp.eq.s32.totalorder %s73, 0
      %p508 = por %p506, %p507
      %p509 = scmp.ne.s32.totalorder %s501, %s503
      %p510 = scmp.eq.s32.totalorder %s78, 3
      %p511 = por %p509, %p510
      %p512 = scmp.ne.s32.totalorder %s503, %s504
      %p513 = scmp.eq.s32.totalorder %s78, 0
      %p514 = por %p512, %p513
      %p515 = scmp.ne.s32.totalorder %s503, %s504
      %p516 = scmp.eq.s32.totalorder %s79, 3
      %p517 = por %p515, %p516
      %p519 = scmp.ne.s32.totalorder %s504, %s518
      %p520 = scmp.eq.s32.totalorder %s79, 0
      %p521 = por %p519, %p520
      %s523 = sadd.s32 %s522, 1
      %p526 = scmp.eq.s32.totalorder %s73, 3
      %p527 = scmp.ne.s32.totalorder %s522, %s524
      %p528 = scmp.eq.s32.totalorder %s73, 0
      %p529 = por %p527, %p528
      %p530 = scmp.ne.s32.totalorder %s522, %s524
      %p531 = scmp.eq.s32.totalorder %s78, 3
      %p532 = por %p530, %p531
      %p533 = scmp.ne.s32.totalorder %s524, %s525
      %p534 = scmp.eq.s32.totalorder %s78, 0
      %p535 = por %p533, %p534
      %p536 = scmp.ne.s32.totalorder %s524, %s525
      %p537 = scmp.eq.s32.totalorder %s79, 3
      %p538 = por %p536, %p537
      %p540 = scmp.ne.s32.totalorder %s525, %s539
      %p541 = scmp.eq.s32.totalorder %s79, 0
      %p542 = por %p540, %p541
      %s544 = sadd.s32 %s543, 1
      %p547 = scmp.eq.s32.totalorder %s73, 3
      %p548 = scmp.ne.s32.totalorder %s543, %s545
      %p549 = scmp.eq.s32.totalorder %s73, 0
      %p550 = por %p548, %p549
      %p551 = scmp.ne.s32.totalorder %s543, %s545
      %p552 = scmp.eq.s32.totalorder %s78, 3
      %p553 = por %p551, %p552
      %p554 = scmp.ne.s32.totalorder %s545, %s546
      %p555 = scmp.eq.s32.totalorder %s78, 0
      %p556 = por %p554, %p555
      %p557 = scmp.ne.s32.totalorder %s545, %s546
      %p558 = scmp.eq.s32.totalorder %s79, 3
      %p559 = por %p557, %p558
      %p561 = scmp.ne.s32.totalorder %s546, %s560
      %p562 = scmp.eq.s32.totalorder %s79, 0
      %p563 = por %p561, %p562
      %s565 = sadd.s32 %s564, 1
      %p568 = scmp.eq.s32.totalorder %s73, 3
      %p569 = scmp.ne.s32.totalorder %s564, %s566
      %p570 = scmp.eq.s32.totalorder %s73, 0
      %p571 = por %p569, %p570
      %p572 = scmp.ne.s32.totalorder %s564, %s566
      %p573 = scmp.eq.s32.totalorder %s78, 3
      %p574 = por %p572, %p573
      %p575 = scmp.ne.s32.totalorder %s566, %s567
      %p576 = scmp.eq.s32.totalorder %s78, 0
      %p577 = por %p575, %p576
      %p578 = scmp.ne.s32.totalorder %s566, %s567
      %p579 = scmp.eq.s32.totalorder %s79, 3
      %p580 = por %p578, %p579
      %p582 = scmp.ne.s32.totalorder %s567, %s581
      %p583 = scmp.eq.s32.totalorder %s79, 0
      %p584 = por %p582, %p583
      %s586 = sadd.s32 %s585, 1
      %p589 = scmp.eq.s32.totalorder %s73, 3
      %p590 = scmp.ne.s32.totalorder %s585, %s587
      %p591 = scmp.eq.s32.totalorder %s73, 0
      %p592 = por %p590, %p591
      %p593 = scmp.ne.s32.totalorder %s585, %s587
      %p594 = scmp.eq.s32.totalorder %s78, 3
      %p595 = por %p593, %p594
      %p596 = scmp.ne.s32.totalorder %s587, %s588
      %p597 = scmp.eq.s32.totalorder %s78, 0
      %p598 = por %p596, %p597
      %p599 = scmp.ne.s32.totalorder %s587, %s588
      %p600 = scmp.eq.s32.totalorder %s79, 3
      %p601 = por %p599, %p600
      %p603 = scmp.ne.s32.totalorder %s588, %s602
      %p604 = scmp.eq.s32.totalorder %s79, 0
      %p605 = por %p603, %p604
      %s607 = sadd.s32 %s606, 1
      %p610 = scmp.eq.s32.totalorder %s73, 3
      %p611 = scmp.ne.s32.totalorder %s606, %s608
      %p612 = scmp.eq.s32.totalorder %s73, 0
      %p613 = por %p611, %p612
      %p614 = scmp.ne.s32.totalorder %s606, %s608
      %p615 = scmp.eq.s32.totalorder %s78, 3
      %p616 = por %p614, %p615
      %p617 = scmp.ne.s32.totalorder %s608, %s609
      %p618 = scmp.eq.s32.totalorder %s78, 0
      %p619 = por %p617, %p618
      %p620 = scmp.ne.s32.totalorder %s608, %s609
      %p621 = scmp.eq.s32.totalorder %s79, 3
      %p622 = por %p620, %p621
      %p624 = scmp.ne.s32.totalorder %s609, %s623
      %p625 = scmp.eq.s32.totalorder %s79, 0
      %p626 = por %p624, %p625
      %s628 = sadd.s32 %s627, 1
      %p631 = scmp.eq.s32.totalorder %s73, 3
      %p632 = scmp.ne.s32.totalorder %s627, %s629
      %p633 = scmp.eq.s32.totalorder %s73, 0
      %p634 = por %p632, %p633
      %p635 = scmp.ne.s32.totalorder %s627, %s629
      %p636 = scmp.eq.s32.totalorder %s78, 3
      %p637 = por %p635, %p636
      %p638 = scmp.ne.s32.totalorder %s629, %s630
      %p639 = scmp.eq.s32.totalorder %s78, 0
      %p640 = por %p638, %p639
      %p641 = scmp.ne.s32.totalorder %s629, %s630
      %p642 = scmp.eq.s32.totalorder %s79, 3
      %p643 = por %p641, %p642
      %p645 = scmp.ne.s32.totalorder %s630, %s644
      %p646 = scmp.eq.s32.totalorder %s79, 0
      %p647 = por %p645, %p646
      %s649 = sadd.s32 %s648, 1
      %p652 = scmp.eq.s32.totalorder %s73, 3
      %p653 = scmp.ne.s32.totalorder %s648, %s650
      %p654 = scmp.eq.s32.totalorder %s73, 0
      %p655 = por %p653, %p654
      %p656 = scmp.ne.s32.totalorder %s648, %s650
      %p657 = scmp.eq.s32.totalorder %s78, 3
      %p658 = por %p656, %p657
      %p659 = scmp.ne.s32.totalorder %s650, %s651
      %p660 = scmp.eq.s32.totalorder %s78, 0
      %p661 = por %p659, %p660
      %p662 = scmp.ne.s32.totalorder %s650, %s651
      %p663 = scmp.eq.s32.totalorder %s79, 3
      %p664 = por %p662, %p663
      %p666 = scmp.ne.s32.totalorder %s651, %s665
      %p667 = scmp.eq.s32.totalorder %s79, 0
      %p668 = por %p666, %p667
      %s670 = sadd.s32 %s669, 1
      %p673 = scmp.eq.s32.totalorder %s73, 3
      %p674 = scmp.ne.s32.totalorder %s669, %s671
      %p675 = scmp.eq.s32.totalorder %s73, 0
      %p676 = por %p674, %p675
      %p677 = scmp.ne.s32.totalorder %s669, %s671
      %p678 = scmp.eq.s32.totalorder %s78, 3
      %p679 = por %p677, %p678
      %p680 = scmp.ne.s32.totalorder %s671, %s672
      %p681 = scmp.eq.s32.totalorder %s78, 0
      %p682 = por %p680, %p681
      %p683 = scmp.ne.s32.totalorder %s671, %s672
      %p684 = scmp.eq.s32.totalorder %s79, 3
      %p685 = por %p683, %p684
      %p687 = scmp.ne.s32.totalorder %s672, %s686
      %p688 = scmp.eq.s32.totalorder %s79, 0
      %p689 = por %p687, %p688
      %s691 = sadd.s32 %s690, 1
      %p694 = scmp.eq.s32.totalorder %s73, 3
      %p695 = scmp.ne.s32.totalorder %s690, %s692
      %p696 = scmp.eq.s32.totalorder %s73, 0
      %p697 = por %p695, %p696
      %p698 = scmp.ne.s32.totalorder %s690, %s692
      %p699 = scmp.eq.s32.totalorder %s78, 3
      %p700 = por %p698, %p699
      %p701 = scmp.ne.s32.totalorder %s692, %s693
      %p702 = scmp.eq.s32.totalorder %s78, 0
      %p703 = por %p701, %p702
      %p704 = scmp.ne.s32.totalorder %s692, %s693
      %p705 = scmp.eq.s32.totalorder %s79, 3
      %p706 = por %p704, %p705
      %p708 = scmp.ne.s32.totalorder %s693, %s707
      %p709 = scmp.eq.s32.totalorder %s79, 0
      %p710 = por %p708, %p709
      %s712 = sadd.s32 %s711, 1
      %p715 = scmp.eq.s32.totalorder %s73, 3
      %p716 = scmp.ne.s32.totalorder %s711, %s713
      %p717 = scmp.eq.s32.totalorder %s73, 0
      %p718 = por %p716, %p717
      %p719 = scmp.ne.s32.totalorder %s711, %s713
      %p720 = scmp.eq.s32.totalorder %s78, 3
      %p721 = por %p719, %p720
      %p722 = scmp.ne.s32.totalorder %s713, %s714
      %p723 = scmp.eq.s32.totalorder %s78, 0
      %p724 = por %p722, %p723
      %p725 = scmp.ne.s32.totalorder %s713, %s714
      %p726 = scmp.eq.s32.totalorder %s79, 3
      %p727 = por %p725, %p726
      %p729 = scmp.ne.s32.totalorder %s714, %s728
      %p730 = scmp.eq.s32.totalorder %s79, 0
      %p731 = por %p729, %p730
      %s732 = ssub.s32 %s73, %s80
      %p733 = scmp.eq.s32.totalorder %s732, 0
      %s735 = sadd.s32 %s734, 1
      %s736 = scalar_select %p733, %s734, %s735
      %p739 = pneg %p733
      %p740 = scmp.eq.s32.totalorder %s73, 3
      %p741 = por %p739, %p740
      %p742 = scmp.ne.s32.totalorder %s734, %s737
      %p743 = scmp.eq.s32.totalorder %s73, 0
      %p744 = por %p742, %p743
      %p745 = scmp.ne.s32.totalorder %s734, %s737
      %p746 = scmp.eq.s32.totalorder %s78, 3
      %p747 = por %p745, %p746
      %p748 = scmp.ne.s32.totalorder %s737, %s738
      %p749 = scmp.eq.s32.totalorder %s78, 0
      %p750 = por %p748, %p749
      %p751 = scmp.ne.s32.totalorder %s737, %s738
      %p752 = scmp.eq.s32.totalorder %s79, 3
      %p753 = por %p751, %p752
      %p755 = scmp.ne.s32.totalorder %s738, %s754
      %p756 = scmp.eq.s32.totalorder %s79, 0
      %p757 = por %p755, %p756
      %s759 = sadd.s32 %s758, 1
      %p762 = scmp.eq.s32.totalorder %s73, 3
      %p763 = scmp.ne.s32.totalorder %s758, %s760
      %p764 = scmp.eq.s32.totalorder %s73, 0
      %p765 = por %p763, %p764
      %p766 = scmp.ne.s32.totalorder %s758, %s760
      %p767 = scmp.eq.s32.totalorder %s78, 3
      %p768 = por %p766, %p767
      %p769 = scmp.ne.s32.totalorder %s760, %s761
      %p770 = scmp.eq.s32.totalorder %s78, 0
      %p771 = por %p769, %p770
      %p772 = scmp.ne.s32.totalorder %s760, %s761
      %p773 = scmp.eq.s32.totalorder %s79, 3
      %p774 = por %p772, %p773
      %p776 = scmp.ne.s32.totalorder %s761, %s775
      %p777 = scmp.eq.s32.totalorder %s79, 0
      %p778 = por %p776, %p777
      %p779 = scmp.le.s32.totalorder 1, %s73
      %p780 = scmp.lt.s32.totalorder %s73, 5
      %p781 = pnand %p779, %p780
      %p782 = pneg %p781
      // Predicated region
      $region9: #{tpu_custom_call.1} parent=5 // pred_check
        _
      $region10: #{tpu_custom_call.1} parent=5 // pred_check_branch
        %784 = sbr.rel (%p781) target = $region12
      $region11: #{tpu_custom_call.1} parent=5 // pred_region
        %s785 = ssub.s32 %s73, 1
        // Predicated region
        $region13: #{tpu_custom_call.1} parent=11 // pred_check
          %p786 = pneg %p94
        $region14: #{tpu_custom_call.1} parent=11 // pred_check_branch
          %788 = sbr.rel (%p786) target = $region16
        $region15: #{tpu_custom_call.1} parent=11 // pred_region
          _
        $region16: #{tpu_custom_call.1} parent=11 // pred_fallthru
          _
        // Predicated region
        $region17: #{tpu_custom_call.1} parent=11 // pred_check
          %p789 = pneg %p115
        $region18: #{tpu_custom_call.1} parent=11 // pred_check_branch
          %791 = sbr.rel (%p789) target = $region20
        $region19: #{tpu_custom_call.1} parent=11 // pred_region
          _
        $region20: #{tpu_custom_call.1} parent=11 // pred_fallthru
          _
        // Predicated region
        $region21: #{tpu_custom_call.1} parent=11 // pred_check
          %p792 = pneg %p136
        $region22: #{tpu_custom_call.1} parent=11 // pred_check_branch
          %794 = sbr.rel (%p792) target = $region24
        $region23: #{tpu_custom_call.1} parent=11 // pred_region
          _
        $region24: #{tpu_custom_call.1} parent=11 // pred_fallthru
          _
        // Predicated region
        $region25: #{tpu_custom_call.1} parent=11 // pred_check
          %p795 = pneg %p157
        $region26: #{tpu_custom_call.1} parent=11 // pred_check_branch
          %797 = sbr.rel (%p795) target = $region28
        $region27: #{tpu_custom_call.1} parent=11 // pred_region
          _
        $region28: #{tpu_custom_call.1} parent=11 // pred_fallthru
          _
        // Predicated region
        $region29: #{tpu_custom_call.1} parent=11 // pred_check
          %p798 = pneg %p178
        $region30: #{tpu_custom_call.1} parent=11 // pred_check_branch
          %800 = sbr.rel (%p798) target = $region32
        $region31: #{tpu_custom_call.1} parent=11 // pred_region
          _
        $region32: #{tpu_custom_call.1} parent=11 // pred_fallthru
          _
        // Predicated region
        $region33: #{tpu_custom_call.1} parent=11 // pred_check
          %p801 = pneg %p199
        $region34: #{tpu_custom_call.1} parent=11 // pred_check_branch
          %803 = sbr.rel (%p801) target = $region36
        $region35: #{tpu_custom_call.1} parent=11 // pred_region
          _
        $region36: #{tpu_custom_call.1} parent=11 // pred_fallthru
          _
        // Predicated region
        $region37: #{tpu_custom_call.1} parent=11 // pred_check
          %p804 = pneg %p220
        $region38: #{tpu_custom_call.1} parent=11 // pred_check_branch
          %806 = sbr.rel (%p804) target = $region40
        $region39: #{tpu_custom_call.1} parent=11 // pred_region
          _
        $region40: #{tpu_custom_call.1} parent=11 // pred_fallthru
          _
        // Predicated region
        $region41: #{tpu_custom_call.1} parent=11 // pred_check
          %p807 = pneg %p241
        $region42: #{tpu_custom_call.1} parent=11 // pred_check_branch
          %809 = sbr.rel (%p807) target = $region44
        $region43: #{tpu_custom_call.1} parent=11 // pred_region
          _
        $region44: #{tpu_custom_call.1} parent=11 // pred_fallthru
          _
        // Predicated region
        $region45: #{tpu_custom_call.1} parent=11 // pred_check
          %p810 = pneg %p262
        $region46: #{tpu_custom_call.1} parent=11 // pred_check_branch
          %812 = sbr.rel (%p810) target = $region48
        $region47: #{tpu_custom_call.1} parent=11 // pred_region
          _
        $region48: #{tpu_custom_call.1} parent=11 // pred_fallthru
          _
        // Predicated region
        $region49: #{tpu_custom_call.1} parent=11 // pred_check
          %p813 = pneg %p283
        $region50: #{tpu_custom_call.1} parent=11 // pred_check_branch
          %815 = sbr.rel (%p813) target = $region52
        $region51: #{tpu_custom_call.1} parent=11 // pred_region
          _
        $region52: #{tpu_custom_call.1} parent=11 // pred_fallthru
          _
        // Predicated region
        $region53: #{tpu_custom_call.1} parent=11 // pred_check
          %p816 = pneg %p304
        $region54: #{tpu_custom_call.1} parent=11 // pred_check_branch
          %818 = sbr.rel (%p816) target = $region56
        $region55: #{tpu_custom_call.1} parent=11 // pred_region
          _
        $region56: #{tpu_custom_call.1} parent=11 // pred_fallthru
          _
        // Predicated region
        $region57: #{tpu_custom_call.1} parent=11 // pred_check
          %p819 = pneg %p325
        $region58: #{tpu_custom_call.1} parent=11 // pred_check_branch
          %821 = sbr.rel (%p819) target = $region60
        $region59: #{tpu_custom_call.1} parent=11 // pred_region
          _
        $region60: #{tpu_custom_call.1} parent=11 // pred_fallthru
          _
        // Predicated region
        $region61: #{tpu_custom_call.1} parent=11 // pred_check
          %p822 = pneg %p346
        $region62: #{tpu_custom_call.1} parent=11 // pred_check_branch
          %824 = sbr.rel (%p822) target = $region64
        $region63: #{tpu_custom_call.1} parent=11 // pred_region
          _
        $region64: #{tpu_custom_call.1} parent=11 // pred_fallthru
          _
        // Predicated region
        $region65: #{tpu_custom_call.1} parent=11 // pred_check
          %p825 = pneg %p367
        $region66: #{tpu_custom_call.1} parent=11 // pred_check_branch
          %827 = sbr.rel (%p825) target = $region68
        $region67: #{tpu_custom_call.1} parent=11 // pred_region
          _
        $region68: #{tpu_custom_call.1} parent=11 // pred_fallthru
          _
        // Predicated region
        $region69: #{tpu_custom_call.1} parent=11 // pred_check
          %p828 = pneg %p388
        $region70: #{tpu_custom_call.1} parent=11 // pred_check_branch
          %830 = sbr.rel (%p828) target = $region72
        $region71: #{tpu_custom_call.1} parent=11 // pred_region
          _
        $region72: #{tpu_custom_call.1} parent=11 // pred_fallthru
          _
        // Predicated region
        $region73: #{tpu_custom_call.1} parent=11 // pred_check
          %p831 = pneg %p409
        $region74: #{tpu_custom_call.1} parent=11 // pred_check_branch
          %833 = sbr.rel (%p831) target = $region76
        $region75: #{tpu_custom_call.1} parent=11 // pred_region
          _
        $region76: #{tpu_custom_call.1} parent=11 // pred_fallthru
          _
        // Predicated region
        $region77: #{tpu_custom_call.1} parent=11 // pred_check
          %p834 = pneg %p430
        $region78: #{tpu_custom_call.1} parent=11 // pred_check_branch
          %836 = sbr.rel (%p834) target = $region80
        $region79: #{tpu_custom_call.1} parent=11 // pred_region
          _
        $region80: #{tpu_custom_call.1} parent=11 // pred_fallthru
          _
        // Predicated region
        $region81: #{tpu_custom_call.1} parent=11 // pred_check
          %p837 = pneg %p451
        $region82: #{tpu_custom_call.1} parent=11 // pred_check_branch
          %839 = sbr.rel (%p837) target = $region84
        $region83: #{tpu_custom_call.1} parent=11 // pred_region
          _
        $region84: #{tpu_custom_call.1} parent=11 // pred_fallthru
          _
        // Predicated region
        $region85: #{tpu_custom_call.1} parent=11 // pred_check
          %p840 = pneg %p472
        $region86: #{tpu_custom_call.1} parent=11 // pred_check_branch
          %842 = sbr.rel (%p840) target = $region88
        $region87: #{tpu_custom_call.1} parent=11 // pred_region
          _
        $region88: #{tpu_custom_call.1} parent=11 // pred_fallthru
          _
        // Predicated region
        $region89: #{tpu_custom_call.1} parent=11 // pred_check
          %p843 = pneg %p493
        $region90: #{tpu_custom_call.1} parent=11 // pred_check_branch
          %845 = sbr.rel (%p843) target = $region92
        $region91: #{tpu_custom_call.1} parent=11 // pred_region
          _
        $region92: #{tpu_custom_call.1} parent=11 // pred_fallthru
          _
        // Predicated region
        $region93: #{tpu_custom_call.1} parent=11 // pred_check
          %p846 = pneg %p514
        $region94: #{tpu_custom_call.1} parent=11 // pred_check_branch
          %848 = sbr.rel (%p846) target = $region96
        $region95: #{tpu_custom_call.1} parent=11 // pred_region
          _
        $region96: #{tpu_custom_call.1} parent=11 // pred_fallthru
          _
        // Predicated region
        $region97: #{tpu_custom_call.1} parent=11 // pred_check
          %p849 = pneg %p535
        $region98: #{tpu_custom_call.1} parent=11 // pred_check_branch
          %851 = sbr.rel (%p849) target = $region100
        $region99: #{tpu_custom_call.1} parent=11 // pred_region
          _
        $region100: #{tpu_custom_call.1} parent=11 // pred_fallthru
          _
        // Predicated region
        $region101: #{tpu_custom_call.1} parent=11 // pred_check
          %p852 = pneg %p556
        $region102: #{tpu_custom_call.1} parent=11 // pred_check_branch
          %854 = sbr.rel (%p852) target = $region104
        $region103: #{tpu_custom_call.1} parent=11 // pred_region
          _
        $region104: #{tpu_custom_call.1} parent=11 // pred_fallthru
          _
        // Predicated region
        $region105: #{tpu_custom_call.1} parent=11 // pred_check
          %p855 = pneg %p577
        $region106: #{tpu_custom_call.1} parent=11 // pred_check_branch
          %857 = sbr.rel (%p855) target = $region108
        $region107: #{tpu_custom_call.1} parent=11 // pred_region
          _
        $region108: #{tpu_custom_call.1} parent=11 // pred_fallthru
          _
        // Predicated region
        $region109: #{tpu_custom_call.1} parent=11 // pred_check
          %p858 = pneg %p598
        $region110: #{tpu_custom_call.1} parent=11 // pred_check_branch
          %860 = sbr.rel (%p858) target = $region112
        $region111: #{tpu_custom_call.1} parent=11 // pred_region
          _
        $region112: #{tpu_custom_call.1} parent=11 // pred_fallthru
          _
        // Predicated region
        $region113: #{tpu_custom_call.1} parent=11 // pred_check
          %p861 = pneg %p619
        $region114: #{tpu_custom_call.1} parent=11 // pred_check_branch
          %863 = sbr.rel (%p861) target = $region116
        $region115: #{tpu_custom_call.1} parent=11 // pred_region
          _
        $region116: #{tpu_custom_call.1} parent=11 // pred_fallthru
          _
        // Predicated region
        $region117: #{tpu_custom_call.1} parent=11 // pred_check
          %p864 = pneg %p640
        $region118: #{tpu_custom_call.1} parent=11 // pred_check_branch
          %866 = sbr.rel (%p864) target = $region120
        $region119: #{tpu_custom_call.1} parent=11 // pred_region
          _
        $region120: #{tpu_custom_call.1} parent=11 // pred_fallthru
          _
        // Predicated region
        $region121: #{tpu_custom_call.1} parent=11 // pred_check
          %p867 = pneg %p661
        $region122: #{tpu_custom_call.1} parent=11 // pred_check_branch
          %869 = sbr.rel (%p867) target = $region124
        $region123: #{tpu_custom_call.1} parent=11 // pred_region
          _
        $region124: #{tpu_custom_call.1} parent=11 // pred_fallthru
          _
        // Predicated region
        $region125: #{tpu_custom_call.1} parent=11 // pred_check
          %p870 = pneg %p682
        $region126: #{tpu_custom_call.1} parent=11 // pred_check_branch
          %872 = sbr.rel (%p870) target = $region128
        $region127: #{tpu_custom_call.1} parent=11 // pred_region
          _
        $region128: #{tpu_custom_call.1} parent=11 // pred_fallthru
          _
        // Predicated region
        $region129: #{tpu_custom_call.1} parent=11 // pred_check
          %p873 = pneg %p703
        $region130: #{tpu_custom_call.1} parent=11 // pred_check_branch
          %875 = sbr.rel (%p873) target = $region132
        $region131: #{tpu_custom_call.1} parent=11 // pred_region
          _
        $region132: #{tpu_custom_call.1} parent=11 // pred_fallthru
          _
        // Predicated region
        $region133: #{tpu_custom_call.1} parent=11 // pred_check
          %p876 = pneg %p724
        $region134: #{tpu_custom_call.1} parent=11 // pred_check_branch
          %878 = sbr.rel (%p876) target = $region136
        $region135: #{tpu_custom_call.1} parent=11 // pred_region
          _
        $region136: #{tpu_custom_call.1} parent=11 // pred_fallthru
          _
      $region12: #{tpu_custom_call.1} parent=5 // pred_fallthru
        _
      %p879 = scmp.lt.s32.totalorder %s73, 4
      // Predicated region
      $region137: #{tpu_custom_call.1} parent=5 // pred_check
        %p880 = pneg %p879
      $region138: #{tpu_custom_call.1} parent=5 // pred_check_branch
        %882 = sbr.rel (%p880) target = $region140
      $region139: #{tpu_custom_call.1} parent=5 // pred_region
        _
      $region140: #{tpu_custom_call.1} parent=5 // pred_fallthru
        _
      %p883 = scmp.le.s32.totalorder 1, %s73
      %p884 = scmp.lt.s32.totalorder %s73, 5
      %p885 = pnand %p883, %p884
      %p886 = pneg %p885
      // Predicated region
      $region141: #{tpu_custom_call.1} parent=5 // pred_check
        _
      $region142: #{tpu_custom_call.1} parent=5 // pred_check_branch
        %888 = sbr.rel (%p885) target = $region144
      $region143: #{tpu_custom_call.1} parent=5 // pred_region
        %s889 = ssub.s32 %s73, 1
        %p890 = pneg %p94
        %p891 = pneg %p91
        %p892 = pneg %p115
        %p893 = pneg %p112
        %p894 = pneg %p136
        %p895 = pneg %p133
        %p896 = pneg %p157
        %p897 = pneg %p154
        %p898 = pneg %p178
        %p899 = pneg %p175
        %p900 = pneg %p199
        %p901 = pneg %p196
        %p902 = pneg %p220
        %p903 = pneg %p217
        %p904 = pneg %p241
        %p905 = pneg %p238
        %p906 = pneg %p262
        %p907 = pneg %p259
        %p908 = pneg %p283
        %p909 = pneg %p280
        %p910 = pneg %p304
        %p911 = pneg %p301
        %p912 = pneg %p325
        %p913 = pneg %p322
        %p914 = pneg %p346
        %p915 = pneg %p343
        %p916 = pneg %p367
        %p917 = pneg %p364
        %p918 = pneg %p388
        %p919 = pneg %p385
        %p920 = pneg %p409
        %p921 = pneg %p406
        %p922 = pneg %p430
        %p923 = pneg %p427
        %p924 = pneg %p451
        %p925 = pneg %p448
        %p926 = pneg %p472
        %p927 = pneg %p469
        %p928 = pneg %p493
        %p929 = pneg %p490
        %p930 = pneg %p514
        %p931 = pneg %p511
        %p932 = pneg %p535
        %p933 = pneg %p532
        %p934 = pneg %p556
        %p935 = pneg %p553
        %p936 = pneg %p577
        %p937 = pneg %p574
        %p938 = pneg %p598
        %p939 = pneg %p595
        %p940 = pneg %p619
        %p941 = pneg %p616
        %p942 = pneg %p640
        %p943 = pneg %p637
        %p944 = pneg %p661
        %p945 = pneg %p658
        %p946 = pneg %p682
        %p947 = pneg %p679
        %p948 = pneg %p703
        %p949 = pneg %p700
        %p950 = pneg %p724
        %p951 = pneg %p721
        %p952 = pneg %p750
        %p953 = pneg %p747
        %p954 = scmp.lt.s32.totalorder %s78, 3
        %s955 = scalar_select %p954, %s78, 3
        %s956 = smul.addr %s955, 8
        %s957 = scalar_lea.vmem %s63, %s956
        %p958 = pneg %p771
        %p959 = pneg %p768
        %p960 = scmp.lt.s32.totalorder %s78, 3
        %s961 = scalar_select %p960, %s78, 3
        %s962 = smul.addr %s961, 8
        %s963 = scalar_lea.vmem %s63, %s962
        %p964 = scmp.eq.s32.totalorder %s78, 0
        // Predicated region
        $region145: #{tpu_custom_call.1} parent=143 // pred_check
          %p965 = pneg %p964
        $region146: #{tpu_custom_call.1} parent=143 // pred_check_branch
          %967 = sbr.rel (%p965) target = $region148
        $region147: #{tpu_custom_call.1} parent=143 // pred_region
          %v968 = vld [vmem:[%s5] sm:$0x3f]
          %vm969 = vcmask 259072
          %970 = vst.msk [vmem:[#allocation2] sm:$0x3f] %vm969, %v968
          %v971 = vld [vmem:[%s7] sm:$0x3f]
          %972 = vst.msk [vmem:[#allocation3] sm:$0x3f] %vm969, %v971
          %v973 = vld [vmem:[%s1] sm:$0x3f]
          %vm974 = vcmask 13312
          %975 = vst.msk [vmem:[#allocation5] sm:$0x3f] %vm974, %v973
          %v976 = vld [vmem:[%s3] sm:$0x3f]
          %v977 = vld [vmem:[%s9] sm:$0x3]
          %v978 = vld [vmem:[%s11] sm:$0x1]
          %v980 = vperm.slane %v978, 0
          %vm982 = vcmask 15360
          %v984 = vsel %vm982, %v976, 0
          %vm986 = vcmask 1041408
          %v988 = vsel %vm986, %v977, 0
          %990 = vmatpush.msra.mxu0 0.0
          %991 = vmatpush.msra.mxu0 0.0
          %992 = vmatpush.msra.mxu0 0.0
          %993 = vmatpush.msra.mxu0 0.0
          %994 = vmatpush.msra.mxu0 0.0
          %995 = vmatpush.msra.mxu0 0.0
          %996 = vmatpush.msra.mxu0 0.0
          %997 = vmatpush.msra.mxu0 0.0
          %998 = vmatpush.msra.mxu0 0.0
          %999 = vmatpush.msra.mxu0 0.0
          %1000 = vmatpush.msra.mxu0 0.0
          %1001 = vmatpush.msra.mxu0 0.0
          %1002 = vmatpush.msra.mxu0 0.0
          %1003 = vmatpush.msra.mxu0 0.0
          %1004 = vmatpush.msra.mxu0 0.0
          %1005 = vmatpush.msra.mxu0 %v988
          %1006 = vmatmul.f32.gmra.mxu0 %v984
          %v1007 = vpop.f32.mrf.mxu0
          %v1008 = vadd.f32 %v980, %v1007
          %1009 = vdwg.mxu0
          %1010 = vst.msk [vmem:[#allocation4] sm:$0x3f] %vm969, %v1008
        $region148: #{tpu_custom_call.1} parent=143 // pred_fallthru
          _
        %v1011 = vld [vmem:[#allocation4] sm:$0x3f]
        %v1012 = vld [vmem:[#allocation2] sm:$0x3f]
        %v1013 = vld [vmem:[#allocation3] sm:$0x3f]
        %v1014 = vld [vmem:[%s13] sm:$0xff]
        %v1015 = vld [vmem:[%s13 + $0x8] sm:$0xff]
        %v1016 = vld [vmem:[%s13 + $0x10] sm:$0xff]
        %v1017 = vld [vmem:[%s13 + $0x18] sm:$0xff]
        %v1018 = vld [vmem:[%s15] sm:$0xff]
        %v1019 = vld [vmem:[%s15 + $0x8] sm:$0xff]
        %v1020 = vld [vmem:[%s15 + $0x10] sm:$0xff]
        %v1021 = vld [vmem:[%s15 + $0x18] sm:$0xff]
        %vm1022 = vcmask 261120
        %v1024 = vsel %vm1022, %v1012, 0
        %1026 = vmatpush.msra.mxu0 0.0
        %1027 = vmatpush.msra.mxu0 0.0
        %1028 = vmatpush.msra.mxu0 0.0
        %1029 = vmatpush.msra.mxu0 0.0
        %1030 = vmatpush.msra.mxu0 0.0
        %1031 = vmatpush.msra.mxu0 0.0
        %1032 = vmatpush.msra.mxu0 0.0
        %1033 = vmatpush.msra.mxu0 0.0
        %1034 = vmatpush.msra.mxu0 0.0
        %1035 = vmatpush.msra.mxu0 0.0
        %1036 = vmatpush.msra.mxu0 0.0
        %1037 = vmatpush.msra.mxu0 0.0
        %1038 = vmatpush.msra.mxu0 %v1021
        %1039 = vmatpush.msra.mxu0 %v1020
        %1040 = vmatpush.msra.mxu0 %v1019
        %1041 = vmatpush.msra.mxu0 %v1018
        %1042 = vmatmul.f32.gmra.mxu0 %v1024
        %v1043 = vpop.f32.mrf.mxu0
        %v1044 = vadd.f32 0.0, %v1043
        %1045 = vdwg.mxu0
        %v1047 = vsel %vm1022, %v1011, 0
        %1049 = vmatpush.msra.mxu0 0.0
        %1050 = vmatpush.msra.mxu0 0.0
        %1051 = vmatpush.msra.mxu0 0.0
        %1052 = vmatpush.msra.mxu0 0.0
        %1053 = vmatpush.msra.mxu0 0.0
        %1054 = vmatpush.msra.mxu0 0.0
        %1055 = vmatpush.msra.mxu0 0.0
        %1056 = vmatpush.msra.mxu0 0.0
        %1057 = vmatpush.msra.mxu0 0.0
        %1058 = vmatpush.msra.mxu0 0.0
        %1059 = vmatpush.msra.mxu0 0.0
        %1060 = vmatpush.msra.mxu0 0.0
        %1061 = vmatpush.msra.mxu0 %v1017
        %1062 = vmatpush.msra.mxu0 %v1016
        %1063 = vmatpush.msra.mxu0 %v1015
        %1064 = vmatpush.msra.mxu0 %v1014
        %1065 = vmatmul.f32.gmra.mxu0 %v1047
        %v1066 = vpop.f32.mrf.mxu0
        %v1067 = vadd.f32 %v1044, %v1066
        %1068 = vdwg.mxu0
        %v1069 = vld [vmem:[%s17] sm:$0x1]
        %v1071 = vperm.slane %v1069, 0
        %v1073 = vadd.f32 %v1067, %v1071
        %v1074 = vxor.u32 %v1073, 2147483648
        %v1075 = vmul.f32 %v1074, 1.442695
        %v1076 = vpow.pop %v1075
        %v1077 = vadd.f32 %v1076, 1.0
        %v1078 = vrcp.pop %v1077
        %v1079 = vmul.f32 %v1077, %v1078
        %v1080 = vsub.f32 1.0, %v1079
        %v1081 = vmul.f32 %v1078, %v1080
        %v1082 = vadd.f32 %v1078, %v1081
        %vm1083 = vweird.f32 %v1077
        %vm1084 = vweird.f32 %v1078
        %vm1085 = vmor %vm1083, %vm1084
        %v1086 = vsel %vm1085, %v1078, %v1082
        %v1087 = vand.u32 2147483647, %v1077
        %vm1088 = vcmp.eq.f32.partialorder %v1087, 8.507059e+37
        %v1089 = vand.u32 %v1077, 2147483648
        %v1090 = vor.u32 1.1754944e-38, %v1089
        %v1091 = vsel %vm1088, %v1090, %v1086
        %v1092 = vmul.f32 1.0, %v1091
        %v1093 = vtanh.pop %v1073
        %1095 = vrot.lane.b32.xlu0 %v1013, 32
        %v1096 = vpop.permute.xlu0 %1095
        %v1098 = vmul.f32 %v1092, %v1096
        %1100 = vrot.lane.b32.xlu0 %v1093, 64
        %v1101 = vpop.permute.xlu0 %1100
        %v1103 = vmul.f32 %v1092, %v1101
        %1105 = vrot.lane.b32.xlu0 %v1103, 32
        %v1106 = vpop.permute.xlu0 %1105
        %v1108 = vadd.f32 %v1098, %v1106
        %v1109 = vtanh.pop %v1108
        %1111 = vrot.lane.b32.xlu0 %v1109, 64
        %v1112 = vpop.permute.xlu0 %1111
        %v1114 = vmul.f32 %v1092, %v1112
        %1116 = vrot.lane.b32.xlu0 %v1108, 96
        %v1117 = vpop.permute.xlu0 %1116
        %vm1119 = vcmask 259072
        %1120 = vst.msk [vmem:[#allocation3] sm:$0x3f] %vm1119, %v1117
        %v1121 = vld [vmem:[%s19] sm:$0xff]
        %v1122 = vld [vmem:[%s19 + $0x8] sm:$0xff]
        %v1123 = vld [vmem:[%s19 + $0x10] sm:$0xff]
        %v1124 = vld [vmem:[%s19 + $0x18] sm:$0xff]
        %v1125 = vld [vmem:[%s21] sm:$0x1]
        %v1127 = vperm.slane %v1125, 0
        %1130 = vrot.lane.b32.xlu0 %v1114, 32
        %v1131 = vpop.permute.xlu0 %1130
        %v1132 = vsel %vm1022, %v1131, 0
        %1134 = vmatpush.msra.mxu0 0.0
        %1135 = vmatpush.msra.mxu0 0.0
        %1136 = vmatpush.msra.mxu0 0.0
        %1137 = vmatpush.msra.mxu0 0.0
        %1138 = vmatpush.msra.mxu0 0.0
        %1139 = vmatpush.msra.mxu0 0.0
        %1140 = vmatpush.msra.mxu0 0.0
        %1141 = vmatpush.msra.mxu0 0.0
        %1142 = vmatpush.msra.mxu0 0.0
        %1143 = vmatpush.msra.mxu0 0.0
        %1144 = vmatpush.msra.mxu0 0.0
        %1145 = vmatpush.msra.mxu0 0.0
        %1146 = vmatpush.msra.mxu0 %v1124
        %1147 = vmatpush.msra.mxu0 %v1123
        %1148 = vmatpush.msra.mxu0 %v1122
        %1149 = vmatpush.msra.mxu0 %v1121
        %1150 = vmatmul.f32.gmra.mxu0 %v1132
        %v1151 = vpop.f32.mrf.mxu0
        %v1152 = vadd.f32 %v1127, %v1151
        %1153 = vdwg.mxu0
        %v1154 = vld [vmem:[#allocation5] sm:$0x3f]
        %v1155 = vadd.f32 %v1152, %v1154
        %vm1156 = vcmask 13312
        %1157 = vst.msk [vmem:[#allocation5] sm:$0x3f] %vm1156, %v1155
        %1158 = vst.msk [vmem:[%s963] sm:$0x3f] %vm1156, %v1152
        %v1159 = vld [vmem:[%s29] sm:$0xff]
        %v1160 = vld [vmem:[%s29 + $0x8] sm:$0xff]
        %v1161 = vld [vmem:[%s29 + $0x10] sm:$0xff]
        %v1162 = vld [vmem:[%s29 + $0x18] sm:$0xff]
        %v1163 = vld [vmem:[%s29 + $0x20] sm:$0xff]
        %v1164 = vld [vmem:[%s29 + $0x28] sm:$0xff]
        %v1165 = vld [vmem:[%s29 + $0x30] sm:$0xff]
        %v1166 = vld [vmem:[%s29 + $0x38] sm:$0xff]
        %v1167 = vld [vmem:[%s29 + $0x40] sm:$0xff]
        %v1168 = vld [vmem:[%s29 + $0x48] sm:$0xff]
        %v1169 = vld [vmem:[%s29 + $0x50] sm:$0xff]
        %v1170 = vld [vmem:[%s29 + $0x58] sm:$0xff]
        %v1171 = vld [vmem:[%s29 + $0x60] sm:$0xff]
        %v1172 = vld [vmem:[%s29 + $0x68] sm:$0xff]
        %v1173 = vld [vmem:[%s29 + $0x70] sm:$0xff]
        %v1174 = vld [vmem:[%s29 + $0x78] sm:$0xff]
        %1175 = vmatpush.msra.mxu0 0.0
        %1176 = vmatpush.msra.mxu0 0.0
        %1177 = vmatpush.msra.mxu0 0.0
        %1178 = vmatpush.msra.mxu0 0.0
        %1179 = vmatpush.msra.mxu0 0.0
        %1180 = vmatpush.msra.mxu0 0.0
        %1181 = vmatpush.msra.mxu0 0.0
        %1182 = vmatpush.msra.mxu0 0.0
        %1183 = vmatpush.msra.mxu0 0.0
        %1184 = vmatpush.msra.mxu0 0.0
        %1185 = vmatpush.msra.mxu0 0.0
        %1186 = vmatpush.msra.mxu0 0.0
        %1187 = vmatpush.msra.mxu0 %v1171
        %1188 = vmatpush.msra.mxu0 %v1167
        %1189 = vmatpush.msra.mxu0 %v1163
        %1190 = vmatpush.msra.mxu0 %v1159
        %1191 = vmatmul.f32.gmra.mxu0 %v1132
        %v1192 = vpop.f32.mrf.mxu0
        %v1193 = vadd.f32 0.0, %v1192
        %1194 = vdwg.mxu0
        %1195 = vmatpush.msra.mxu0 0.0
        %1196 = vmatpush.msra.mxu0 0.0
        %1197 = vmatpush.msra.mxu0 0.0
        %1198 = vmatpush.msra.mxu0 0.0
        %1199 = vmatpush.msra.mxu0 0.0
        %1200 = vmatpush.msra.mxu0 0.0
        %1201 = vmatpush.msra.mxu0 0.0
        %1202 = vmatpush.msra.mxu0 0.0
        %1203 = vmatpush.msra.mxu0 0.0
        %1204 = vmatpush.msra.mxu0 0.0
        %1205 = vmatpush.msra.mxu0 0.0
        %1206 = vmatpush.msra.mxu0 0.0
        %1207 = vmatpush.msra.mxu0 %v1172
        %1208 = vmatpush.msra.mxu0 %v1168
        %1209 = vmatpush.msra.mxu0 %v1164
        %1210 = vmatpush.msra.mxu0 %v1160
        %1211 = vmatmul.f32.gmra.mxu0 %v1132
        %v1212 = vpop.f32.mrf.mxu0
        %v1213 = vadd.f32 0.0, %v1212
        %1214 = vdwg.mxu0
        %1215 = vmatpush.msra.mxu0 0.0
        %1216 = vmatpush.msra.mxu0 0.0
        %1217 = vmatpush.msra.mxu0 0.0
        %1218 = vmatpush.msra.mxu0 0.0
        %1219 = vmatpush.msra.mxu0 0.0
        %1220 = vmatpush.msra.mxu0 0.0
        %1221 = vmatpush.msra.mxu0 0.0
        %1222 = vmatpush.msra.mxu0 0.0
        %1223 = vmatpush.msra.mxu0 0.0
        %1224 = vmatpush.msra.mxu0 0.0
        %1225 = vmatpush.msra.mxu0 0.0
        %1226 = vmatpush.msra.mxu0 0.0
        %1227 = vmatpush.msra.mxu0 %v1173
        %1228 = vmatpush.msra.mxu0 %v1169
        %1229 = vmatpush.msra.mxu0 %v1165
        %1230 = vmatpush.msra.mxu0 %v1161
        %1231 = vmatmul.f32.gmra.mxu0 %v1132
        %v1232 = vpop.f32.mrf.mxu0
        %v1233 = vadd.f32 0.0, %v1232
        %1234 = vdwg.mxu0
        %1235 = vmatpush.msra.mxu0 0.0
        %1236 = vmatpush.msra.mxu0 0.0
        %1237 = vmatpush.msra.mxu0 0.0
        %1238 = vmatpush.msra.mxu0 0.0
        %1239 = vmatpush.msra.mxu0 0.0
        %1240 = vmatpush.msra.mxu0 0.0
        %1241 = vmatpush.msra.mxu0 0.0
        %1242 = vmatpush.msra.mxu0 0.0
        %1243 = vmatpush.msra.mxu0 0.0
        %1244 = vmatpush.msra.mxu0 0.0
        %1245 = vmatpush.msra.mxu0 0.0
        %1246 = vmatpush.msra.mxu0 0.0
        %1247 = vmatpush.msra.mxu0 %v1174
        %1248 = vmatpush.msra.mxu0 %v1170
        %1249 = vmatpush.msra.mxu0 %v1166
        %1250 = vmatpush.msra.mxu0 %v1162
        %1251 = vmatmul.f32.gmra.mxu0 %v1132
        %v1252 = vpop.f32.mrf.mxu0
        %v1253 = vadd.f32 0.0, %v1252
        %1254 = vdwg.mxu0
        %v1255 = vperm.slane %v1155, 0
        %v1256 = vsub.f32 %v1155, %v1255
        %v1257 = vld [vmem:[%s23] sm:$0x3]
        %v1258 = vld [vmem:[%s25] sm:$0x1]
        %v1260 = vperm.slane %v1258, 0
        %vm1262 = vcmask 15360
        %v1264 = vsel %vm1262, %v1256, 0
        %vm1266 = vcmask 1041408
        %v1268 = vsel %vm1266, %v1257, 0
        %1270 = vmatpush.msra.mxu0 0.0
        %1271 = vmatpush.msra.mxu0 0.0
        %1272 = vmatpush.msra.mxu0 0.0
        %1273 = vmatpush.msra.mxu0 0.0
        %1274 = vmatpush.msra.mxu0 0.0
        %1275 = vmatpush.msra.mxu0 0.0
        %1276 = vmatpush.msra.mxu0 0.0
        %1277 = vmatpush.msra.mxu0 0.0
        %1278 = vmatpush.msra.mxu0 0.0
        %1279 = vmatpush.msra.mxu0 0.0
        %1280 = vmatpush.msra.mxu0 0.0
        %1281 = vmatpush.msra.mxu0 0.0
        %1282 = vmatpush.msra.mxu0 0.0
        %1283 = vmatpush.msra.mxu0 0.0
        %1284 = vmatpush.msra.mxu0 0.0
        %1285 = vmatpush.msra.mxu0 %v1268
        %1286 = vmatmul.f32.gmra.mxu0 %v1264
        %v1287 = vpop.f32.mrf.mxu0
        %v1288 = vadd.f32 %v1260, %v1287
        %1289 = vdwg.mxu0
        %v1290 = vld [vmem:[%s27] sm:$0xff]
        %v1291 = vld [vmem:[%s27 + $0x8] sm:$0xff]
        %v1292 = vld [vmem:[%s27 + $0x10] sm:$0xff]
        %v1293 = vld [vmem:[%s27 + $0x18] sm:$0xff]
        %v1294 = vld [vmem:[%s27 + $0x20] sm:$0xff]
        %v1295 = vld [vmem:[%s27 + $0x28] sm:$0xff]
        %v1296 = vld [vmem:[%s27 + $0x30] sm:$0xff]
        %v1297 = vld [vmem:[%s27 + $0x38] sm:$0xff]
        %v1298 = vld [vmem:[%s27 + $0x40] sm:$0xff]
        %v1299 = vld [vmem:[%s27 + $0x48] sm:$0xff]
        %v1300 = vld [vmem:[%s27 + $0x50] sm:$0xff]
        %v1301 = vld [vmem:[%s27 + $0x58] sm:$0xff]
        %v1302 = vld [vmem:[%s27 + $0x60] sm:$0xff]
        %v1303 = vld [vmem:[%s27 + $0x68] sm:$0xff]
        %v1304 = vld [vmem:[%s27 + $0x70] sm:$0xff]
        %v1305 = vld [vmem:[%s27 + $0x78] sm:$0xff]
        %v1307 = vsel %vm1022, %v1288, 0
        %1309 = vmatpush.msra.mxu0 0.0
        %1310 = vmatpush.msra.mxu0 0.0
        %1311 = vmatpush.msra.mxu0 0.0
        %1312 = vmatpush.msra.mxu0 0.0
        %1313 = vmatpush.msra.mxu0 0.0
        %1314 = vmatpush.msra.mxu0 0.0
        %1315 = vmatpush.msra.mxu0 0.0
        %1316 = vmatpush.msra.mxu0 0.0
        %1317 = vmatpush.msra.mxu0 0.0
        %1318 = vmatpush.msra.mxu0 0.0
        %1319 = vmatpush.msra.mxu0 0.0
        %1320 = vmatpush.msra.mxu0 0.0
        %1321 = vmatpush.msra.mxu0 %v1302
        %1322 = vmatpush.msra.mxu0 %v1298
        %1323 = vmatpush.msra.mxu0 %v1294
        %1324 = vmatpush.msra.mxu0 %v1290
        %1325 = vmatmul.f32.gmra.mxu0 %v1307
        %v1326 = vpop.f32.mrf.mxu0
        %v1327 = vadd.f32 %v1193, %v1326
        %1328 = vdwg.mxu0
        %1329 = vmatpush.msra.mxu0 0.0
        %1330 = vmatpush.msra.mxu0 0.0
        %1331 = vmatpush.msra.mxu0 0.0
        %1332 = vmatpush.msra.mxu0 0.0
        %1333 = vmatpush.msra.mxu0 0.0
        %1334 = vmatpush.msra.mxu0 0.0
        %1335 = vmatpush.msra.mxu0 0.0
        %1336 = vmatpush.msra.mxu0 0.0
        %1337 = vmatpush.msra.mxu0 0.0
        %1338 = vmatpush.msra.mxu0 0.0
        %1339 = vmatpush.msra.mxu0 0.0
        %1340 = vmatpush.msra.mxu0 0.0
        %1341 = vmatpush.msra.mxu0 %v1303
        %1342 = vmatpush.msra.mxu0 %v1299
        %1343 = vmatpush.msra.mxu0 %v1295
        %1344 = vmatpush.msra.mxu0 %v1291
        %1345 = vmatmul.f32.gmra.mxu0 %v1307
        %v1346 = vpop.f32.mrf.mxu0
        %v1347 = vadd.f32 %v1213, %v1346
        %1348 = vdwg.mxu0
        %1349 = vmatpush.msra.mxu0 0.0
        %1350 = vmatpush.msra.mxu0 0.0
        %1351 = vmatpush.msra.mxu0 0.0
        %1352 = vmatpush.msra.mxu0 0.0
        %1353 = vmatpush.msra.mxu0 0.0
        %1354 = vmatpush.msra.mxu0 0.0
        %1355 = vmatpush.msra.mxu0 0.0
        %1356 = vmatpush.msra.mxu0 0.0
        %1357 = vmatpush.msra.mxu0 0.0
        %1358 = vmatpush.msra.mxu0 0.0
        %1359 = vmatpush.msra.mxu0 0.0
        %1360 = vmatpush.msra.mxu0 0.0
        %1361 = vmatpush.msra.mxu0 %v1304
        %1362 = vmatpush.msra.mxu0 %v1300
        %1363 = vmatpush.msra.mxu0 %v1296
        %1364 = vmatpush.msra.mxu0 %v1292
        %1365 = vmatmul.f32.gmra.mxu0 %v1307
        %v1366 = vpop.f32.mrf.mxu0
        %v1367 = vadd.f32 %v1233, %v1366
        %1368 = vdwg.mxu0
        %1369 = vmatpush.msra.mxu0 0.0
        %1370 = vmatpush.msra.mxu0 0.0
        %1371 = vmatpush.msra.mxu0 0.0
        %1372 = vmatpush.msra.mxu0 0.0
        %1373 = vmatpush.msra.mxu0 0.0
        %1374 = vmatpush.msra.mxu0 0.0
        %1375 = vmatpush.msra.mxu0 0.0
        %1376 = vmatpush.msra.mxu0 0.0
        %1377 = vmatpush.msra.mxu0 0.0
        %1378 = vmatpush.msra.mxu0 0.0
        %1379 = vmatpush.msra.mxu0 0.0
        %1380 = vmatpush.msra.mxu0 0.0
        %1381 = vmatpush.msra.mxu0 %v1305
        %1382 = vmatpush.msra.mxu0 %v1301
        %1383 = vmatpush.msra.mxu0 %v1297
        %1384 = vmatpush.msra.mxu0 %v1293
        %1385 = vmatmul.f32.gmra.mxu0 %v1307
        %v1386 = vpop.f32.mrf.mxu0
        %v1387 = vadd.f32 %v1253, %v1386
        %1388 = vdwg.mxu0
        %v1389 = vld [vmem:[%s31] sm:$0xf]
        %v1391 = vperm.slane %v1389, 0
        %v1392 = vperm.slane %v1389, 1
        %v1393 = vperm.slane %v1389, 2
        %v1394 = vperm.slane %v1389, 3
        %v1399 = vadd.f32 %v1327, %v1391
        %v1400 = vadd.f32 %v1347, %v1392
        %v1401 = vadd.f32 %v1367, %v1393
        %v1402 = vadd.f32 %v1387, %v1394
        %v1403 = vperm.slane %v1155, 1
        %v1404 = vsub.f32 %v1155, %v1403
        %v1406 = vsel %vm1262, %v1404, 0
        %1408 = vmatpush.msra.mxu0 0.0
        %1409 = vmatpush.msra.mxu0 0.0
        %1410 = vmatpush.msra.mxu0 0.0
        %1411 = vmatpush.msra.mxu0 0.0
        %1412 = vmatpush.msra.mxu0 0.0
        %1413 = vmatpush.msra.mxu0 0.0
        %1414 = vmatpush.msra.mxu0 0.0
        %1415 = vmatpush.msra.mxu0 0.0
        %1416 = vmatpush.msra.mxu0 0.0
        %1417 = vmatpush.msra.mxu0 0.0
        %1418 = vmatpush.msra.mxu0 0.0
        %1419 = vmatpush.msra.mxu0 0.0
        %1420 = vmatpush.msra.mxu0 0.0
        %1421 = vmatpush.msra.mxu0 0.0
        %1422 = vmatpush.msra.mxu0 0.0
        %1423 = vmatpush.msra.mxu0 %v1268
        %1424 = vmatmul.f32.gmra.mxu0 %v1406
        %v1425 = vpop.f32.mrf.mxu0
        %v1426 = vadd.f32 %v1260, %v1425
        %1427 = vdwg.mxu0
        %v1429 = vsel %vm1022, %v1426, 0
        %1431 = vmatpush.msra.mxu0 0.0
        %1432 = vmatpush.msra.mxu0 0.0
        %1433 = vmatpush.msra.mxu0 0.0
        %1434 = vmatpush.msra.mxu0 0.0
        %1435 = vmatpush.msra.mxu0 0.0
        %1436 = vmatpush.msra.mxu0 0.0
        %1437 = vmatpush.msra.mxu0 0.0
        %1438 = vmatpush.msra.mxu0 0.0
        %1439 = vmatpush.msra.mxu0 0.0
        %1440 = vmatpush.msra.mxu0 0.0
        %1441 = vmatpush.msra.mxu0 0.0
        %1442 = vmatpush.msra.mxu0 0.0
        %1443 = vmatpush.msra.mxu0 %v1302
        %1444 = vmatpush.msra.mxu0 %v1298
        %1445 = vmatpush.msra.mxu0 %v1294
        %1446 = vmatpush.msra.mxu0 %v1290
        %1447 = vmatmul.f32.gmra.mxu0 %v1429
        %v1448 = vpop.f32.mrf.mxu0
        %v1449 = vadd.f32 %v1193, %v1448
        %1450 = vdwg.mxu0
        %1451 = vmatpush.msra.mxu0 0.0
        %1452 = vmatpush.msra.mxu0 0.0
        %1453 = vmatpush.msra.mxu0 0.0
        %1454 = vmatpush.msra.mxu0 0.0
        %1455 = vmatpush.msra.mxu0 0.0
        %1456 = vmatpush.msra.mxu0 0.0
        %1457 = vmatpush.msra.mxu0 0.0
        %1458 = vmatpush.msra.mxu0 0.0
        %1459 = vmatpush.msra.mxu0 0.0
        %1460 = vmatpush.msra.mxu0 0.0
        %1461 = vmatpush.msra.mxu0 0.0
        %1462 = vmatpush.msra.mxu0 0.0
        %1463 = vmatpush.msra.mxu0 %v1303
        %1464 = vmatpush.msra.mxu0 %v1299
        %1465 = vmatpush.msra.mxu0 %v1295
        %1466 = vmatpush.msra.mxu0 %v1291
        %1467 = vmatmul.f32.gmra.mxu0 %v1429
        %v1468 = vpop.f32.mrf.mxu0
        %v1469 = vadd.f32 %v1213, %v1468
        %1470 = vdwg.mxu0
        %1471 = vmatpush.msra.mxu0 0.0
        %1472 = vmatpush.msra.mxu0 0.0
        %1473 = vmatpush.msra.mxu0 0.0
        %1474 = vmatpush.msra.mxu0 0.0
        %1475 = vmatpush.msra.mxu0 0.0
        %1476 = vmatpush.msra.mxu0 0.0
        %1477 = vmatpush.msra.mxu0 0.0
        %1478 = vmatpush.msra.mxu0 0.0
        %1479 = vmatpush.msra.mxu0 0.0
        %1480 = vmatpush.msra.mxu0 0.0
        %1481 = vmatpush.msra.mxu0 0.0
        %1482 = vmatpush.msra.mxu0 0.0
        %1483 = vmatpush.msra.mxu0 %v1304
        %1484 = vmatpush.msra.mxu0 %v1300
        %1485 = vmatpush.msra.mxu0 %v1296
        %1486 = vmatpush.msra.mxu0 %v1292
        %1487 = vmatmul.f32.gmra.mxu0 %v1429
        %v1488 = vpop.f32.mrf.mxu0
        %v1489 = vadd.f32 %v1233, %v1488
        %1490 = vdwg.mxu0
        %1491 = vmatpush.msra.mxu0 0.0
        %1492 = vmatpush.msra.mxu0 0.0
        %1493 = vmatpush.msra.mxu0 0.0
        %1494 = vmatpush.msra.mxu0 0.0
        %1495 = vmatpush.msra.mxu0 0.0
        %1496 = vmatpush.msra.mxu0 0.0
        %1497 = vmatpush.msra.mxu0 0.0
        %1498 = vmatpush.msra.mxu0 0.0
        %1499 = vmatpush.msra.mxu0 0.0
        %1500 = vmatpush.msra.mxu0 0.0
        %1501 = vmatpush.msra.mxu0 0.0
        %1502 = vmatpush.msra.mxu0 0.0
        %1503 = vmatpush.msra.mxu0 %v1305
        %1504 = vmatpush.msra.mxu0 %v1301
        %1505 = vmatpush.msra.mxu0 %v1297
        %1506 = vmatpush.msra.mxu0 %v1293
        %1507 = vmatmul.f32.gmra.mxu0 %v1429
        %v1508 = vpop.f32.mrf.mxu0
        %v1509 = vadd.f32 %v1253, %v1508
        %1510 = vdwg.mxu0
        %v1511 = vadd.f32 %v1449, %v1391
        %v1512 = vadd.f32 %v1469, %v1392
        %v1513 = vadd.f32 %v1489, %v1393
        %v1514 = vadd.f32 %v1509, %v1394
        %v1515 = vperm.slane %v1155, 2
        %v1516 = vsub.f32 %v1155, %v1515
        %v1518 = vsel %vm1262, %v1516, 0
        %1520 = vmatpush.msra.mxu0 0.0
        %1521 = vmatpush.msra.mxu0 0.0
        %1522 = vmatpush.msra.mxu0 0.0
        %1523 = vmatpush.msra.mxu0 0.0
        %1524 = vmatpush.msra.mxu0 0.0
        %1525 = vmatpush.msra.mxu0 0.0
        %1526 = vmatpush.msra.mxu0 0.0
        %1527 = vmatpush.msra.mxu0 0.0
        %1528 = vmatpush.msra.mxu0 0.0
        %1529 = vmatpush.msra.mxu0 0.0
        %1530 = vmatpush.msra.mxu0 0.0
        %1531 = vmatpush.msra.mxu0 0.0
        %1532 = vmatpush.msra.mxu0 0.0
        %1533 = vmatpush.msra.mxu0 0.0
        %1534 = vmatpush.msra.mxu0 0.0
        %1535 = vmatpush.msra.mxu0 %v1268
        %1536 = vmatmul.f32.gmra.mxu0 %v1518
        %v1537 = vpop.f32.mrf.mxu0
        %v1538 = vadd.f32 %v1260, %v1537
        %1539 = vdwg.mxu0
        %v1541 = vsel %vm1022, %v1538, 0
        %1543 = vmatpush.msra.mxu0 0.0
        %1544 = vmatpush.msra.mxu0 0.0
        %1545 = vmatpush.msra.mxu0 0.0
        %1546 = vmatpush.msra.mxu0 0.0
        %1547 = vmatpush.msra.mxu0 0.0
        %1548 = vmatpush.msra.mxu0 0.0
        %1549 = vmatpush.msra.mxu0 0.0
        %1550 = vmatpush.msra.mxu0 0.0
        %1551 = vmatpush.msra.mxu0 0.0
        %1552 = vmatpush.msra.mxu0 0.0
        %1553 = vmatpush.msra.mxu0 0.0
        %1554 = vmatpush.msra.mxu0 0.0
        %1555 = vmatpush.msra.mxu0 %v1302
        %1556 = vmatpush.msra.mxu0 %v1298
        %1557 = vmatpush.msra.mxu0 %v1294
        %1558 = vmatpush.msra.mxu0 %v1290
        %1559 = vmatmul.f32.gmra.mxu0 %v1541
        %v1560 = vpop.f32.mrf.mxu0
        %v1561 = vadd.f32 %v1193, %v1560
        %1562 = vdwg.mxu0
        %1563 = vmatpush.msra.mxu0 0.0
        %1564 = vmatpush.msra.mxu0 0.0
        %1565 = vmatpush.msra.mxu0 0.0
        %1566 = vmatpush.msra.mxu0 0.0
        %1567 = vmatpush.msra.mxu0 0.0
        %1568 = vmatpush.msra.mxu0 0.0
        %1569 = vmatpush.msra.mxu0 0.0
        %1570 = vmatpush.msra.mxu0 0.0
        %1571 = vmatpush.msra.mxu0 0.0
        %1572 = vmatpush.msra.mxu0 0.0
        %1573 = vmatpush.msra.mxu0 0.0
        %1574 = vmatpush.msra.mxu0 0.0
        %1575 = vmatpush.msra.mxu0 %v1303
        %1576 = vmatpush.msra.mxu0 %v1299
        %1577 = vmatpush.msra.mxu0 %v1295
        %1578 = vmatpush.msra.mxu0 %v1291
        %1579 = vmatmul.f32.gmra.mxu0 %v1541
        %v1580 = vpop.f32.mrf.mxu0
        %v1581 = vadd.f32 %v1213, %v1580
        %1582 = vdwg.mxu0
        %1583 = vmatpush.msra.mxu0 0.0
        %1584 = vmatpush.msra.mxu0 0.0
        %1585 = vmatpush.msra.mxu0 0.0
        %1586 = vmatpush.msra.mxu0 0.0
        %1587 = vmatpush.msra.mxu0 0.0
        %1588 = vmatpush.msra.mxu0 0.0
        %1589 = vmatpush.msra.mxu0 0.0
        %1590 = vmatpush.msra.mxu0 0.0
        %1591 = vmatpush.msra.mxu0 0.0
        %1592 = vmatpush.msra.mxu0 0.0
        %1593 = vmatpush.msra.mxu0 0.0
        %1594 = vmatpush.msra.mxu0 0.0
        %1595 = vmatpush.msra.mxu0 %v1304
        %1596 = vmatpush.msra.mxu0 %v1300
        %1597 = vmatpush.msra.mxu0 %v1296
        %1598 = vmatpush.msra.mxu0 %v1292
        %1599 = vmatmul.f32.gmra.mxu0 %v1541
        %v1600 = vpop.f32.mrf.mxu0
        %v1601 = vadd.f32 %v1233, %v1600
        %1602 = vdwg.mxu0
        %1603 = vmatpush.msra.mxu0 0.0
        %1604 = vmatpush.msra.mxu0 0.0
        %1605 = vmatpush.msra.mxu0 0.0
        %1606 = vmatpush.msra.mxu0 0.0
        %1607 = vmatpush.msra.mxu0 0.0
        %1608 = vmatpush.msra.mxu0 0.0
        %1609 = vmatpush.msra.mxu0 0.0
        %1610 = vmatpush.msra.mxu0 0.0
        %1611 = vmatpush.msra.mxu0 0.0
        %1612 = vmatpush.msra.mxu0 0.0
        %1613 = vmatpush.msra.mxu0 0.0
        %1614 = vmatpush.msra.mxu0 0.0
        %1615 = vmatpush.msra.mxu0 %v1305
        %1616 = vmatpush.msra.mxu0 %v1301
        %1617 = vmatpush.msra.mxu0 %v1297
        %1618 = vmatpush.msra.mxu0 %v1293
        %1619 = vmatmul.f32.gmra.mxu0 %v1541
        %v1620 = vpop.f32.mrf.mxu0
        %v1621 = vadd.f32 %v1253, %v1620
        %1622 = vdwg.mxu0
        %v1623 = vadd.f32 %v1561, %v1391
        %v1624 = vadd.f32 %v1581, %v1392
        %v1625 = vadd.f32 %v1601, %v1393
        %v1626 = vadd.f32 %v1621, %v1394
        %v1627 = vld [vmem:[%s33] sm:$0xf]
        %v1628 = vld [vmem:[%s35] sm:$0xf]
        %vm1629 = vcmask 1042432
        %v1630 = vsel %vm1629, %v1399, 0.0
        %v1631 = vrot.slane %v1630, 4
        %v1632 = vadd.f32 %v1630, %v1631
        %v1633 = vrot.slane %v1632, 2
        %v1634 = vadd.f32 %v1632, %v1633
        %v1635 = vrot.slane %v1634, 1
        %v1636 = vadd.f32 %v1634, %v1635
        %v1637 = vsel %vm1629, %v1400, 0.0
        %v1638 = vrot.slane %v1637, 4
        %v1639 = vadd.f32 %v1637, %v1638
        %v1640 = vrot.slane %v1639, 2
        %v1641 = vadd.f32 %v1639, %v1640
        %v1642 = vrot.slane %v1641, 1
        %v1643 = vadd.f32 %v1641, %v1642
        %v1644 = vsel %vm1629, %v1401, 0.0
        %v1645 = vrot.slane %v1644, 4
        %v1646 = vadd.f32 %v1644, %v1645
        %v1647 = vrot.slane %v1646, 2
        %v1648 = vadd.f32 %v1646, %v1647
        %v1649 = vrot.slane %v1648, 1
        %v1650 = vadd.f32 %v1648, %v1649
        %v1651 = vsel %vm1629, %v1402, 0.0
        %v1652 = vrot.slane %v1651, 4
        %v1653 = vadd.f32 %v1651, %v1652
        %v1654 = vrot.slane %v1653, 2
        %v1655 = vadd.f32 %v1653, %v1654
        %v1656 = vrot.slane %v1655, 1
        %v1657 = vadd.f32 %v1655, %v1656
        %v1658 = vadd.f32 %v1636, 0.0
        %v1659 = vadd.f32 %v1643, 0.0
        %v1660 = vadd.f32 %v1650, 0.0
        %v1661 = vadd.f32 %v1657, 0.0
        %v1662 = vsel %vm1629, %v1511, 0.0
        %v1663 = vrot.slane %v1662, 4
        %v1664 = vadd.f32 %v1662, %v1663
        %v1665 = vrot.slane %v1664, 2
        %v1666 = vadd.f32 %v1664, %v1665
        %v1667 = vrot.slane %v1666, 1
        %v1668 = vadd.f32 %v1666, %v1667
        %v1669 = vsel %vm1629, %v1512, 0.0
        %v1670 = vrot.slane %v1669, 4
        %v1671 = vadd.f32 %v1669, %v1670
        %v1672 = vrot.slane %v1671, 2
        %v1673 = vadd.f32 %v1671, %v1672
        %v1674 = vrot.slane %v1673, 1
        %v1675 = vadd.f32 %v1673, %v1674
        %v1676 = vsel %vm1629, %v1513, 0.0
        %v1677 = vrot.slane %v1676, 4
        %v1678 = vadd.f32 %v1676, %v1677
        %v1679 = vrot.slane %v1678, 2
        %v1680 = vadd.f32 %v1678, %v1679
        %v1681 = vrot.slane %v1680, 1
        %v1682 = vadd.f32 %v1680, %v1681
        %v1683 = vsel %vm1629, %v1514, 0.0
        %v1684 = vrot.slane %v1683, 4
        %v1685 = vadd.f32 %v1683, %v1684
        %v1686 = vrot.slane %v1685, 2
        %v1687 = vadd.f32 %v1685, %v1686
        %v1688 = vrot.slane %v1687, 1
        %v1689 = vadd.f32 %v1687, %v1688
        %v1690 = vadd.f32 %v1658, %v1668
        %v1691 = vadd.f32 %v1659, %v1675
        %v1692 = vadd.f32 %v1660, %v1682
        %v1693 = vadd.f32 %v1661, %v1689
        %v1694 = vsel %vm1629, %v1623, 0.0
        %v1695 = vrot.slane %v1694, 4
        %v1696 = vadd.f32 %v1694, %v1695
        %v1697 = vrot.slane %v1696, 2
        %v1698 = vadd.f32 %v1696, %v1697
        %v1699 = vrot.slane %v1698, 1
        %v1700 = vadd.f32 %v1698, %v1699
        %v1701 = vsel %vm1629, %v1624, 0.0
        %v1702 = vrot.slane %v1701, 4
        %v1703 = vadd.f32 %v1701, %v1702
        %v1704 = vrot.slane %v1703, 2
        %v1705 = vadd.f32 %v1703, %v1704
        %v1706 = vrot.slane %v1705, 1
        %v1707 = vadd.f32 %v1705, %v1706
        %v1708 = vsel %vm1629, %v1625, 0.0
        %v1709 = vrot.slane %v1708, 4
        %v1710 = vadd.f32 %v1708, %v1709
        %v1711 = vrot.slane %v1710, 2
        %v1712 = vadd.f32 %v1710, %v1711
        %v1713 = vrot.slane %v1712, 1
        %v1714 = vadd.f32 %v1712, %v1713
        %v1715 = vsel %vm1629, %v1626, 0.0
        %v1716 = vrot.slane %v1715, 4
        %v1717 = vadd.f32 %v1715, %v1716
        %v1718 = vrot.slane %v1717, 2
        %v1719 = vadd.f32 %v1717, %v1718
        %v1720 = vrot.slane %v1719, 1
        %v1721 = vadd.f32 %v1719, %v1720
        %v1722 = vadd.f32 %v1690, %v1700
        %v1723 = vadd.f32 %v1691, %v1707
        %v1724 = vadd.f32 %v1692, %v1714
        %v1725 = vadd.f32 %v1693, %v1721
        %v1726 = vrcp.pop 9.0
        %v1727 = vmul.f32 9.0, %v1726
        %v1728 = vsub.f32 1.0, %v1727
        %v1729 = vmul.f32 %v1726, %v1728
        %v1730 = vadd.f32 %v1726, %v1729
        %vm1731 = vweird.f32 %v1726
        %v1732 = vsel %vm1731, %v1726, %v1730
        %v1733 = vmul.f32 %v1722, %v1732
        %v1734 = vmul.f32 %v1723, %v1732
        %v1735 = vmul.f32 %v1724, %v1732
        %v1736 = vmul.f32 %v1725, %v1732
        %v1737 = vsub.f32 %v1399, %v1733
        %v1738 = vsub.f32 %v1400, %v1734
        %v1739 = vsub.f32 %v1401, %v1735
        %v1740 = vsub.f32 %v1402, %v1736
        %v1741 = vmul.f32 %v1737, %v1737
        %v1742 = vmul.f32 %v1738, %v1738
        %v1743 = vmul.f32 %v1739, %v1739
        %v1744 = vmul.f32 %v1740, %v1740
        %v1745 = vsel %vm1629, %v1741, 0.0
        %v1746 = vrot.slane %v1745, 4
        %v1747 = vadd.f32 %v1745, %v1746
        %v1748 = vrot.slane %v1747, 2
        %v1749 = vadd.f32 %v1747, %v1748
        %v1750 = vrot.slane %v1749, 1
        %v1751 = vadd.f32 %v1749, %v1750
        %v1752 = vsel %vm1629, %v1742, 0.0
        %v1753 = vrot.slane %v1752, 4
        %v1754 = vadd.f32 %v1752, %v1753
        %v1755 = vrot.slane %v1754, 2
        %v1756 = vadd.f32 %v1754, %v1755
        %v1757 = vrot.slane %v1756, 1
        %v1758 = vadd.f32 %v1756, %v1757
        %v1759 = vsel %vm1629, %v1743, 0.0
        %v1760 = vrot.slane %v1759, 4
        %v1761 = vadd.f32 %v1759, %v1760
        %v1762 = vrot.slane %v1761, 2
        %v1763 = vadd.f32 %v1761, %v1762
        %v1764 = vrot.slane %v1763, 1
        %v1765 = vadd.f32 %v1763, %v1764
        %v1766 = vsel %vm1629, %v1744, 0.0
        %v1767 = vrot.slane %v1766, 4
        %v1768 = vadd.f32 %v1766, %v1767
        %v1769 = vrot.slane %v1768, 2
        %v1770 = vadd.f32 %v1768, %v1769
        %v1771 = vrot.slane %v1770, 1
        %v1772 = vadd.f32 %v1770, %v1771
        %v1773 = vadd.f32 %v1751, 0.0
        %v1774 = vadd.f32 %v1758, 0.0
        %v1775 = vadd.f32 %v1765, 0.0
        %v1776 = vadd.f32 %v1772, 0.0
        %v1777 = vsub.f32 %v1511, %v1733
        %v1778 = vsub.f32 %v1512, %v1734
        %v1779 = vsub.f32 %v1513, %v1735
        %v1780 = vsub.f32 %v1514, %v1736
        %v1781 = vmul.f32 %v1777, %v1777
        %v1782 = vmul.f32 %v1778, %v1778
        %v1783 = vmul.f32 %v1779, %v1779
        %v1784 = vmul.f32 %v1780, %v1780
        %v1785 = vsel %vm1629, %v1781, 0.0
        %v1786 = vrot.slane %v1785, 4
        %v1787 = vadd.f32 %v1785, %v1786
        %v1788 = vrot.slane %v1787, 2
        %v1789 = vadd.f32 %v1787, %v1788
        %v1790 = vrot.slane %v1789, 1
        %v1791 = vadd.f32 %v1789, %v1790
        %v1792 = vsel %vm1629, %v1782, 0.0
        %v1793 = vrot.slane %v1792, 4
        %v1794 = vadd.f32 %v1792, %v1793
        %v1795 = vrot.slane %v1794, 2
        %v1796 = vadd.f32 %v1794, %v1795
        %v1797 = vrot.slane %v1796, 1
        %v1798 = vadd.f32 %v1796, %v1797
        %v1799 = vsel %vm1629, %v1783, 0.0
        %v1800 = vrot.slane %v1799, 4
        %v1801 = vadd.f32 %v1799, %v1800
        %v1802 = vrot.slane %v1801, 2
        %v1803 = vadd.f32 %v1801, %v1802
        %v1804 = vrot.slane %v1803, 1
        %v1805 = vadd.f32 %v1803, %v1804
        %v1806 = vsel %vm1629, %v1784, 0.0
        %v1807 = vrot.slane %v1806, 4
        %v1808 = vadd.f32 %v1806, %v1807
        %v1809 = vrot.slane %v1808, 2
        %v1810 = vadd.f32 %v1808, %v1809
        %v1811 = vrot.slane %v1810, 1
        %v1812 = vadd.f32 %v1810, %v1811
        %v1813 = vadd.f32 %v1773, %v1791
        %v1814 = vadd.f32 %v1774, %v1798
        %v1815 = vadd.f32 %v1775, %v1805
        %v1816 = vadd.f32 %v1776, %v1812
        %v1817 = vsub.f32 %v1623, %v1733
        %v1818 = vsub.f32 %v1624, %v1734
        %v1819 = vsub.f32 %v1625, %v1735
        %v1820 = vsub.f32 %v1626, %v1736
        %v1821 = vmul.f32 %v1817, %v1817
        %v1822 = vmul.f32 %v1818, %v1818
        %v1823 = vmul.f32 %v1819, %v1819
        %v1824 = vmul.f32 %v1820, %v1820
        %v1825 = vsel %vm1629, %v1821, 0.0
        %v1826 = vrot.slane %v1825, 4
        %v1827 = vadd.f32 %v1825, %v1826
        %v1828 = vrot.slane %v1827, 2
        %v1829 = vadd.f32 %v1827, %v1828
        %v1830 = vrot.slane %v1829, 1
        %v1831 = vadd.f32 %v1829, %v1830
        %v1832 = vsel %vm1629, %v1822, 0.0
        %v1833 = vrot.slane %v1832, 4
        %v1834 = vadd.f32 %v1832, %v1833
        %v1835 = vrot.slane %v1834, 2
        %v1836 = vadd.f32 %v1834, %v1835
        %v1837 = vrot.slane %v1836, 1
        %v1838 = vadd.f32 %v1836, %v1837
        %v1839 = vsel %vm1629, %v1823, 0.0
        %v1840 = vrot.slane %v1839, 4
        %v1841 = vadd.f32 %v1839, %v1840
        %v1842 = vrot.slane %v1841, 2
        %v1843 = vadd.f32 %v1841, %v1842
        %v1844 = vrot.slane %v1843, 1
        %v1845 = vadd.f32 %v1843, %v1844
        %v1846 = vsel %vm1629, %v1824, 0.0
        %v1847 = vrot.slane %v1846, 4
        %v1848 = vadd.f32 %v1846, %v1847
        %v1849 = vrot.slane %v1848, 2
        %v1850 = vadd.f32 %v1848, %v1849
        %v1851 = vrot.slane %v1850, 1
        %v1852 = vadd.f32 %v1850, %v1851
        %v1853 = vadd.f32 %v1813, %v1831
        %v1854 = vadd.f32 %v1814, %v1838
        %v1855 = vadd.f32 %v1815, %v1845
        %v1856 = vadd.f32 %v1816, %v1852
        %v1857 = vmul.f32 %v1853, %v1732
        %v1858 = vmul.f32 %v1854, %v1732
        %v1859 = vmul.f32 %v1855, %v1732
        %v1860 = vmul.f32 %v1856, %v1732
        %v1861 = vadd.f32 %v1857, 1e-05
        %v1862 = vadd.f32 %v1858, 1e-05
        %v1863 = vadd.f32 %v1859, 1e-05
        %v1864 = vadd.f32 %v1860, 1e-05
        %v1865 = vrsqrt.pop %v1861
        %v1866 = vmul.f32 %v1865, %v1861
        %v1867 = vmul.f32 %v1866, %v1865
        %v1868 = vmul.f32 0.5, %v1867
        %v1869 = vsub.f32 1.5, %v1868
        %v1870 = vmul.f32 %v1865, %v1869
        %vm1871 = vweird.f32 %v1861
        %vm1872 = vweird.f32 %v1865
        %vm1873 = vmor %vm1871, %vm1872
        %v1874 = vsel %vm1873, %v1865, %v1870
        %v1875 = vrsqrt.pop %v1862
        %v1876 = vmul.f32 %v1875, %v1862
        %v1877 = vmul.f32 %v1876, %v1875
        %v1878 = vmul.f32 0.5, %v1877
        %v1879 = vsub.f32 1.5, %v1878
        %v1880 = vmul.f32 %v1875, %v1879
        %vm1881 = vweird.f32 %v1862
        %vm1882 = vweird.f32 %v1875
        %vm1883 = vmor %vm1881, %vm1882
        %v1884 = vsel %vm1883, %v1875, %v1880
        %v1885 = vrsqrt.pop %v1863
        %v1886 = vmul.f32 %v1885, %v1863
        %v1887 = vmul.f32 %v1886, %v1885
        %v1888 = vmul.f32 0.5, %v1887
        %v1889 = vsub.f32 1.5, %v1888
        %v1890 = vmul.f32 %v1885, %v1889
        %vm1891 = vweird.f32 %v1863
        %vm1892 = vweird.f32 %v1885
        %vm1893 = vmor %vm1891, %vm1892
        %v1894 = vsel %vm1893, %v1885, %v1890
        %v1895 = vrsqrt.pop %v1864
        %v1896 = vmul.f32 %v1895, %v1864
        %v1897 = vmul.f32 %v1896, %v1895
        %v1898 = vmul.f32 0.5, %v1897
        %v1899 = vsub.f32 1.5, %v1898
        %v1900 = vmul.f32 %v1895, %v1899
        %vm1901 = vweird.f32 %v1864
        %vm1902 = vweird.f32 %v1895
        %vm1903 = vmor %vm1901, %vm1902
        %v1904 = vsel %vm1903, %v1895, %v1900
        %v1905 = vmul.f32 %v1737, %v1874
        %v1906 = vmul.f32 %v1738, %v1884
        %v1907 = vmul.f32 %v1739, %v1894
        %v1908 = vmul.f32 %v1740, %v1904
        %v1910 = vperm.slane %v1627, 0
        %v1911 = vperm.slane %v1627, 1
        %v1912 = vperm.slane %v1627, 2
        %v1913 = vperm.slane %v1627, 3
        %v1918 = vmul.f32 %v1905, %v1910
        %v1919 = vmul.f32 %v1906, %v1911
        %v1920 = vmul.f32 %v1907, %v1912
        %v1921 = vmul.f32 %v1908, %v1913
        %v1923 = vperm.slane %v1628, 0
        %v1924 = vperm.slane %v1628, 1
        %v1925 = vperm.slane %v1628, 2
        %v1926 = vperm.slane %v1628, 3
        %v1931 = vadd.f32 %v1918, %v1923
        %v1932 = vadd.f32 %v1919, %v1924
        %v1933 = vadd.f32 %v1920, %v1925
        %v1934 = vadd.f32 %v1921, %v1926
        %v1935 = vmax.f32 %v1931, 0.0
        %v1936 = vmax.f32 %v1932, 0.0
        %v1937 = vmax.f32 %v1933, 0.0
        %v1938 = vmax.f32 %v1934, 0.0
        %v1939 = vmul.f32 %v1777, %v1874
        %v1940 = vmul.f32 %v1778, %v1884
        %v1941 = vmul.f32 %v1779, %v1894
        %v1942 = vmul.f32 %v1780, %v1904
        %v1943 = vmul.f32 %v1939, %v1910
        %v1944 = vmul.f32 %v1940, %v1911
        %v1945 = vmul.f32 %v1941, %v1912
        %v1946 = vmul.f32 %v1942, %v1913
        %v1947 = vadd.f32 %v1943, %v1923
        %v1948 = vadd.f32 %v1944, %v1924
        %v1949 = vadd.f32 %v1945, %v1925
        %v1950 = vadd.f32 %v1946, %v1926
        %v1951 = vmax.f32 %v1947, 0.0
        %v1952 = vmax.f32 %v1948, 0.0
        %v1953 = vmax.f32 %v1949, 0.0
        %v1954 = vmax.f32 %v1950, 0.0
        %v1955 = vmul.f32 %v1817, %v1874
        %v1956 = vmul.f32 %v1818, %v1884
        %v1957 = vmul.f32 %v1819, %v1894
        %v1958 = vmul.f32 %v1820, %v1904
        %v1959 = vmul.f32 %v1955, %v1910
        %v1960 = vmul.f32 %v1956, %v1911
        %v1961 = vmul.f32 %v1957, %v1912
        %v1962 = vmul.f32 %v1958, %v1913
        %v1963 = vadd.f32 %v1959, %v1923
        %v1964 = vadd.f32 %v1960, %v1924
        %v1965 = vadd.f32 %v1961, %v1925
        %v1966 = vadd.f32 %v1962, %v1926
        %v1967 = vmax.f32 %v1963, 0.0
        %v1968 = vmax.f32 %v1964, 0.0
        %v1969 = vmax.f32 %v1965, 0.0
        %v1970 = vmax.f32 %v1966, 0.0
        %v1971 = vld [vmem:[%s37] sm:$0xff]
        %v1972 = vld [vmem:[%s37 + $0x8] sm:$0xff]
        %v1973 = vld [vmem:[%s37 + $0x10] sm:$0xff]
        %v1974 = vld [vmem:[%s37 + $0x18] sm:$0xff]
        %v1975 = vld [vmem:[%s37 + $0x20] sm:$0xff]
        %v1976 = vld [vmem:[%s37 + $0x28] sm:$0xff]
        %v1977 = vld [vmem:[%s37 + $0x30] sm:$0xff]
        %v1978 = vld [vmem:[%s37 + $0x38] sm:$0xff]
        %v1979 = vld [vmem:[%s37 + $0x40] sm:$0xff]
        %v1980 = vld [vmem:[%s37 + $0x48] sm:$0xff]
        %v1981 = vld [vmem:[%s37 + $0x50] sm:$0xff]
        %v1982 = vld [vmem:[%s37 + $0x58] sm:$0xff]
        %v1983 = vld [vmem:[%s37 + $0x60] sm:$0xff]
        %v1984 = vld [vmem:[%s37 + $0x68] sm:$0xff]
        %v1985 = vld [vmem:[%s37 + $0x70] sm:$0xff]
        %v1986 = vld [vmem:[%s37 + $0x78] sm:$0xff]
        %v1987 = vld [vmem:[%s37 + $0x80] sm:$0xff]
        %v1988 = vld [vmem:[%s37 + $0x88] sm:$0xff]
        %v1989 = vld [vmem:[%s37 + $0x90] sm:$0xff]
        %v1990 = vld [vmem:[%s37 + $0x98] sm:$0xff]
        %v1991 = vld [vmem:[%s37 + $0xa0] sm:$0xff]
        %v1992 = vld [vmem:[%s37 + $0xa8] sm:$0xff]
        %v1993 = vld [vmem:[%s37 + $0xb0] sm:$0xff]
        %v1994 = vld [vmem:[%s37 + $0xb8] sm:$0xff]
        %v1995 = vld [vmem:[%s37 + $0xc0] sm:$0xff]
        %v1996 = vld [vmem:[%s37 + $0xc8] sm:$0xff]
        %v1997 = vld [vmem:[%s37 + $0xd0] sm:$0xff]
        %v1998 = vld [vmem:[%s37 + $0xd8] sm:$0xff]
        %v1999 = vld [vmem:[%s37 + $0xe0] sm:$0xff]
        %v2000 = vld [vmem:[%s37 + $0xe8] sm:$0xff]
        %v2001 = vld [vmem:[%s37 + $0xf0] sm:$0xff]
        %v2002 = vld [vmem:[%s37 + $0xf8] sm:$0xff]
        %v2003 = vld [vmem:[%s37 + $0x100] sm:$0xff]
        %v2004 = vld [vmem:[%s37 + $0x108] sm:$0xff]
        %v2005 = vld [vmem:[%s37 + $0x110] sm:$0xff]
        %v2006 = vld [vmem:[%s37 + $0x118] sm:$0xff]
        %v2007 = vld [vmem:[%s37 + $0x120] sm:$0xff]
        %v2008 = vld [vmem:[%s37 + $0x128] sm:$0xff]
        %v2009 = vld [vmem:[%s37 + $0x130] sm:$0xff]
        %v2010 = vld [vmem:[%s37 + $0x138] sm:$0xff]
        %v2011 = vld [vmem:[%s37 + $0x140] sm:$0xff]
        %v2012 = vld [vmem:[%s37 + $0x148] sm:$0xff]
        %v2013 = vld [vmem:[%s37 + $0x150] sm:$0xff]
        %v2014 = vld [vmem:[%s37 + $0x158] sm:$0xff]
        %v2015 = vld [vmem:[%s37 + $0x160] sm:$0xff]
        %v2016 = vld [vmem:[%s37 + $0x168] sm:$0xff]
        %v2017 = vld [vmem:[%s37 + $0x170] sm:$0xff]
        %v2018 = vld [vmem:[%s37 + $0x178] sm:$0xff]
        %v2019 = vld [vmem:[%s37 + $0x180] sm:$0xff]
        %v2020 = vld [vmem:[%s37 + $0x188] sm:$0xff]
        %v2021 = vld [vmem:[%s37 + $0x190] sm:$0xff]
        %v2022 = vld [vmem:[%s37 + $0x198] sm:$0xff]
        %v2023 = vld [vmem:[%s37 + $0x1a0] sm:$0xff]
        %v2024 = vld [vmem:[%s37 + $0x1a8] sm:$0xff]
        %v2025 = vld [vmem:[%s37 + $0x1b0] sm:$0xff]
        %v2026 = vld [vmem:[%s37 + $0x1b8] sm:$0xff]
        %v2027 = vld [vmem:[%s37 + $0x1c0] sm:$0xff]
        %v2028 = vld [vmem:[%s37 + $0x1c8] sm:$0xff]
        %v2029 = vld [vmem:[%s37 + $0x1d0] sm:$0xff]
        %v2030 = vld [vmem:[%s37 + $0x1d8] sm:$0xff]
        %v2031 = vld [vmem:[%s37 + $0x1e0] sm:$0xff]
        %v2032 = vld [vmem:[%s37 + $0x1e8] sm:$0xff]
        %v2033 = vld [vmem:[%s37 + $0x1f0] sm:$0xff]
        %v2034 = vld [vmem:[%s37 + $0x1f8] sm:$0xff]
        %v2035 = vld [vmem:[%s39] sm:$0x1]
        %v2037 = vperm.slane %v2035, 0
        %2039 = vmatpush.msra.mxu0 %v1986
        %2040 = vmatpush.msra.mxu0 %v1985
        %2041 = vmatpush.msra.mxu0 %v1984
        %2042 = vmatpush.msra.mxu0 %v1983
        %2043 = vmatpush.msra.mxu0 %v1982
        %2044 = vmatpush.msra.mxu0 %v1981
        %2045 = vmatpush.msra.mxu0 %v1980
        %2046 = vmatpush.msra.mxu0 %v1979
        %2047 = vmatpush.msra.mxu0 %v1978
        %2048 = vmatpush.msra.mxu0 %v1977
        %2049 = vmatpush.msra.mxu0 %v1976
        %2050 = vmatpush.msra.mxu0 %v1975
        %2051 = vmatpush.msra.mxu0 %v1974
        %2052 = vmatpush.msra.mxu0 %v1973
        %2053 = vmatpush.msra.mxu0 %v1972
        %2054 = vmatpush.msra.mxu0 %v1971
        %2055 = vmatmul.f32.gmra.mxu0 %v1935
        %v2056 = vpop.f32.mrf.mxu0
        %v2057 = vadd.f32 %v2037, %v2056
        %2058 = vdwg.mxu0
        %2059 = vmatpush.msra.mxu0 %v2002
        %2060 = vmatpush.msra.mxu0 %v2001
        %2061 = vmatpush.msra.mxu0 %v2000
        %2062 = vmatpush.msra.mxu0 %v1999
        %2063 = vmatpush.msra.mxu0 %v1998
        %2064 = vmatpush.msra.mxu0 %v1997
        %2065 = vmatpush.msra.mxu0 %v1996
        %2066 = vmatpush.msra.mxu0 %v1995
        %2067 = vmatpush.msra.mxu0 %v1994
        %2068 = vmatpush.msra.mxu0 %v1993
        %2069 = vmatpush.msra.mxu0 %v1992
        %2070 = vmatpush.msra.mxu0 %v1991
        %2071 = vmatpush.msra.mxu0 %v1990
        %2072 = vmatpush.msra.mxu0 %v1989
        %2073 = vmatpush.msra.mxu0 %v1988
        %2074 = vmatpush.msra.mxu0 %v1987
        %2075 = vmatmul.f32.gmra.mxu0 %v1936
        %v2076 = vpop.f32.mrf.mxu0
        %v2077 = vadd.f32 %v2057, %v2076
        %2078 = vdwg.mxu0
        %2079 = vmatpush.msra.mxu0 %v2018
        %2080 = vmatpush.msra.mxu0 %v2017
        %2081 = vmatpush.msra.mxu0 %v2016
        %2082 = vmatpush.msra.mxu0 %v2015
        %2083 = vmatpush.msra.mxu0 %v2014
        %2084 = vmatpush.msra.mxu0 %v2013
        %2085 = vmatpush.msra.mxu0 %v2012
        %2086 = vmatpush.msra.mxu0 %v2011
        %2087 = vmatpush.msra.mxu0 %v2010
        %2088 = vmatpush.msra.mxu0 %v2009
        %2089 = vmatpush.msra.mxu0 %v2008
        %2090 = vmatpush.msra.mxu0 %v2007
        %2091 = vmatpush.msra.mxu0 %v2006
        %2092 = vmatpush.msra.mxu0 %v2005
        %2093 = vmatpush.msra.mxu0 %v2004
        %2094 = vmatpush.msra.mxu0 %v2003
        %2095 = vmatmul.f32.gmra.mxu0 %v1937
        %v2096 = vpop.f32.mrf.mxu0
        %v2097 = vadd.f32 %v2077, %v2096
        %2098 = vdwg.mxu0
        %2099 = vmatpush.msra.mxu0 %v2034
        %2100 = vmatpush.msra.mxu0 %v2033
        %2101 = vmatpush.msra.mxu0 %v2032
        %2102 = vmatpush.msra.mxu0 %v2031
        %2103 = vmatpush.msra.mxu0 %v2030
        %2104 = vmatpush.msra.mxu0 %v2029
        %2105 = vmatpush.msra.mxu0 %v2028
        %2106 = vmatpush.msra.mxu0 %v2027
        %2107 = vmatpush.msra.mxu0 %v2026
        %2108 = vmatpush.msra.mxu0 %v2025
        %2109 = vmatpush.msra.mxu0 %v2024
        %2110 = vmatpush.msra.mxu0 %v2023
        %2111 = vmatpush.msra.mxu0 %v2022
        %2112 = vmatpush.msra.mxu0 %v2021
        %2113 = vmatpush.msra.mxu0 %v2020
        %2114 = vmatpush.msra.mxu0 %v2019
        %2115 = vmatmul.f32.gmra.mxu0 %v1938
        %v2116 = vpop.f32.mrf.mxu0
        %v2117 = vadd.f32 %v2097, %v2116
        %2118 = vdwg.mxu0
        %2119 = vmatpush.msra.mxu0 %v1986
        %2120 = vmatpush.msra.mxu0 %v1985
        %2121 = vmatpush.msra.mxu0 %v1984
        %2122 = vmatpush.msra.mxu0 %v1983
        %2123 = vmatpush.msra.mxu0 %v1982
        %2124 = vmatpush.msra.mxu0 %v1981
        %2125 = vmatpush.msra.mxu0 %v1980
        %2126 = vmatpush.msra.mxu0 %v1979
        %2127 = vmatpush.msra.mxu0 %v1978
        %2128 = vmatpush.msra.mxu0 %v1977
        %2129 = vmatpush.msra.mxu0 %v1976
        %2130 = vmatpush.msra.mxu0 %v1975
        %2131 = vmatpush.msra.mxu0 %v1974
        %2132 = vmatpush.msra.mxu0 %v1973
        %2133 = vmatpush.msra.mxu0 %v1972
        %2134 = vmatpush.msra.mxu0 %v1971
        %2135 = vmatmul.f32.gmra.mxu0 %v1951
        %v2136 = vpop.f32.mrf.mxu0
        %v2137 = vadd.f32 %v2037, %v2136
        %2138 = vdwg.mxu0
        %2139 = vmatpush.msra.mxu0 %v2002
        %2140 = vmatpush.msra.mxu0 %v2001
        %2141 = vmatpush.msra.mxu0 %v2000
        %2142 = vmatpush.msra.mxu0 %v1999
        %2143 = vmatpush.msra.mxu0 %v1998
        %2144 = vmatpush.msra.mxu0 %v1997
        %2145 = vmatpush.msra.mxu0 %v1996
        %2146 = vmatpush.msra.mxu0 %v1995
        %2147 = vmatpush.msra.mxu0 %v1994
        %2148 = vmatpush.msra.mxu0 %v1993
        %2149 = vmatpush.msra.mxu0 %v1992
        %2150 = vmatpush.msra.mxu0 %v1991
        %2151 = vmatpush.msra.mxu0 %v1990
        %2152 = vmatpush.msra.mxu0 %v1989
        %2153 = vmatpush.msra.mxu0 %v1988
        %2154 = vmatpush.msra.mxu0 %v1987
        %2155 = vmatmul.f32.gmra.mxu0 %v1952
        %v2156 = vpop.f32.mrf.mxu0
        %v2157 = vadd.f32 %v2137, %v2156
        %2158 = vdwg.mxu0
        %2159 = vmatpush.msra.mxu0 %v2018
        %2160 = vmatpush.msra.mxu0 %v2017
        %2161 = vmatpush.msra.mxu0 %v2016
        %2162 = vmatpush.msra.mxu0 %v2015
        %2163 = vmatpush.msra.mxu0 %v2014
        %2164 = vmatpush.msra.mxu0 %v2013
        %2165 = vmatpush.msra.mxu0 %v2012
        %2166 = vmatpush.msra.mxu0 %v2011
        %2167 = vmatpush.msra.mxu0 %v2010
        %2168 = vmatpush.msra.mxu0 %v2009
        %2169 = vmatpush.msra.mxu0 %v2008
        %2170 = vmatpush.msra.mxu0 %v2007
        %2171 = vmatpush.msra.mxu0 %v2006
        %2172 = vmatpush.msra.mxu0 %v2005
        %2173 = vmatpush.msra.mxu0 %v2004
        %2174 = vmatpush.msra.mxu0 %v2003
        %2175 = vmatmul.f32.gmra.mxu0 %v1953
        %v2176 = vpop.f32.mrf.mxu0
        %v2177 = vadd.f32 %v2157, %v2176
        %2178 = vdwg.mxu0
        %2179 = vmatpush.msra.mxu0 %v2034
        %2180 = vmatpush.msra.mxu0 %v2033
        %2181 = vmatpush.msra.mxu0 %v2032
        %2182 = vmatpush.msra.mxu0 %v2031
        %2183 = vmatpush.msra.mxu0 %v2030
        %2184 = vmatpush.msra.mxu0 %v2029
        %2185 = vmatpush.msra.mxu0 %v2028
        %2186 = vmatpush.msra.mxu0 %v2027
        %2187 = vmatpush.msra.mxu0 %v2026
        %2188 = vmatpush.msra.mxu0 %v2025
        %2189 = vmatpush.msra.mxu0 %v2024
        %2190 = vmatpush.msra.mxu0 %v2023
        %2191 = vmatpush.msra.mxu0 %v2022
        %2192 = vmatpush.msra.mxu0 %v2021
        %2193 = vmatpush.msra.mxu0 %v2020
        %2194 = vmatpush.msra.mxu0 %v2019
        %2195 = vmatmul.f32.gmra.mxu0 %v1954
        %v2196 = vpop.f32.mrf.mxu0
        %v2197 = vadd.f32 %v2177, %v2196
        %2198 = vdwg.mxu0
        %2199 = vmatpush.msra.mxu0 %v1986
        %2200 = vmatpush.msra.mxu0 %v1985
        %2201 = vmatpush.msra.mxu0 %v1984
        %2202 = vmatpush.msra.mxu0 %v1983
        %2203 = vmatpush.msra.mxu0 %v1982
        %2204 = vmatpush.msra.mxu0 %v1981
        %2205 = vmatpush.msra.mxu0 %v1980
        %2206 = vmatpush.msra.mxu0 %v1979
        %2207 = vmatpush.msra.mxu0 %v1978
        %2208 = vmatpush.msra.mxu0 %v1977
        %2209 = vmatpush.msra.mxu0 %v1976
        %2210 = vmatpush.msra.mxu0 %v1975
        %2211 = vmatpush.msra.mxu0 %v1974
        %2212 = vmatpush.msra.mxu0 %v1973
        %2213 = vmatpush.msra.mxu0 %v1972
        %2214 = vmatpush.msra.mxu0 %v1971
        %2215 = vmatmul.f32.gmra.mxu0 %v1967
        %v2216 = vpop.f32.mrf.mxu0
        %v2217 = vadd.f32 %v2037, %v2216
        %2218 = vdwg.mxu0
        %2219 = vmatpush.msra.mxu0 %v2002
        %2220 = vmatpush.msra.mxu0 %v2001
        %2221 = vmatpush.msra.mxu0 %v2000
        %2222 = vmatpush.msra.mxu0 %v1999
        %2223 = vmatpush.msra.mxu0 %v1998
        %2224 = vmatpush.msra.mxu0 %v1997
        %2225 = vmatpush.msra.mxu0 %v1996
        %2226 = vmatpush.msra.mxu0 %v1995
        %2227 = vmatpush.msra.mxu0 %v1994
        %2228 = vmatpush.msra.mxu0 %v1993
        %2229 = vmatpush.msra.mxu0 %v1992
        %2230 = vmatpush.msra.mxu0 %v1991
        %2231 = vmatpush.msra.mxu0 %v1990
        %2232 = vmatpush.msra.mxu0 %v1989
        %2233 = vmatpush.msra.mxu0 %v1988
        %2234 = vmatpush.msra.mxu0 %v1987
        %2235 = vmatmul.f32.gmra.mxu0 %v1968
        %v2236 = vpop.f32.mrf.mxu0
        %v2237 = vadd.f32 %v2217, %v2236
        %2238 = vdwg.mxu0
        %2239 = vmatpush.msra.mxu0 %v2018
        %2240 = vmatpush.msra.mxu0 %v2017
        %2241 = vmatpush.msra.mxu0 %v2016
        %2242 = vmatpush.msra.mxu0 %v2015
        %2243 = vmatpush.msra.mxu0 %v2014
        %2244 = vmatpush.msra.mxu0 %v2013
        %2245 = vmatpush.msra.mxu0 %v2012
        %2246 = vmatpush.msra.mxu0 %v2011
        %2247 = vmatpush.msra.mxu0 %v2010
        %2248 = vmatpush.msra.mxu0 %v2009
        %2249 = vmatpush.msra.mxu0 %v2008
        %2250 = vmatpush.msra.mxu0 %v2007
        %2251 = vmatpush.msra.mxu0 %v2006
        %2252 = vmatpush.msra.mxu0 %v2005
        %2253 = vmatpush.msra.mxu0 %v2004
        %2254 = vmatpush.msra.mxu0 %v2003
        %2255 = vmatmul.f32.gmra.mxu0 %v1969
        %v2256 = vpop.f32.mrf.mxu0
        %v2257 = vadd.f32 %v2237, %v2256
        %2258 = vdwg.mxu0
        %2259 = vmatpush.msra.mxu0 %v2034
        %2260 = vmatpush.msra.mxu0 %v2033
        %2261 = vmatpush.msra.mxu0 %v2032
        %2262 = vmatpush.msra.mxu0 %v2031
        %2263 = vmatpush.msra.mxu0 %v2030
        %2264 = vmatpush.msra.mxu0 %v2029
        %2265 = vmatpush.msra.mxu0 %v2028
        %2266 = vmatpush.msra.mxu0 %v2027
        %2267 = vmatpush.msra.mxu0 %v2026
        %2268 = vmatpush.msra.mxu0 %v2025
        %2269 = vmatpush.msra.mxu0 %v2024
        %2270 = vmatpush.msra.mxu0 %v2023
        %2271 = vmatpush.msra.mxu0 %v2022
        %2272 = vmatpush.msra.mxu0 %v2021
        %2273 = vmatpush.msra.mxu0 %v2020
        %2274 = vmatpush.msra.mxu0 %v2019
        %2275 = vmatmul.f32.gmra.mxu0 %v1970
        %v2276 = vpop.f32.mrf.mxu0
        %v2277 = vadd.f32 %v2257, %v2276
        %2278 = vdwg.mxu0
        %v2279 = vld [vmem:[%s41] sm:$0x1]
        %v2280 = vld [vmem:[%s43] sm:$0x1]
        %vm2281 = vcmask 518144
        %v2282 = vsel %vm2281, %v2117, 0.0
        %v2283 = vrot.slane %v2282, 4
        %v2284 = vadd.f32 %v2282, %v2283
        %v2285 = vrot.slane %v2284, 2
        %v2286 = vadd.f32 %v2284, %v2285
        %v2287 = vrot.slane %v2286, 1
        %v2288 = vadd.f32 %v2286, %v2287
        %v2289 = vadd.f32 %v2288, 0.0
        %v2290 = vsel %vm2281, %v2197, 0.0
        %v2291 = vrot.slane %v2290, 4
        %v2292 = vadd.f32 %v2290, %v2291
        %v2293 = vrot.slane %v2292, 2
        %v2294 = vadd.f32 %v2292, %v2293
        %v2295 = vrot.slane %v2294, 1
        %v2296 = vadd.f32 %v2294, %v2295
        %v2297 = vadd.f32 %v2289, %v2296
        %v2298 = vsel %vm2281, %v2277, 0.0
        %v2299 = vrot.slane %v2298, 4
        %v2300 = vadd.f32 %v2298, %v2299
        %v2301 = vrot.slane %v2300, 2
        %v2302 = vadd.f32 %v2300, %v2301
        %v2303 = vrot.slane %v2302, 1
        %v2304 = vadd.f32 %v2302, %v2303
        %v2305 = vadd.f32 %v2297, %v2304
        %v2306 = vmul.f32 %v2305, %v1732
        %v2307 = vsub.f32 %v2117, %v2306
        %v2308 = vmul.f32 %v2307, %v2307
        %v2309 = vsel %vm2281, %v2308, 0.0
        %v2310 = vrot.slane %v2309, 4
        %v2311 = vadd.f32 %v2309, %v2310
        %v2312 = vrot.slane %v2311, 2
        %v2313 = vadd.f32 %v2311, %v2312
        %v2314 = vrot.slane %v2313, 1
        %v2315 = vadd.f32 %v2313, %v2314
        %v2316 = vadd.f32 %v2315, 0.0
        %v2317 = vsub.f32 %v2197, %v2306
        %v2318 = vmul.f32 %v2317, %v2317
        %v2319 = vsel %vm2281, %v2318, 0.0
        %v2320 = vrot.slane %v2319, 4
        %v2321 = vadd.f32 %v2319, %v2320
        %v2322 = vrot.slane %v2321, 2
        %v2323 = vadd.f32 %v2321, %v2322
        %v2324 = vrot.slane %v2323, 1
        %v2325 = vadd.f32 %v2323, %v2324
        %v2326 = vadd.f32 %v2316, %v2325
        %v2327 = vsub.f32 %v2277, %v2306
        %v2328 = vmul.f32 %v2327, %v2327
        %v2329 = vsel %vm2281, %v2328, 0.0
        %v2330 = vrot.slane %v2329, 4
        %v2331 = vadd.f32 %v2329, %v2330
        %v2332 = vrot.slane %v2331, 2
        %v2333 = vadd.f32 %v2331, %v2332
        %v2334 = vrot.slane %v2333, 1
        %v2335 = vadd.f32 %v2333, %v2334
        %v2336 = vadd.f32 %v2326, %v2335
        %v2337 = vmul.f32 %v2336, %v1732
        %v2338 = vadd.f32 %v2337, 1e-05
        %v2339 = vrsqrt.pop %v2338
        %v2340 = vmul.f32 %v2339, %v2338
        %v2341 = vmul.f32 %v2340, %v2339
        %v2342 = vmul.f32 0.5, %v2341
        %v2343 = vsub.f32 1.5, %v2342
        %v2344 = vmul.f32 %v2339, %v2343
        %vm2345 = vweird.f32 %v2338
        %vm2346 = vweird.f32 %v2339
        %vm2347 = vmor %vm2345, %vm2346
        %v2348 = vsel %vm2347, %v2339, %v2344
        %v2349 = vmul.f32 %v2307, %v2348
        %v2351 = vperm.slane %v2279, 0
        %v2353 = vmul.f32 %v2349, %v2351
        %v2355 = vperm.slane %v2280, 0
        %v2357 = vadd.f32 %v2353, %v2355
        %v2358 = vmax.f32 %v2357, 0.0
        %v2359 = vmul.f32 %v2317, %v2348
        %v2360 = vmul.f32 %v2359, %v2351
        %v2361 = vadd.f32 %v2360, %v2355
        %v2362 = vmax.f32 %v2361, 0.0
        %v2363 = vmul.f32 %v2327, %v2348
        %v2364 = vmul.f32 %v2363, %v2351
        %v2365 = vadd.f32 %v2364, %v2355
        %v2366 = vmax.f32 %v2365, 0.0
        %v2367 = vsel %vm2281, %v2358, -inf
        %v2368 = vrot.slane %v2367, 4
        %v2369 = vmax.f32 %v2367, %v2368
        %v2370 = vrot.slane %v2369, 2
        %v2371 = vmax.f32 %v2369, %v2370
        %v2372 = vrot.slane %v2371, 1
        %v2373 = vmax.f32 %v2371, %v2372
        %v2374 = vsel %vm2281, %v2362, -inf
        %v2375 = vrot.slane %v2374, 4
        %v2376 = vmax.f32 %v2374, %v2375
        %v2377 = vrot.slane %v2376, 2
        %v2378 = vmax.f32 %v2376, %v2377
        %v2379 = vrot.slane %v2378, 1
        %v2380 = vmax.f32 %v2378, %v2379
        %v2381 = vsel %vm2281, %v2366, -inf
        %v2382 = vrot.slane %v2381, 4
        %v2383 = vmax.f32 %v2381, %v2382
        %v2384 = vrot.slane %v2383, 2
        %v2385 = vmax.f32 %v2383, %v2384
        %v2386 = vrot.slane %v2385, 1
        %v2387 = vmax.f32 %v2385, %v2386
        %v2388 = vrot.slane %v1114, 3
        %2389 = vrot.lane.b32.xlu0 %v2388, 32
        %v2390 = vpop.permute.xlu0 %2389
        %v2391 = vsel %vm1022, %v2390, 0
        %2393 = vmatpush.msra.mxu0 0.0
        %2394 = vmatpush.msra.mxu0 0.0
        %2395 = vmatpush.msra.mxu0 0.0
        %2396 = vmatpush.msra.mxu0 0.0
        %2397 = vmatpush.msra.mxu0 0.0
        %2398 = vmatpush.msra.mxu0 0.0
        %2399 = vmatpush.msra.mxu0 0.0
        %2400 = vmatpush.msra.mxu0 0.0
        %2401 = vmatpush.msra.mxu0 0.0
        %2402 = vmatpush.msra.mxu0 0.0
        %2403 = vmatpush.msra.mxu0 0.0
        %2404 = vmatpush.msra.mxu0 0.0
        %2405 = vmatpush.msra.mxu0 %v1171
        %2406 = vmatpush.msra.mxu0 %v1167
        %2407 = vmatpush.msra.mxu0 %v1163
        %2408 = vmatpush.msra.mxu0 %v1159
        %2409 = vmatmul.f32.gmra.mxu0 %v2391
        %v2410 = vpop.f32.mrf.mxu0
        %v2411 = vadd.f32 0.0, %v2410
        %2412 = vdwg.mxu0
        %2413 = vmatpush.msra.mxu0 0.0
        %2414 = vmatpush.msra.mxu0 0.0
        %2415 = vmatpush.msra.mxu0 0.0
        %2416 = vmatpush.msra.mxu0 0.0
        %2417 = vmatpush.msra.mxu0 0.0
        %2418 = vmatpush.msra.mxu0 0.0
        %2419 = vmatpush.msra.mxu0 0.0
        %2420 = vmatpush.msra.mxu0 0.0
        %2421 = vmatpush.msra.mxu0 0.0
        %2422 = vmatpush.msra.mxu0 0.0
        %2423 = vmatpush.msra.mxu0 0.0
        %2424 = vmatpush.msra.mxu0 0.0
        %2425 = vmatpush.msra.mxu0 %v1172
        %2426 = vmatpush.msra.mxu0 %v1168
        %2427 = vmatpush.msra.mxu0 %v1164
        %2428 = vmatpush.msra.mxu0 %v1160
        %2429 = vmatmul.f32.gmra.mxu0 %v2391
        %v2430 = vpop.f32.mrf.mxu0
        %v2431 = vadd.f32 0.0, %v2430
        %2432 = vdwg.mxu0
        %2433 = vmatpush.msra.mxu0 0.0
        %2434 = vmatpush.msra.mxu0 0.0
        %2435 = vmatpush.msra.mxu0 0.0
        %2436 = vmatpush.msra.mxu0 0.0
        %2437 = vmatpush.msra.mxu0 0.0
        %2438 = vmatpush.msra.mxu0 0.0
        %2439 = vmatpush.msra.mxu0 0.0
        %2440 = vmatpush.msra.mxu0 0.0
        %2441 = vmatpush.msra.mxu0 0.0
        %2442 = vmatpush.msra.mxu0 0.0
        %2443 = vmatpush.msra.mxu0 0.0
        %2444 = vmatpush.msra.mxu0 0.0
        %2445 = vmatpush.msra.mxu0 %v1173
        %2446 = vmatpush.msra.mxu0 %v1169
        %2447 = vmatpush.msra.mxu0 %v1165
        %2448 = vmatpush.msra.mxu0 %v1161
        %2449 = vmatmul.f32.gmra.mxu0 %v2391
        %v2450 = vpop.f32.mrf.mxu0
        %v2451 = vadd.f32 0.0, %v2450
        %2452 = vdwg.mxu0
        %2453 = vmatpush.msra.mxu0 0.0
        %2454 = vmatpush.msra.mxu0 0.0
        %2455 = vmatpush.msra.mxu0 0.0
        %2456 = vmatpush.msra.mxu0 0.0
        %2457 = vmatpush.msra.mxu0 0.0
        %2458 = vmatpush.msra.mxu0 0.0
        %2459 = vmatpush.msra.mxu0 0.0
        %2460 = vmatpush.msra.mxu0 0.0
        %2461 = vmatpush.msra.mxu0 0.0
        %2462 = vmatpush.msra.mxu0 0.0
        %2463 = vmatpush.msra.mxu0 0.0
        %2464 = vmatpush.msra.mxu0 0.0
        %2465 = vmatpush.msra.mxu0 %v1174
        %2466 = vmatpush.msra.mxu0 %v1170
        %2467 = vmatpush.msra.mxu0 %v1166
        %2468 = vmatpush.msra.mxu0 %v1162
        %2469 = vmatmul.f32.gmra.mxu0 %v2391
        %v2470 = vpop.f32.mrf.mxu0
        %v2471 = vadd.f32 0.0, %v2470
        %2472 = vdwg.mxu0
        %v2473 = vperm.slane %v1155, 3
        %v2474 = vsub.f32 %v1155, %v2473
        %v2476 = vrot.slane %v2474, 3
        %v2477 = vsel %vm1262, %v2476, 0
        %2479 = vmatpush.msra.mxu0 0.0
        %2480 = vmatpush.msra.mxu0 0.0
        %2481 = vmatpush.msra.mxu0 0.0
        %2482 = vmatpush.msra.mxu0 0.0
        %2483 = vmatpush.msra.mxu0 0.0
        %2484 = vmatpush.msra.mxu0 0.0
        %2485 = vmatpush.msra.mxu0 0.0
        %2486 = vmatpush.msra.mxu0 0.0
        %2487 = vmatpush.msra.mxu0 0.0
        %2488 = vmatpush.msra.mxu0 0.0
        %2489 = vmatpush.msra.mxu0 0.0
        %2490 = vmatpush.msra.mxu0 0.0
        %2491 = vmatpush.msra.mxu0 0.0
        %2492 = vmatpush.msra.mxu0 0.0
        %2493 = vmatpush.msra.mxu0 0.0
        %2494 = vmatpush.msra.mxu0 %v1268
        %2495 = vmatmul.f32.gmra.mxu0 %v2477
        %v2496 = vpop.f32.mrf.mxu0
        %v2497 = vadd.f32 %v1260, %v2496
        %2498 = vdwg.mxu0
        %v2500 = vsel %vm1022, %v2497, 0
        %2502 = vmatpush.msra.mxu0 0.0
        %2503 = vmatpush.msra.mxu0 0.0
        %2504 = vmatpush.msra.mxu0 0.0
        %2505 = vmatpush.msra.mxu0 0.0
        %2506 = vmatpush.msra.mxu0 0.0
        %2507 = vmatpush.msra.mxu0 0.0
        %2508 = vmatpush.msra.mxu0 0.0
        %2509 = vmatpush.msra.mxu0 0.0
        %2510 = vmatpush.msra.mxu0 0.0
        %2511 = vmatpush.msra.mxu0 0.0
        %2512 = vmatpush.msra.mxu0 0.0
        %2513 = vmatpush.msra.mxu0 0.0
        %2514 = vmatpush.msra.mxu0 %v1302
        %2515 = vmatpush.msra.mxu0 %v1298
        %2516 = vmatpush.msra.mxu0 %v1294
        %2517 = vmatpush.msra.mxu0 %v1290
        %2518 = vmatmul.f32.gmra.mxu0 %v2500
        %v2519 = vpop.f32.mrf.mxu0
        %v2520 = vadd.f32 %v2411, %v2519
        %2521 = vdwg.mxu0
        %2522 = vmatpush.msra.mxu0 0.0
        %2523 = vmatpush.msra.mxu0 0.0
        %2524 = vmatpush.msra.mxu0 0.0
        %2525 = vmatpush.msra.mxu0 0.0
        %2526 = vmatpush.msra.mxu0 0.0
        %2527 = vmatpush.msra.mxu0 0.0
        %2528 = vmatpush.msra.mxu0 0.0
        %2529 = vmatpush.msra.mxu0 0.0
        %2530 = vmatpush.msra.mxu0 0.0
        %2531 = vmatpush.msra.mxu0 0.0
        %2532 = vmatpush.msra.mxu0 0.0
        %2533 = vmatpush.msra.mxu0 0.0
        %2534 = vmatpush.msra.mxu0 %v1303
        %2535 = vmatpush.msra.mxu0 %v1299
        %2536 = vmatpush.msra.mxu0 %v1295
        %2537 = vmatpush.msra.mxu0 %v1291
        %2538 = vmatmul.f32.gmra.mxu0 %v2500
        %v2539 = vpop.f32.mrf.mxu0
        %v2540 = vadd.f32 %v2431, %v2539
        %2541 = vdwg.mxu0
        %2542 = vmatpush.msra.mxu0 0.0
        %2543 = vmatpush.msra.mxu0 0.0
        %2544 = vmatpush.msra.mxu0 0.0
        %2545 = vmatpush.msra.mxu0 0.0
        %2546 = vmatpush.msra.mxu0 0.0
        %2547 = vmatpush.msra.mxu0 0.0
        %2548 = vmatpush.msra.mxu0 0.0
        %2549 = vmatpush.msra.mxu0 0.0
        %2550 = vmatpush.msra.mxu0 0.0
        %2551 = vmatpush.msra.mxu0 0.0
        %2552 = vmatpush.msra.mxu0 0.0
        %2553 = vmatpush.msra.mxu0 0.0
        %2554 = vmatpush.msra.mxu0 %v1304
        %2555 = vmatpush.msra.mxu0 %v1300
        %2556 = vmatpush.msra.mxu0 %v1296
        %2557 = vmatpush.msra.mxu0 %v1292
        %2558 = vmatmul.f32.gmra.mxu0 %v2500
        %v2559 = vpop.f32.mrf.mxu0
        %v2560 = vadd.f32 %v2451, %v2559
        %2561 = vdwg.mxu0
        %2562 = vmatpush.msra.mxu0 0.0
        %2563 = vmatpush.msra.mxu0 0.0
        %2564 = vmatpush.msra.mxu0 0.0
        %2565 = vmatpush.msra.mxu0 0.0
        %2566 = vmatpush.msra.mxu0 0.0
        %2567 = vmatpush.msra.mxu0 0.0
        %2568 = vmatpush.msra.mxu0 0.0
        %2569 = vmatpush.msra.mxu0 0.0
        %2570 = vmatpush.msra.mxu0 0.0
        %2571 = vmatpush.msra.mxu0 0.0
        %2572 = vmatpush.msra.mxu0 0.0
        %2573 = vmatpush.msra.mxu0 0.0
        %2574 = vmatpush.msra.mxu0 %v1305
        %2575 = vmatpush.msra.mxu0 %v1301
        %2576 = vmatpush.msra.mxu0 %v1297
        %2577 = vmatpush.msra.mxu0 %v1293
        %2578 = vmatmul.f32.gmra.mxu0 %v2500
        %v2579 = vpop.f32.mrf.mxu0
        %v2580 = vadd.f32 %v2471, %v2579
        %2581 = vdwg.mxu0
        %v2582 = vadd.f32 %v2520, %v1391
        %v2583 = vadd.f32 %v2540, %v1392
        %v2584 = vadd.f32 %v2560, %v1393
        %v2585 = vadd.f32 %v2580, %v1394
        %v2586 = vperm.slane %v1155, 4
        %v2587 = vsub.f32 %v1155, %v2586
        %v2589 = vrot.slane %v2587, 3
        %v2590 = vsel %vm1262, %v2589, 0
        %2592 = vmatpush.msra.mxu0 0.0
        %2593 = vmatpush.msra.mxu0 0.0
        %2594 = vmatpush.msra.mxu0 0.0
        %2595 = vmatpush.msra.mxu0 0.0
        %2596 = vmatpush.msra.mxu0 0.0
        %2597 = vmatpush.msra.mxu0 0.0
        %2598 = vmatpush.msra.mxu0 0.0
        %2599 = vmatpush.msra.mxu0 0.0
        %2600 = vmatpush.msra.mxu0 0.0
        %2601 = vmatpush.msra.mxu0 0.0
        %2602 = vmatpush.msra.mxu0 0.0
        %2603 = vmatpush.msra.mxu0 0.0
        %2604 = vmatpush.msra.mxu0 0.0
        %2605 = vmatpush.msra.mxu0 0.0
        %2606 = vmatpush.msra.mxu0 0.0
        %2607 = vmatpush.msra.mxu0 %v1268
        %2608 = vmatmul.f32.gmra.mxu0 %v2590
        %v2609 = vpop.f32.mrf.mxu0
        %v2610 = vadd.f32 %v1260, %v2609
        %2611 = vdwg.mxu0
        %v2613 = vsel %vm1022, %v2610, 0
        %2615 = vmatpush.msra.mxu0 0.0
        %2616 = vmatpush.msra.mxu0 0.0
        %2617 = vmatpush.msra.mxu0 0.0
        %2618 = vmatpush.msra.mxu0 0.0
        %2619 = vmatpush.msra.mxu0 0.0
        %2620 = vmatpush.msra.mxu0 0.0
        %2621 = vmatpush.msra.mxu0 0.0
        %2622 = vmatpush.msra.mxu0 0.0
        %2623 = vmatpush.msra.mxu0 0.0
        %2624 = vmatpush.msra.mxu0 0.0
        %2625 = vmatpush.msra.mxu0 0.0
        %2626 = vmatpush.msra.mxu0 0.0
        %2627 = vmatpush.msra.mxu0 %v1302
        %2628 = vmatpush.msra.mxu0 %v1298
        %2629 = vmatpush.msra.mxu0 %v1294
        %2630 = vmatpush.msra.mxu0 %v1290
        %2631 = vmatmul.f32.gmra.mxu0 %v2613
        %v2632 = vpop.f32.mrf.mxu0
        %v2633 = vadd.f32 %v2411, %v2632
        %2634 = vdwg.mxu0
        %2635 = vmatpush.msra.mxu0 0.0
        %2636 = vmatpush.msra.mxu0 0.0
        %2637 = vmatpush.msra.mxu0 0.0
        %2638 = vmatpush.msra.mxu0 0.0
        %2639 = vmatpush.msra.mxu0 0.0
        %2640 = vmatpush.msra.mxu0 0.0
        %2641 = vmatpush.msra.mxu0 0.0
        %2642 = vmatpush.msra.mxu0 0.0
        %2643 = vmatpush.msra.mxu0 0.0
        %2644 = vmatpush.msra.mxu0 0.0
        %2645 = vmatpush.msra.mxu0 0.0
        %2646 = vmatpush.msra.mxu0 0.0
        %2647 = vmatpush.msra.mxu0 %v1303
        %2648 = vmatpush.msra.mxu0 %v1299
        %2649 = vmatpush.msra.mxu0 %v1295
        %2650 = vmatpush.msra.mxu0 %v1291
        %2651 = vmatmul.f32.gmra.mxu0 %v2613
        %v2652 = vpop.f32.mrf.mxu0
        %v2653 = vadd.f32 %v2431, %v2652
        %2654 = vdwg.mxu0
        %2655 = vmatpush.msra.mxu0 0.0
        %2656 = vmatpush.msra.mxu0 0.0
        %2657 = vmatpush.msra.mxu0 0.0
        %2658 = vmatpush.msra.mxu0 0.0
        %2659 = vmatpush.msra.mxu0 0.0
        %2660 = vmatpush.msra.mxu0 0.0
        %2661 = vmatpush.msra.mxu0 0.0
        %2662 = vmatpush.msra.mxu0 0.0
        %2663 = vmatpush.msra.mxu0 0.0
        %2664 = vmatpush.msra.mxu0 0.0
        %2665 = vmatpush.msra.mxu0 0.0
        %2666 = vmatpush.msra.mxu0 0.0
        %2667 = vmatpush.msra.mxu0 %v1304
        %2668 = vmatpush.msra.mxu0 %v1300
        %2669 = vmatpush.msra.mxu0 %v1296
        %2670 = vmatpush.msra.mxu0 %v1292
        %2671 = vmatmul.f32.gmra.mxu0 %v2613
        %v2672 = vpop.f32.mrf.mxu0
        %v2673 = vadd.f32 %v2451, %v2672
        %2674 = vdwg.mxu0
        %2675 = vmatpush.msra.mxu0 0.0
        %2676 = vmatpush.msra.mxu0 0.0
        %2677 = vmatpush.msra.mxu0 0.0
        %2678 = vmatpush.msra.mxu0 0.0
        %2679 = vmatpush.msra.mxu0 0.0
        %2680 = vmatpush.msra.mxu0 0.0
        %2681 = vmatpush.msra.mxu0 0.0
        %2682 = vmatpush.msra.mxu0 0.0
        %2683 = vmatpush.msra.mxu0 0.0
        %2684 = vmatpush.msra.mxu0 0.0
        %2685 = vmatpush.msra.mxu0 0.0
        %2686 = vmatpush.msra.mxu0 0.0
        %2687 = vmatpush.msra.mxu0 %v1305
        %2688 = vmatpush.msra.mxu0 %v1301
        %2689 = vmatpush.msra.mxu0 %v1297
        %2690 = vmatpush.msra.mxu0 %v1293
        %2691 = vmatmul.f32.gmra.mxu0 %v2613
        %v2692 = vpop.f32.mrf.mxu0
        %v2693 = vadd.f32 %v2471, %v2692
        %2694 = vdwg.mxu0
        %v2695 = vadd.f32 %v2633, %v1391
        %v2696 = vadd.f32 %v2653, %v1392
        %v2697 = vadd.f32 %v2673, %v1393
        %v2698 = vadd.f32 %v2693, %v1394
        %v2699 = vperm.slane %v1155, 5
        %v2700 = vsub.f32 %v1155, %v2699
        %v2702 = vrot.slane %v2700, 3
        %v2703 = vsel %vm1262, %v2702, 0
        %2705 = vmatpush.msra.mxu0 0.0
        %2706 = vmatpush.msra.mxu0 0.0
        %2707 = vmatpush.msra.mxu0 0.0
        %2708 = vmatpush.msra.mxu0 0.0
        %2709 = vmatpush.msra.mxu0 0.0
        %2710 = vmatpush.msra.mxu0 0.0
        %2711 = vmatpush.msra.mxu0 0.0
        %2712 = vmatpush.msra.mxu0 0.0
        %2713 = vmatpush.msra.mxu0 0.0
        %2714 = vmatpush.msra.mxu0 0.0
        %2715 = vmatpush.msra.mxu0 0.0
        %2716 = vmatpush.msra.mxu0 0.0
        %2717 = vmatpush.msra.mxu0 0.0
        %2718 = vmatpush.msra.mxu0 0.0
        %2719 = vmatpush.msra.mxu0 0.0
        %2720 = vmatpush.msra.mxu0 %v1268
        %2721 = vmatmul.f32.gmra.mxu0 %v2703
        %v2722 = vpop.f32.mrf.mxu0
        %v2723 = vadd.f32 %v1260, %v2722
        %2724 = vdwg.mxu0
        %v2726 = vsel %vm1022, %v2723, 0
        %2728 = vmatpush.msra.mxu0 0.0
        %2729 = vmatpush.msra.mxu0 0.0
        %2730 = vmatpush.msra.mxu0 0.0
        %2731 = vmatpush.msra.mxu0 0.0
        %2732 = vmatpush.msra.mxu0 0.0
        %2733 = vmatpush.msra.mxu0 0.0
        %2734 = vmatpush.msra.mxu0 0.0
        %2735 = vmatpush.msra.mxu0 0.0
        %2736 = vmatpush.msra.mxu0 0.0
        %2737 = vmatpush.msra.mxu0 0.0
        %2738 = vmatpush.msra.mxu0 0.0
        %2739 = vmatpush.msra.mxu0 0.0
        %2740 = vmatpush.msra.mxu0 %v1302
        %2741 = vmatpush.msra.mxu0 %v1298
        %2742 = vmatpush.msra.mxu0 %v1294
        %2743 = vmatpush.msra.mxu0 %v1290
        %2744 = vmatmul.f32.gmra.mxu0 %v2726
        %v2745 = vpop.f32.mrf.mxu0
        %v2746 = vadd.f32 %v2411, %v2745
        %2747 = vdwg.mxu0
        %2748 = vmatpush.msra.mxu0 0.0
        %2749 = vmatpush.msra.mxu0 0.0
        %2750 = vmatpush.msra.mxu0 0.0
        %2751 = vmatpush.msra.mxu0 0.0
        %2752 = vmatpush.msra.mxu0 0.0
        %2753 = vmatpush.msra.mxu0 0.0
        %2754 = vmatpush.msra.mxu0 0.0
        %2755 = vmatpush.msra.mxu0 0.0
        %2756 = vmatpush.msra.mxu0 0.0
        %2757 = vmatpush.msra.mxu0 0.0
        %2758 = vmatpush.msra.mxu0 0.0
        %2759 = vmatpush.msra.mxu0 0.0
        %2760 = vmatpush.msra.mxu0 %v1303
        %2761 = vmatpush.msra.mxu0 %v1299
        %2762 = vmatpush.msra.mxu0 %v1295
        %2763 = vmatpush.msra.mxu0 %v1291
        %2764 = vmatmul.f32.gmra.mxu0 %v2726
        %v2765 = vpop.f32.mrf.mxu0
        %v2766 = vadd.f32 %v2431, %v2765
        %2767 = vdwg.mxu0
        %2768 = vmatpush.msra.mxu0 0.0
        %2769 = vmatpush.msra.mxu0 0.0
        %2770 = vmatpush.msra.mxu0 0.0
        %2771 = vmatpush.msra.mxu0 0.0
        %2772 = vmatpush.msra.mxu0 0.0
        %2773 = vmatpush.msra.mxu0 0.0
        %2774 = vmatpush.msra.mxu0 0.0
        %2775 = vmatpush.msra.mxu0 0.0
        %2776 = vmatpush.msra.mxu0 0.0
        %2777 = vmatpush.msra.mxu0 0.0
        %2778 = vmatpush.msra.mxu0 0.0
        %2779 = vmatpush.msra.mxu0 0.0
        %2780 = vmatpush.msra.mxu0 %v1304
        %2781 = vmatpush.msra.mxu0 %v1300
        %2782 = vmatpush.msra.mxu0 %v1296
        %2783 = vmatpush.msra.mxu0 %v1292
        %2784 = vmatmul.f32.gmra.mxu0 %v2726
        %v2785 = vpop.f32.mrf.mxu0
        %v2786 = vadd.f32 %v2451, %v2785
        %2787 = vdwg.mxu0
        %2788 = vmatpush.msra.mxu0 0.0
        %2789 = vmatpush.msra.mxu0 0.0
        %2790 = vmatpush.msra.mxu0 0.0
        %2791 = vmatpush.msra.mxu0 0.0
        %2792 = vmatpush.msra.mxu0 0.0
        %2793 = vmatpush.msra.mxu0 0.0
        %2794 = vmatpush.msra.mxu0 0.0
        %2795 = vmatpush.msra.mxu0 0.0
        %2796 = vmatpush.msra.mxu0 0.0
        %2797 = vmatpush.msra.mxu0 0.0
        %2798 = vmatpush.msra.mxu0 0.0
        %2799 = vmatpush.msra.mxu0 0.0
        %2800 = vmatpush.msra.mxu0 %v1305
        %2801 = vmatpush.msra.mxu0 %v1301
        %2802 = vmatpush.msra.mxu0 %v1297
        %2803 = vmatpush.msra.mxu0 %v1293
        %2804 = vmatmul.f32.gmra.mxu0 %v2726
        %v2805 = vpop.f32.mrf.mxu0
        %v2806 = vadd.f32 %v2471, %v2805
        %2807 = vdwg.mxu0
        %v2808 = vadd.f32 %v2746, %v1391
        %v2809 = vadd.f32 %v2766, %v1392
        %v2810 = vadd.f32 %v2786, %v1393
        %v2811 = vadd.f32 %v2806, %v1394
        %v2812 = vsel %vm1629, %v2582, 0.0
        %v2813 = vrot.slane %v2812, 4
        %v2814 = vadd.f32 %v2812, %v2813
        %v2815 = vrot.slane %v2814, 2
        %v2816 = vadd.f32 %v2814, %v2815
        %v2817 = vrot.slane %v2816, 1
        %v2818 = vadd.f32 %v2816, %v2817
        %v2819 = vsel %vm1629, %v2583, 0.0
        %v2820 = vrot.slane %v2819, 4
        %v2821 = vadd.f32 %v2819, %v2820
        %v2822 = vrot.slane %v2821, 2
        %v2823 = vadd.f32 %v2821, %v2822
        %v2824 = vrot.slane %v2823, 1
        %v2825 = vadd.f32 %v2823, %v2824
        %v2826 = vsel %vm1629, %v2584, 0.0
        %v2827 = vrot.slane %v2826, 4
        %v2828 = vadd.f32 %v2826, %v2827
        %v2829 = vrot.slane %v2828, 2
        %v2830 = vadd.f32 %v2828, %v2829
        %v2831 = vrot.slane %v2830, 1
        %v2832 = vadd.f32 %v2830, %v2831
        %v2833 = vsel %vm1629, %v2585, 0.0
        %v2834 = vrot.slane %v2833, 4
        %v2835 = vadd.f32 %v2833, %v2834
        %v2836 = vrot.slane %v2835, 2
        %v2837 = vadd.f32 %v2835, %v2836
        %v2838 = vrot.slane %v2837, 1
        %v2839 = vadd.f32 %v2837, %v2838
        %v2840 = vadd.f32 %v2818, 0.0
        %v2841 = vadd.f32 %v2825, 0.0
        %v2842 = vadd.f32 %v2832, 0.0
        %v2843 = vadd.f32 %v2839, 0.0
        %v2844 = vsel %vm1629, %v2695, 0.0
        %v2845 = vrot.slane %v2844, 4
        %v2846 = vadd.f32 %v2844, %v2845
        %v2847 = vrot.slane %v2846, 2
        %v2848 = vadd.f32 %v2846, %v2847
        %v2849 = vrot.slane %v2848, 1
        %v2850 = vadd.f32 %v2848, %v2849
        %v2851 = vsel %vm1629, %v2696, 0.0
        %v2852 = vrot.slane %v2851, 4
        %v2853 = vadd.f32 %v2851, %v2852
        %v2854 = vrot.slane %v2853, 2
        %v2855 = vadd.f32 %v2853, %v2854
        %v2856 = vrot.slane %v2855, 1
        %v2857 = vadd.f32 %v2855, %v2856
        %v2858 = vsel %vm1629, %v2697, 0.0
        %v2859 = vrot.slane %v2858, 4
        %v2860 = vadd.f32 %v2858, %v2859
        %v2861 = vrot.slane %v2860, 2
        %v2862 = vadd.f32 %v2860, %v2861
        %v2863 = vrot.slane %v2862, 1
        %v2864 = vadd.f32 %v2862, %v2863
        %v2865 = vsel %vm1629, %v2698, 0.0
        %v2866 = vrot.slane %v2865, 4
        %v2867 = vadd.f32 %v2865, %v2866
        %v2868 = vrot.slane %v2867, 2
        %v2869 = vadd.f32 %v2867, %v2868
        %v2870 = vrot.slane %v2869, 1
        %v2871 = vadd.f32 %v2869, %v2870
        %v2872 = vadd.f32 %v2840, %v2850
        %v2873 = vadd.f32 %v2841, %v2857
        %v2874 = vadd.f32 %v2842, %v2864
        %v2875 = vadd.f32 %v2843, %v2871
        %v2876 = vsel %vm1629, %v2808, 0.0
        %v2877 = vrot.slane %v2876, 4
        %v2878 = vadd.f32 %v2876, %v2877
        %v2879 = vrot.slane %v2878, 2
        %v2880 = vadd.f32 %v2878, %v2879
        %v2881 = vrot.slane %v2880, 1
        %v2882 = vadd.f32 %v2880, %v2881
        %v2883 = vsel %vm1629, %v2809, 0.0
        %v2884 = vrot.slane %v2883, 4
        %v2885 = vadd.f32 %v2883, %v2884
        %v2886 = vrot.slane %v2885, 2
        %v2887 = vadd.f32 %v2885, %v2886
        %v2888 = vrot.slane %v2887, 1
        %v2889 = vadd.f32 %v2887, %v2888
        %v2890 = vsel %vm1629, %v2810, 0.0
        %v2891 = vrot.slane %v2890, 4
        %v2892 = vadd.f32 %v2890, %v2891
        %v2893 = vrot.slane %v2892, 2
        %v2894 = vadd.f32 %v2892, %v2893
        %v2895 = vrot.slane %v2894, 1
        %v2896 = vadd.f32 %v2894, %v2895
        %v2897 = vsel %vm1629, %v2811, 0.0
        %v2898 = vrot.slane %v2897, 4
        %v2899 = vadd.f32 %v2897, %v2898
        %v2900 = vrot.slane %v2899, 2
        %v2901 = vadd.f32 %v2899, %v2900
        %v2902 = vrot.slane %v2901, 1
        %v2903 = vadd.f32 %v2901, %v2902
        %v2904 = vadd.f32 %v2872, %v2882
        %v2905 = vadd.f32 %v2873, %v2889
        %v2906 = vadd.f32 %v2874, %v2896
        %v2907 = vadd.f32 %v2875, %v2903
        %v2908 = vmul.f32 %v2904, %v1732
        %v2909 = vmul.f32 %v2905, %v1732
        %v2910 = vmul.f32 %v2906, %v1732
        %v2911 = vmul.f32 %v2907, %v1732
        %v2912 = vsub.f32 %v2582, %v2908
        %v2913 = vsub.f32 %v2583, %v2909
        %v2914 = vsub.f32 %v2584, %v2910
        %v2915 = vsub.f32 %v2585, %v2911
        %v2916 = vmul.f32 %v2912, %v2912
        %v2917 = vmul.f32 %v2913, %v2913
        %v2918 = vmul.f32 %v2914, %v2914
        %v2919 = vmul.f32 %v2915, %v2915
        %v2920 = vsel %vm1629, %v2916, 0.0
        %v2921 = vrot.slane %v2920, 4
        %v2922 = vadd.f32 %v2920, %v2921
        %v2923 = vrot.slane %v2922, 2
        %v2924 = vadd.f32 %v2922, %v2923
        %v2925 = vrot.slane %v2924, 1
        %v2926 = vadd.f32 %v2924, %v2925
        %v2927 = vsel %vm1629, %v2917, 0.0
        %v2928 = vrot.slane %v2927, 4
        %v2929 = vadd.f32 %v2927, %v2928
        %v2930 = vrot.slane %v2929, 2
        %v2931 = vadd.f32 %v2929, %v2930
        %v2932 = vrot.slane %v2931, 1
        %v2933 = vadd.f32 %v2931, %v2932
        %v2934 = vsel %vm1629, %v2918, 0.0
        %v2935 = vrot.slane %v2934, 4
        %v2936 = vadd.f32 %v2934, %v2935
        %v2937 = vrot.slane %v2936, 2
        %v2938 = vadd.f32 %v2936, %v2937
        %v2939 = vrot.slane %v2938, 1
        %v2940 = vadd.f32 %v2938, %v2939
        %v2941 = vsel %vm1629, %v2919, 0.0
        %v2942 = vrot.slane %v2941, 4
        %v2943 = vadd.f32 %v2941, %v2942
        %v2944 = vrot.slane %v2943, 2
        %v2945 = vadd.f32 %v2943, %v2944
        %v2946 = vrot.slane %v2945, 1
        %v2947 = vadd.f32 %v2945, %v2946
        %v2948 = vadd.f32 %v2926, 0.0
        %v2949 = vadd.f32 %v2933, 0.0
        %v2950 = vadd.f32 %v2940, 0.0
        %v2951 = vadd.f32 %v2947, 0.0
        %v2952 = vsub.f32 %v2695, %v2908
        %v2953 = vsub.f32 %v2696, %v2909
        %v2954 = vsub.f32 %v2697, %v2910
        %v2955 = vsub.f32 %v2698, %v2911
        %v2956 = vmul.f32 %v2952, %v2952
        %v2957 = vmul.f32 %v2953, %v2953
        %v2958 = vmul.f32 %v2954, %v2954
        %v2959 = vmul.f32 %v2955, %v2955
        %v2960 = vsel %vm1629, %v2956, 0.0
        %v2961 = vrot.slane %v2960, 4
        %v2962 = vadd.f32 %v2960, %v2961
        %v2963 = vrot.slane %v2962, 2
        %v2964 = vadd.f32 %v2962, %v2963
        %v2965 = vrot.slane %v2964, 1
        %v2966 = vadd.f32 %v2964, %v2965
        %v2967 = vsel %vm1629, %v2957, 0.0
        %v2968 = vrot.slane %v2967, 4
        %v2969 = vadd.f32 %v2967, %v2968
        %v2970 = vrot.slane %v2969, 2
        %v2971 = vadd.f32 %v2969, %v2970
        %v2972 = vrot.slane %v2971, 1
        %v2973 = vadd.f32 %v2971, %v2972
        %v2974 = vsel %vm1629, %v2958, 0.0
        %v2975 = vrot.slane %v2974, 4
        %v2976 = vadd.f32 %v2974, %v2975
        %v2977 = vrot.slane %v2976, 2
        %v2978 = vadd.f32 %v2976, %v2977
        %v2979 = vrot.slane %v2978, 1
        %v2980 = vadd.f32 %v2978, %v2979
        %v2981 = vsel %vm1629, %v2959, 0.0
        %v2982 = vrot.slane %v2981, 4
        %v2983 = vadd.f32 %v2981, %v2982
        %v2984 = vrot.slane %v2983, 2
        %v2985 = vadd.f32 %v2983, %v2984
        %v2986 = vrot.slane %v2985, 1
        %v2987 = vadd.f32 %v2985, %v2986
        %v2988 = vadd.f32 %v2948, %v2966
        %v2989 = vadd.f32 %v2949, %v2973
        %v2990 = vadd.f32 %v2950, %v2980
        %v2991 = vadd.f32 %v2951, %v2987
        %v2992 = vsub.f32 %v2808, %v2908
        %v2993 = vsub.f32 %v2809, %v2909
        %v2994 = vsub.f32 %v2810, %v2910
        %v2995 = vsub.f32 %v2811, %v2911
        %v2996 = vmul.f32 %v2992, %v2992
        %v2997 = vmul.f32 %v2993, %v2993
        %v2998 = vmul.f32 %v2994, %v2994
        %v2999 = vmul.f32 %v2995, %v2995
        %v3000 = vsel %vm1629, %v2996, 0.0
        %v3001 = vrot.slane %v3000, 4
        %v3002 = vadd.f32 %v3000, %v3001
        %v3003 = vrot.slane %v3002, 2
        %v3004 = vadd.f32 %v3002, %v3003
        %v3005 = vrot.slane %v3004, 1
        %v3006 = vadd.f32 %v3004, %v3005
        %v3007 = vsel %vm1629, %v2997, 0.0
        %v3008 = vrot.slane %v3007, 4
        %v3009 = vadd.f32 %v3007, %v3008
        %v3010 = vrot.slane %v3009, 2
        %v3011 = vadd.f32 %v3009, %v3010
        %v3012 = vrot.slane %v3011, 1
        %v3013 = vadd.f32 %v3011, %v3012
        %v3014 = vsel %vm1629, %v2998, 0.0
        %v3015 = vrot.slane %v3014, 4
        %v3016 = vadd.f32 %v3014, %v3015
        %v3017 = vrot.slane %v3016, 2
        %v3018 = vadd.f32 %v3016, %v3017
        %v3019 = vrot.slane %v3018, 1
        %v3020 = vadd.f32 %v3018, %v3019
        %v3021 = vsel %vm1629, %v2999, 0.0
        %v3022 = vrot.slane %v3021, 4
        %v3023 = vadd.f32 %v3021, %v3022
        %v3024 = vrot.slane %v3023, 2
        %v3025 = vadd.f32 %v3023, %v3024
        %v3026 = vrot.slane %v3025, 1
        %v3027 = vadd.f32 %v3025, %v3026
        %v3028 = vadd.f32 %v2988, %v3006
        %v3029 = vadd.f32 %v2989, %v3013
        %v3030 = vadd.f32 %v2990, %v3020
        %v3031 = vadd.f32 %v2991, %v3027
        %v3032 = vmul.f32 %v3028, %v1732
        %v3033 = vmul.f32 %v3029, %v1732
        %v3034 = vmul.f32 %v3030, %v1732
        %v3035 = vmul.f32 %v3031, %v1732
        %v3036 = vadd.f32 %v3032, 1e-05
        %v3037 = vadd.f32 %v3033, 1e-05
        %v3038 = vadd.f32 %v3034, 1e-05
        %v3039 = vadd.f32 %v3035, 1e-05
        %v3040 = vrsqrt.pop %v3036
        %v3041 = vmul.f32 %v3040, %v3036
        %v3042 = vmul.f32 %v3041, %v3040
        %v3043 = vmul.f32 0.5, %v3042
        %v3044 = vsub.f32 1.5, %v3043
        %v3045 = vmul.f32 %v3040, %v3044
        %vm3046 = vweird.f32 %v3036
        %vm3047 = vweird.f32 %v3040
        %vm3048 = vmor %vm3046, %vm3047
        %v3049 = vsel %vm3048, %v3040, %v3045
        %v3050 = vrsqrt.pop %v3037
        %v3051 = vmul.f32 %v3050, %v3037
        %v3052 = vmul.f32 %v3051, %v3050
        %v3053 = vmul.f32 0.5, %v3052
        %v3054 = vsub.f32 1.5, %v3053
        %v3055 = vmul.f32 %v3050, %v3054
        %vm3056 = vweird.f32 %v3037
        %vm3057 = vweird.f32 %v3050
        %vm3058 = vmor %vm3056, %vm3057
        %v3059 = vsel %vm3058, %v3050, %v3055
        %v3060 = vrsqrt.pop %v3038
        %v3061 = vmul.f32 %v3060, %v3038
        %v3062 = vmul.f32 %v3061, %v3060
        %v3063 = vmul.f32 0.5, %v3062
        %v3064 = vsub.f32 1.5, %v3063
        %v3065 = vmul.f32 %v3060, %v3064
        %vm3066 = vweird.f32 %v3038
        %vm3067 = vweird.f32 %v3060
        %vm3068 = vmor %vm3066, %vm3067
        %v3069 = vsel %vm3068, %v3060, %v3065
        %v3070 = vrsqrt.pop %v3039
        %v3071 = vmul.f32 %v3070, %v3039
        %v3072 = vmul.f32 %v3071, %v3070
        %v3073 = vmul.f32 0.5, %v3072
        %v3074 = vsub.f32 1.5, %v3073
        %v3075 = vmul.f32 %v3070, %v3074
        %vm3076 = vweird.f32 %v3039
        %vm3077 = vweird.f32 %v3070
        %vm3078 = vmor %vm3076, %vm3077
        %v3079 = vsel %vm3078, %v3070, %v3075
        %v3080 = vmul.f32 %v2912, %v3049
        %v3081 = vmul.f32 %v2913, %v3059
        %v3082 = vmul.f32 %v2914, %v3069
        %v3083 = vmul.f32 %v2915, %v3079
        %v3084 = vmul.f32 %v3080, %v1910
        %v3085 = vmul.f32 %v3081, %v1911
        %v3086 = vmul.f32 %v3082, %v1912
        %v3087 = vmul.f32 %v3083, %v1913
        %v3088 = vadd.f32 %v3084, %v1923
        %v3089 = vadd.f32 %v3085, %v1924
        %v3090 = vadd.f32 %v3086, %v1925
        %v3091 = vadd.f32 %v3087, %v1926
        %v3092 = vmax.f32 %v3088, 0.0
        %v3093 = vmax.f32 %v3089, 0.0
        %v3094 = vmax.f32 %v3090, 0.0
        %v3095 = vmax.f32 %v3091, 0.0
        %v3096 = vmul.f32 %v2952, %v3049
        %v3097 = vmul.f32 %v2953, %v3059
        %v3098 = vmul.f32 %v2954, %v3069
        %v3099 = vmul.f32 %v2955, %v3079
        %v3100 = vmul.f32 %v3096, %v1910
        %v3101 = vmul.f32 %v3097, %v1911
        %v3102 = vmul.f32 %v3098, %v1912
        %v3103 = vmul.f32 %v3099, %v1913
        %v3104 = vadd.f32 %v3100, %v1923
        %v3105 = vadd.f32 %v3101, %v1924
        %v3106 = vadd.f32 %v3102, %v1925
        %v3107 = vadd.f32 %v3103, %v1926
        %v3108 = vmax.f32 %v3104, 0.0
        %v3109 = vmax.f32 %v3105, 0.0
        %v3110 = vmax.f32 %v3106, 0.0
        %v3111 = vmax.f32 %v3107, 0.0
        %v3112 = vmul.f32 %v2992, %v3049
        %v3113 = vmul.f32 %v2993, %v3059
        %v3114 = vmul.f32 %v2994, %v3069
        %v3115 = vmul.f32 %v2995, %v3079
        %v3116 = vmul.f32 %v3112, %v1910
        %v3117 = vmul.f32 %v3113, %v1911
        %v3118 = vmul.f32 %v3114, %v1912
        %v3119 = vmul.f32 %v3115, %v1913
        %v3120 = vadd.f32 %v3116, %v1923
        %v3121 = vadd.f32 %v3117, %v1924
        %v3122 = vadd.f32 %v3118, %v1925
        %v3123 = vadd.f32 %v3119, %v1926
        %v3124 = vmax.f32 %v3120, 0.0
        %v3125 = vmax.f32 %v3121, 0.0
        %v3126 = vmax.f32 %v3122, 0.0
        %v3127 = vmax.f32 %v3123, 0.0
        %3128 = vmatpush.msra.mxu0 %v1986
        %3129 = vmatpush.msra.mxu0 %v1985
        %3130 = vmatpush.msra.mxu0 %v1984
        %3131 = vmatpush.msra.mxu0 %v1983
        %3132 = vmatpush.msra.mxu0 %v1982
        %3133 = vmatpush.msra.mxu0 %v1981
        %3134 = vmatpush.msra.mxu0 %v1980
        %3135 = vmatpush.msra.mxu0 %v1979
        %3136 = vmatpush.msra.mxu0 %v1978
        %3137 = vmatpush.msra.mxu0 %v1977
        %3138 = vmatpush.msra.mxu0 %v1976
        %3139 = vmatpush.msra.mxu0 %v1975
        %3140 = vmatpush.msra.mxu0 %v1974
        %3141 = vmatpush.msra.mxu0 %v1973
        %3142 = vmatpush.msra.mxu0 %v1972
        %3143 = vmatpush.msra.mxu0 %v1971
        %3144 = vmatmul.f32.gmra.mxu0 %v3092
        %v3145 = vpop.f32.mrf.mxu0
        %v3146 = vadd.f32 %v2037, %v3145
        %3147 = vdwg.mxu0
        %3148 = vmatpush.msra.mxu0 %v2002
        %3149 = vmatpush.msra.mxu0 %v2001
        %3150 = vmatpush.msra.mxu0 %v2000
        %3151 = vmatpush.msra.mxu0 %v1999
        %3152 = vmatpush.msra.mxu0 %v1998
        %3153 = vmatpush.msra.mxu0 %v1997
        %3154 = vmatpush.msra.mxu0 %v1996
        %3155 = vmatpush.msra.mxu0 %v1995
        %3156 = vmatpush.msra.mxu0 %v1994
        %3157 = vmatpush.msra.mxu0 %v1993
        %3158 = vmatpush.msra.mxu0 %v1992
        %3159 = vmatpush.msra.mxu0 %v1991
        %3160 = vmatpush.msra.mxu0 %v1990
        %3161 = vmatpush.msra.mxu0 %v1989
        %3162 = vmatpush.msra.mxu0 %v1988
        %3163 = vmatpush.msra.mxu0 %v1987
        %3164 = vmatmul.f32.gmra.mxu0 %v3093
        %v3165 = vpop.f32.mrf.mxu0
        %v3166 = vadd.f32 %v3146, %v3165
        %3167 = vdwg.mxu0
        %3168 = vmatpush.msra.mxu0 %v2018
        %3169 = vmatpush.msra.mxu0 %v2017
        %3170 = vmatpush.msra.mxu0 %v2016
        %3171 = vmatpush.msra.mxu0 %v2015
        %3172 = vmatpush.msra.mxu0 %v2014
        %3173 = vmatpush.msra.mxu0 %v2013
        %3174 = vmatpush.msra.mxu0 %v2012
        %3175 = vmatpush.msra.mxu0 %v2011
        %3176 = vmatpush.msra.mxu0 %v2010
        %3177 = vmatpush.msra.mxu0 %v2009
        %3178 = vmatpush.msra.mxu0 %v2008
        %3179 = vmatpush.msra.mxu0 %v2007
        %3180 = vmatpush.msra.mxu0 %v2006
        %3181 = vmatpush.msra.mxu0 %v2005
        %3182 = vmatpush.msra.mxu0 %v2004
        %3183 = vmatpush.msra.mxu0 %v2003
        %3184 = vmatmul.f32.gmra.mxu0 %v3094
        %v3185 = vpop.f32.mrf.mxu0
        %v3186 = vadd.f32 %v3166, %v3185
        %3187 = vdwg.mxu0
        %3188 = vmatpush.msra.mxu0 %v2034
        %3189 = vmatpush.msra.mxu0 %v2033
        %3190 = vmatpush.msra.mxu0 %v2032
        %3191 = vmatpush.msra.mxu0 %v2031
        %3192 = vmatpush.msra.mxu0 %v2030
        %3193 = vmatpush.msra.mxu0 %v2029
        %3194 = vmatpush.msra.mxu0 %v2028
        %3195 = vmatpush.msra.mxu0 %v2027
        %3196 = vmatpush.msra.mxu0 %v2026
        %3197 = vmatpush.msra.mxu0 %v2025
        %3198 = vmatpush.msra.mxu0 %v2024
        %3199 = vmatpush.msra.mxu0 %v2023
        %3200 = vmatpush.msra.mxu0 %v2022
        %3201 = vmatpush.msra.mxu0 %v2021
        %3202 = vmatpush.msra.mxu0 %v2020
        %3203 = vmatpush.msra.mxu0 %v2019
        %3204 = vmatmul.f32.gmra.mxu0 %v3095
        %v3205 = vpop.f32.mrf.mxu0
        %v3206 = vadd.f32 %v3186, %v3205
        %3207 = vdwg.mxu0
        %3208 = vmatpush.msra.mxu0 %v1986
        %3209 = vmatpush.msra.mxu0 %v1985
        %3210 = vmatpush.msra.mxu0 %v1984
        %3211 = vmatpush.msra.mxu0 %v1983
        %3212 = vmatpush.msra.mxu0 %v1982
        %3213 = vmatpush.msra.mxu0 %v1981
        %3214 = vmatpush.msra.mxu0 %v1980
        %3215 = vmatpush.msra.mxu0 %v1979
        %3216 = vmatpush.msra.mxu0 %v1978
        %3217 = vmatpush.msra.mxu0 %v1977
        %3218 = vmatpush.msra.mxu0 %v1976
        %3219 = vmatpush.msra.mxu0 %v1975
        %3220 = vmatpush.msra.mxu0 %v1974
        %3221 = vmatpush.msra.mxu0 %v1973
        %3222 = vmatpush.msra.mxu0 %v1972
        %3223 = vmatpush.msra.mxu0 %v1971
        %3224 = vmatmul.f32.gmra.mxu0 %v3108
        %v3225 = vpop.f32.mrf.mxu0
        %v3226 = vadd.f32 %v2037, %v3225
        %3227 = vdwg.mxu0
        %3228 = vmatpush.msra.mxu0 %v2002
        %3229 = vmatpush.msra.mxu0 %v2001
        %3230 = vmatpush.msra.mxu0 %v2000
        %3231 = vmatpush.msra.mxu0 %v1999
        %3232 = vmatpush.msra.mxu0 %v1998
        %3233 = vmatpush.msra.mxu0 %v1997
        %3234 = vmatpush.msra.mxu0 %v1996
        %3235 = vmatpush.msra.mxu0 %v1995
        %3236 = vmatpush.msra.mxu0 %v1994
        %3237 = vmatpush.msra.mxu0 %v1993
        %3238 = vmatpush.msra.mxu0 %v1992
        %3239 = vmatpush.msra.mxu0 %v1991
        %3240 = vmatpush.msra.mxu0 %v1990
        %3241 = vmatpush.msra.mxu0 %v1989
        %3242 = vmatpush.msra.mxu0 %v1988
        %3243 = vmatpush.msra.mxu0 %v1987
        %3244 = vmatmul.f32.gmra.mxu0 %v3109
        %v3245 = vpop.f32.mrf.mxu0
        %v3246 = vadd.f32 %v3226, %v3245
        %3247 = vdwg.mxu0
        %3248 = vmatpush.msra.mxu0 %v2018
        %3249 = vmatpush.msra.mxu0 %v2017
        %3250 = vmatpush.msra.mxu0 %v2016
        %3251 = vmatpush.msra.mxu0 %v2015
        %3252 = vmatpush.msra.mxu0 %v2014
        %3253 = vmatpush.msra.mxu0 %v2013
        %3254 = vmatpush.msra.mxu0 %v2012
        %3255 = vmatpush.msra.mxu0 %v2011
        %3256 = vmatpush.msra.mxu0 %v2010
        %3257 = vmatpush.msra.mxu0 %v2009
        %3258 = vmatpush.msra.mxu0 %v2008
        %3259 = vmatpush.msra.mxu0 %v2007
        %3260 = vmatpush.msra.mxu0 %v2006
        %3261 = vmatpush.msra.mxu0 %v2005
        %3262 = vmatpush.msra.mxu0 %v2004
        %3263 = vmatpush.msra.mxu0 %v2003
        %3264 = vmatmul.f32.gmra.mxu0 %v3110
        %v3265 = vpop.f32.mrf.mxu0
        %v3266 = vadd.f32 %v3246, %v3265
        %3267 = vdwg.mxu0
        %3268 = vmatpush.msra.mxu0 %v2034
        %3269 = vmatpush.msra.mxu0 %v2033
        %3270 = vmatpush.msra.mxu0 %v2032
        %3271 = vmatpush.msra.mxu0 %v2031
        %3272 = vmatpush.msra.mxu0 %v2030
        %3273 = vmatpush.msra.mxu0 %v2029
        %3274 = vmatpush.msra.mxu0 %v2028
        %3275 = vmatpush.msra.mxu0 %v2027
        %3276 = vmatpush.msra.mxu0 %v2026
        %3277 = vmatpush.msra.mxu0 %v2025
        %3278 = vmatpush.msra.mxu0 %v2024
        %3279 = vmatpush.msra.mxu0 %v2023
        %3280 = vmatpush.msra.mxu0 %v2022
        %3281 = vmatpush.msra.mxu0 %v2021
        %3282 = vmatpush.msra.mxu0 %v2020
        %3283 = vmatpush.msra.mxu0 %v2019
        %3284 = vmatmul.f32.gmra.mxu0 %v3111
        %v3285 = vpop.f32.mrf.mxu0
        %v3286 = vadd.f32 %v3266, %v3285
        %3287 = vdwg.mxu0
        %3288 = vmatpush.msra.mxu0 %v1986
        %3289 = vmatpush.msra.mxu0 %v1985
        %3290 = vmatpush.msra.mxu0 %v1984
        %3291 = vmatpush.msra.mxu0 %v1983
        %3292 = vmatpush.msra.mxu0 %v1982
        %3293 = vmatpush.msra.mxu0 %v1981
        %3294 = vmatpush.msra.mxu0 %v1980
        %3295 = vmatpush.msra.mxu0 %v1979
        %3296 = vmatpush.msra.mxu0 %v1978
        %3297 = vmatpush.msra.mxu0 %v1977
        %3298 = vmatpush.msra.mxu0 %v1976
        %3299 = vmatpush.msra.mxu0 %v1975
        %3300 = vmatpush.msra.mxu0 %v1974
        %3301 = vmatpush.msra.mxu0 %v1973
        %3302 = vmatpush.msra.mxu0 %v1972
        %3303 = vmatpush.msra.mxu0 %v1971
        %3304 = vmatmul.f32.gmra.mxu0 %v3124
        %v3305 = vpop.f32.mrf.mxu0
        %v3306 = vadd.f32 %v2037, %v3305
        %3307 = vdwg.mxu0
        %3308 = vmatpush.msra.mxu0 %v2002
        %3309 = vmatpush.msra.mxu0 %v2001
        %3310 = vmatpush.msra.mxu0 %v2000
        %3311 = vmatpush.msra.mxu0 %v1999
        %3312 = vmatpush.msra.mxu0 %v1998
        %3313 = vmatpush.msra.mxu0 %v1997
        %3314 = vmatpush.msra.mxu0 %v1996
        %3315 = vmatpush.msra.mxu0 %v1995
        %3316 = vmatpush.msra.mxu0 %v1994
        %3317 = vmatpush.msra.mxu0 %v1993
        %3318 = vmatpush.msra.mxu0 %v1992
        %3319 = vmatpush.msra.mxu0 %v1991
        %3320 = vmatpush.msra.mxu0 %v1990
        %3321 = vmatpush.msra.mxu0 %v1989
        %3322 = vmatpush.msra.mxu0 %v1988
        %3323 = vmatpush.msra.mxu0 %v1987
        %3324 = vmatmul.f32.gmra.mxu0 %v3125
        %v3325 = vpop.f32.mrf.mxu0
        %v3326 = vadd.f32 %v3306, %v3325
        %3327 = vdwg.mxu0
        %3328 = vmatpush.msra.mxu0 %v2018
        %3329 = vmatpush.msra.mxu0 %v2017
        %3330 = vmatpush.msra.mxu0 %v2016
        %3331 = vmatpush.msra.mxu0 %v2015
        %3332 = vmatpush.msra.mxu0 %v2014
        %3333 = vmatpush.msra.mxu0 %v2013
        %3334 = vmatpush.msra.mxu0 %v2012
        %3335 = vmatpush.msra.mxu0 %v2011
        %3336 = vmatpush.msra.mxu0 %v2010
        %3337 = vmatpush.msra.mxu0 %v2009
        %3338 = vmatpush.msra.mxu0 %v2008
        %3339 = vmatpush.msra.mxu0 %v2007
        %3340 = vmatpush.msra.mxu0 %v2006
        %3341 = vmatpush.msra.mxu0 %v2005
        %3342 = vmatpush.msra.mxu0 %v2004
        %3343 = vmatpush.msra.mxu0 %v2003
        %3344 = vmatmul.f32.gmra.mxu0 %v3126
        %v3345 = vpop.f32.mrf.mxu0
        %v3346 = vadd.f32 %v3326, %v3345
        %3347 = vdwg.mxu0
        %3348 = vmatpush.msra.mxu0 %v2034
        %3349 = vmatpush.msra.mxu0 %v2033
        %3350 = vmatpush.msra.mxu0 %v2032
        %3351 = vmatpush.msra.mxu0 %v2031
        %3352 = vmatpush.msra.mxu0 %v2030
        %3353 = vmatpush.msra.mxu0 %v2029
        %3354 = vmatpush.msra.mxu0 %v2028
        %3355 = vmatpush.msra.mxu0 %v2027
        %3356 = vmatpush.msra.mxu0 %v2026
        %3357 = vmatpush.msra.mxu0 %v2025
        %3358 = vmatpush.msra.mxu0 %v2024
        %3359 = vmatpush.msra.mxu0 %v2023
        %3360 = vmatpush.msra.mxu0 %v2022
        %3361 = vmatpush.msra.mxu0 %v2021
        %3362 = vmatpush.msra.mxu0 %v2020
        %3363 = vmatpush.msra.mxu0 %v2019
        %3364 = vmatmul.f32.gmra.mxu0 %v3127
        %v3365 = vpop.f32.mrf.mxu0
        %v3366 = vadd.f32 %v3346, %v3365
        %3367 = vdwg.mxu0
        %v3368 = vsel %vm2281, %v3206, 0.0
        %v3369 = vrot.slane %v3368, 4
        %v3370 = vadd.f32 %v3368, %v3369
        %v3371 = vrot.slane %v3370, 2
        %v3372 = vadd.f32 %v3370, %v3371
        %v3373 = vrot.slane %v3372, 1
        %v3374 = vadd.f32 %v3372, %v3373
        %v3375 = vadd.f32 %v3374, 0.0
        %v3376 = vsel %vm2281, %v3286, 0.0
        %v3377 = vrot.slane %v3376, 4
        %v3378 = vadd.f32 %v3376, %v3377
        %v3379 = vrot.slane %v3378, 2
        %v3380 = vadd.f32 %v3378, %v3379
        %v3381 = vrot.slane %v3380, 1
        %v3382 = vadd.f32 %v3380, %v3381
        %v3383 = vadd.f32 %v3375, %v3382
        %v3384 = vsel %vm2281, %v3366, 0.0
        %v3385 = vrot.slane %v3384, 4
        %v3386 = vadd.f32 %v3384, %v3385
        %v3387 = vrot.slane %v3386, 2
        %v3388 = vadd.f32 %v3386, %v3387
        %v3389 = vrot.slane %v3388, 1
        %v3390 = vadd.f32 %v3388, %v3389
        %v3391 = vadd.f32 %v3383, %v3390
        %v3392 = vmul.f32 %v3391, %v1732
        %v3393 = vsub.f32 %v3206, %v3392
        %v3394 = vmul.f32 %v3393, %v3393
        %v3395 = vsel %vm2281, %v3394, 0.0
        %v3396 = vrot.slane %v3395, 4
        %v3397 = vadd.f32 %v3395, %v3396
        %v3398 = vrot.slane %v3397, 2
        %v3399 = vadd.f32 %v3397, %v3398
        %v3400 = vrot.slane %v3399, 1
        %v3401 = vadd.f32 %v3399, %v3400
        %v3402 = vadd.f32 %v3401, 0.0
        %v3403 = vsub.f32 %v3286, %v3392
        %v3404 = vmul.f32 %v3403, %v3403
        %v3405 = vsel %vm2281, %v3404, 0.0
        %v3406 = vrot.slane %v3405, 4
        %v3407 = vadd.f32 %v3405, %v3406
        %v3408 = vrot.slane %v3407, 2
        %v3409 = vadd.f32 %v3407, %v3408
        %v3410 = vrot.slane %v3409, 1
        %v3411 = vadd.f32 %v3409, %v3410
        %v3412 = vadd.f32 %v3402, %v3411
        %v3413 = vsub.f32 %v3366, %v3392
        %v3414 = vmul.f32 %v3413, %v3413
        %v3415 = vsel %vm2281, %v3414, 0.0
        %v3416 = vrot.slane %v3415, 4
        %v3417 = vadd.f32 %v3415, %v3416
        %v3418 = vrot.slane %v3417, 2
        %v3419 = vadd.f32 %v3417, %v3418
        %v3420 = vrot.slane %v3419, 1
        %v3421 = vadd.f32 %v3419, %v3420
        %v3422 = vadd.f32 %v3412, %v3421
        %v3423 = vmul.f32 %v3422, %v1732
        %v3424 = vadd.f32 %v3423, 1e-05
        %v3425 = vrsqrt.pop %v3424
        %v3426 = vmul.f32 %v3425, %v3424
        %v3427 = vmul.f32 %v3426, %v3425
        %v3428 = vmul.f32 0.5, %v3427
        %v3429 = vsub.f32 1.5, %v3428
        %v3430 = vmul.f32 %v3425, %v3429
        %vm3431 = vweird.f32 %v3424
        %vm3432 = vweird.f32 %v3425
        %vm3433 = vmor %vm3431, %vm3432
        %v3434 = vsel %vm3433, %v3425, %v3430
        %v3435 = vmul.f32 %v3393, %v3434
        %v3436 = vmul.f32 %v3435, %v2351
        %v3437 = vadd.f32 %v3436, %v2355
        %v3438 = vmax.f32 %v3437, 0.0
        %v3439 = vmul.f32 %v3403, %v3434
        %v3440 = vmul.f32 %v3439, %v2351
        %v3441 = vadd.f32 %v3440, %v2355
        %v3442 = vmax.f32 %v3441, 0.0
        %v3443 = vmul.f32 %v3413, %v3434
        %v3444 = vmul.f32 %v3443, %v2351
        %v3445 = vadd.f32 %v3444, %v2355
        %v3446 = vmax.f32 %v3445, 0.0
        %v3447 = vsel %vm2281, %v3438, -inf
        %v3448 = vrot.slane %v3447, 4
        %v3449 = vmax.f32 %v3447, %v3448
        %v3450 = vrot.slane %v3449, 2
        %v3451 = vmax.f32 %v3449, %v3450
        %v3452 = vrot.slane %v3451, 1
        %v3453 = vmax.f32 %v3451, %v3452
        %v3454 = vsel %vm2281, %v3442, -inf
        %v3455 = vrot.slane %v3454, 4
        %v3456 = vmax.f32 %v3454, %v3455
        %v3457 = vrot.slane %v3456, 2
        %v3458 = vmax.f32 %v3456, %v3457
        %v3459 = vrot.slane %v3458, 1
        %v3460 = vmax.f32 %v3458, %v3459
        %v3461 = vsel %vm2281, %v3446, -inf
        %v3462 = vrot.slane %v3461, 4
        %v3463 = vmax.f32 %v3461, %v3462
        %v3464 = vrot.slane %v3463, 2
        %v3465 = vmax.f32 %v3463, %v3464
        %v3466 = vrot.slane %v3465, 1
        %v3467 = vmax.f32 %v3465, %v3466
        %v3468 = vlaneseq
        %v3469 = vshrl.u32 %v3468, 7
        %vm3470 = vcmp.eq.s32.totalorder %v3469, 0
        %v3471 = vsel %vm3470, %v2373, 0.0
        %vm3472 = vcmp.eq.s32.totalorder %v3469, 1
        %v3473 = vsel %vm3472, %v2380, %v3471
        %vm3474 = vcmp.eq.s32.totalorder %v3469, 2
        %v3475 = vsel %vm3474, %v2387, %v3473
        %vm3476 = vcmp.eq.s32.totalorder %v3469, 3
        %v3477 = vsel %vm3476, %v3453, %v3475
        %vm3478 = vcmp.eq.s32.totalorder %v3469, 4
        %v3479 = vsel %vm3478, %v3460, %v3477
        %vm3480 = vcmp.eq.s32.totalorder %v3469, 5
        %v3481 = vsel %vm3480, %v3467, %v3479
        %v3482 = vld [vmem:[%s45] sm:$0xff]
        %v3483 = vld [vmem:[%s45 + $0x8] sm:$0xff]
        %v3484 = vld [vmem:[%s45 + $0x10] sm:$0xff]
        %v3485 = vld [vmem:[%s45 + $0x18] sm:$0xff]
        %v3486 = vld [vmem:[%s47] sm:$0xff]
        %v3487 = vld [vmem:[%s47 + $0x8] sm:$0xff]
        %v3488 = vld [vmem:[%s47 + $0x10] sm:$0xff]
        %v3489 = vld [vmem:[%s47 + $0x18] sm:$0xff]
        %v3490 = vld [vmem:[%s47 + $0x20] sm:$0xff]
        %v3491 = vld [vmem:[%s47 + $0x28] sm:$0xff]
        %v3492 = vld [vmem:[%s47 + $0x30] sm:$0xff]
        %v3493 = vld [vmem:[%s47 + $0x38] sm:$0xff]
        %vm3494 = vcmask 523264
        %v3496 = vsel %vm3494, %v3481, 0
        %3498 = vmatpush.msra.mxu0 0.0
        %3499 = vmatpush.msra.mxu0 0.0
        %3500 = vmatpush.msra.mxu0 0.0
        %3501 = vmatpush.msra.mxu0 0.0
        %3502 = vmatpush.msra.mxu0 0.0
        %3503 = vmatpush.msra.mxu0 0.0
        %3504 = vmatpush.msra.mxu0 0.0
        %3505 = vmatpush.msra.mxu0 0.0
        %3506 = vmatpush.msra.mxu0 %v3493
        %3507 = vmatpush.msra.mxu0 %v3492
        %3508 = vmatpush.msra.mxu0 %v3491
        %3509 = vmatpush.msra.mxu0 %v3490
        %3510 = vmatpush.msra.mxu0 %v3489
        %3511 = vmatpush.msra.mxu0 %v3488
        %3512 = vmatpush.msra.mxu0 %v3487
        %3513 = vmatpush.msra.mxu0 %v3486
        %3514 = vmatmul.f32.gmra.mxu0 %v3496
        %v3515 = vpop.f32.mrf.mxu0
        %v3516 = vadd.f32 0.0, %v3515
        %3517 = vdwg.mxu0
        %3518 = vmatpush.msra.mxu0 0.0
        %3519 = vmatpush.msra.mxu0 0.0
        %3520 = vmatpush.msra.mxu0 0.0
        %3521 = vmatpush.msra.mxu0 0.0
        %3522 = vmatpush.msra.mxu0 0.0
        %3523 = vmatpush.msra.mxu0 0.0
        %3524 = vmatpush.msra.mxu0 0.0
        %3525 = vmatpush.msra.mxu0 0.0
        %3526 = vmatpush.msra.mxu0 0.0
        %3527 = vmatpush.msra.mxu0 0.0
        %3528 = vmatpush.msra.mxu0 0.0
        %3529 = vmatpush.msra.mxu0 0.0
        %3530 = vmatpush.msra.mxu0 %v3485
        %3531 = vmatpush.msra.mxu0 %v3484
        %3532 = vmatpush.msra.mxu0 %v3483
        %3533 = vmatpush.msra.mxu0 %v3482
        %3534 = vmatmul.f32.gmra.mxu0 %v1132
        %v3535 = vpop.f32.mrf.mxu0
        %v3536 = vadd.f32 %v3516, %v3535
        %3537 = vdwg.mxu0
        %v3538 = vld [vmem:[%s49] sm:$0x1]
        %v3540 = vperm.slane %v3538, 0
        %v3542 = vadd.f32 %v3536, %v3540
        %v3543 = vld [vmem:[%s51] sm:$0x1]
        %v3544 = vld [vmem:[%s53] sm:$0x1]
        %vm3545 = vcmask 521216
        %v3546 = vsel %vm3545, %v3542, 0.0
        %v3547 = vrot.slane %v3546, 4
        %v3548 = vadd.f32 %v3546, %v3547
        %v3549 = vrot.slane %v3548, 2
        %v3550 = vadd.f32 %v3548, %v3549
        %v3551 = vrot.slane %v3550, 1
        %v3552 = vadd.f32 %v3550, %v3551
        %v3553 = vrcp.pop 6.0
        %v3554 = vmul.f32 6.0, %v3553
        %v3555 = vsub.f32 1.0, %v3554
        %v3556 = vmul.f32 %v3553, %v3555
        %v3557 = vadd.f32 %v3553, %v3556
        %vm3558 = vweird.f32 %v3553
        %v3559 = vsel %vm3558, %v3553, %v3557
        %v3560 = vmul.f32 %v3552, %v3559
        %v3561 = vsub.f32 %v3542, %v3560
        %v3562 = vmul.f32 %v3561, %v3561
        %v3563 = vsel %vm3545, %v3562, 0.0
        %v3564 = vrot.slane %v3563, 4
        %v3565 = vadd.f32 %v3563, %v3564
        %v3566 = vrot.slane %v3565, 2
        %v3567 = vadd.f32 %v3565, %v3566
        %v3568 = vrot.slane %v3567, 1
        %v3569 = vadd.f32 %v3567, %v3568
        %v3570 = vmul.f32 %v3569, %v3559
        %v3571 = vadd.f32 %v3570, 1e-05
        %v3572 = vrsqrt.pop %v3571
        %v3573 = vmul.f32 %v3572, %v3571
        %v3574 = vmul.f32 %v3573, %v3572
        %v3575 = vmul.f32 0.5, %v3574
        %v3576 = vsub.f32 1.5, %v3575
        %v3577 = vmul.f32 %v3572, %v3576
        %vm3578 = vweird.f32 %v3571
        %vm3579 = vweird.f32 %v3572
        %vm3580 = vmor %vm3578, %vm3579
        %v3581 = vsel %vm3580, %v3572, %v3577
        %v3582 = vmul.f32 %v3561, %v3581
        %v3584 = vperm.slane %v3543, 0
        %v3586 = vmul.f32 %v3582, %v3584
        %v3588 = vperm.slane %v3544, 0
        %v3590 = vadd.f32 %v3586, %v3588
        %v3591 = vmax.f32 %v3590, 0.0
        %v3592 = vld [vmem:[%s55] sm:$0xff]
        %v3593 = vld [vmem:[%s55 + $0x8] sm:$0xff]
        %v3594 = vld [vmem:[%s55 + $0x10] sm:$0xff]
        %v3595 = vld [vmem:[%s55 + $0x18] sm:$0xff]
        %v3596 = vld [vmem:[%s55 + $0x20] sm:$0xff]
        %v3597 = vld [vmem:[%s55 + $0x28] sm:$0xff]
        %v3598 = vld [vmem:[%s55 + $0x30] sm:$0xff]
        %v3599 = vld [vmem:[%s55 + $0x38] sm:$0xff]
        %v3600 = vld [vmem:[%s57] sm:$0x1]
        %v3602 = vperm.slane %v3600, 0
        %v3605 = vsel %vm3494, %v3591, 0
        %3607 = vmatpush.msra.mxu0 0.0
        %3608 = vmatpush.msra.mxu0 0.0
        %3609 = vmatpush.msra.mxu0 0.0
        %3610 = vmatpush.msra.mxu0 0.0
        %3611 = vmatpush.msra.mxu0 0.0
        %3612 = vmatpush.msra.mxu0 0.0
        %3613 = vmatpush.msra.mxu0 0.0
        %3614 = vmatpush.msra.mxu0 0.0
        %3615 = vmatpush.msra.mxu0 %v3599
        %3616 = vmatpush.msra.mxu0 %v3598
        %3617 = vmatpush.msra.mxu0 %v3597
        %3618 = vmatpush.msra.mxu0 %v3596
        %3619 = vmatpush.msra.mxu0 %v3595
        %3620 = vmatpush.msra.mxu0 %v3594
        %3621 = vmatpush.msra.mxu0 %v3593
        %3622 = vmatpush.msra.mxu0 %v3592
        %3623 = vmatmul.f32.gmra.mxu0 %v3605
        %v3624 = vpop.f32.mrf.mxu0
        %v3625 = vadd.f32 %v3602, %v3624
        %3626 = vdwg.mxu0
        %v3627 = vld [vmem:[%s59] sm:$0x1]
        %v3628 = vld [vmem:[%s61] sm:$0x1]
        %v3629 = vsel %vm1119, %v3625, 0.0
        %v3630 = vrot.slane %v3629, 4
        %v3631 = vadd.f32 %v3629, %v3630
        %v3632 = vrot.slane %v3631, 2
        %v3633 = vadd.f32 %v3631, %v3632
        %v3634 = vrot.slane %v3633, 1
        %v3635 = vadd.f32 %v3633, %v3634
        %v3636 = vmul.f32 %v3635, %v3559
        %v3637 = vsub.f32 %v3625, %v3636
        %v3638 = vmul.f32 %v3637, %v3637
        %v3639 = vsel %vm1119, %v3638, 0.0
        %v3640 = vrot.slane %v3639, 4
        %v3641 = vadd.f32 %v3639, %v3640
        %v3642 = vrot.slane %v3641, 2
        %v3643 = vadd.f32 %v3641, %v3642
        %v3644 = vrot.slane %v3643, 1
        %v3645 = vadd.f32 %v3643, %v3644
        %v3646 = vmul.f32 %v3645, %v3559
        %v3647 = vadd.f32 %v3646, 1e-05
        %v3648 = vrsqrt.pop %v3647
        %v3649 = vmul.f32 %v3648, %v3647
        %v3650 = vmul.f32 %v3649, %v3648
        %v3651 = vmul.f32 0.5, %v3650
        %v3652 = vsub.f32 1.5, %v3651
        %v3653 = vmul.f32 %v3648, %v3652
        %vm3654 = vweird.f32 %v3647
        %vm3655 = vweird.f32 %v3648
        %vm3656 = vmor %vm3654, %vm3655
        %v3657 = vsel %vm3656, %v3648, %v3653
        %v3658 = vmul.f32 %v3637, %v3657
        %v3660 = vperm.slane %v3627, 0
        %v3662 = vmul.f32 %v3658, %v3660
        %v3664 = vperm.slane %v3628, 0
        %v3666 = vadd.f32 %v3662, %v3664
        %v3667 = vmax.f32 %v3666, 0.0
        %3668 = vst.msk [vmem:[#allocation2] sm:$0x3f] %vm1119, %v3667
        %3669 = vst.msk [vmem:[#allocation6] sm:$0x3f] %vm1119, %v3667
        %v3670 = vld [vmem:[%s9] sm:$0x3]
        %v3671 = vld [vmem:[%s11] sm:$0x1]
        %v3673 = vperm.slane %v3671, 0
        %v3676 = vsel %vm1262, %v1152, 0
        %v3679 = vsel %vm1266, %v3670, 0
        %3681 = vmatpush.msra.mxu0 0.0
        %3682 = vmatpush.msra.mxu0 0.0
        %3683 = vmatpush.msra.mxu0 0.0
        %3684 = vmatpush.msra.mxu0 0.0
        %3685 = vmatpush.msra.mxu0 0.0
        %3686 = vmatpush.msra.mxu0 0.0
        %3687 = vmatpush.msra.mxu0 0.0
        %3688 = vmatpush.msra.mxu0 0.0
        %3689 = vmatpush.msra.mxu0 0.0
        %3690 = vmatpush.msra.mxu0 0.0
        %3691 = vmatpush.msra.mxu0 0.0
        %3692 = vmatpush.msra.mxu0 0.0
        %3693 = vmatpush.msra.mxu0 0.0
        %3694 = vmatpush.msra.mxu0 0.0
        %3695 = vmatpush.msra.mxu0 0.0
        %3696 = vmatpush.msra.mxu0 %v3679
        %3697 = vmatmul.f32.gmra.mxu0 %v3676
        %v3698 = vpop.f32.mrf.mxu0
        %v3699 = vadd.f32 %v3673, %v3698
        %3700 = vdwg.mxu0
        %3701 = vst.msk [vmem:[#allocation4] sm:$0x3f] %vm1119, %v3699
        %p3702 = scmp.lt.s32.totalorder %s78, 3
        %s3703 = scalar_select %p3702, %s78, 3
        %s3704 = smul.addr %s3703, 8
        %s3705 = scalar_lea.vmem %s63, %s3704
        // Predicated region
        $region149: #{tpu_custom_call.1} parent=143 // pred_check
          %p3706 = pneg %p747
        $region150: #{tpu_custom_call.1} parent=143 // pred_check_branch
          %3708 = sbr.rel (%p3706) target = $region152
        $region151: #{tpu_custom_call.1} parent=143 // pred_region
          _
        $region152: #{tpu_custom_call.1} parent=143 // pred_fallthru
          _
        // Predicated region
        $region153: #{tpu_custom_call.1} parent=143 // pred_check
          %p3709 = pneg %p768
        $region154: #{tpu_custom_call.1} parent=143 // pred_check_branch
          %3711 = sbr.rel (%p3709) target = $region156
        $region155: #{tpu_custom_call.1} parent=143 // pred_region
          %3713 = vsyncadd [#allocation7], 0
          %s3715 = sshll.u32 [#allocation6], 4
          %s3716 = int_to_ptr.vmem [resolvable:$true] %s3715
          %s3717 = sshll.u32 %s65, 4
          %s3718 = int_to_ptr.hbm [resolvable:$true] %s3717
          %3720 = dma.vmem_to_hbm [thread:$0]  %s3716, 128, %s3718, [#allocation7]
        $region156: #{tpu_custom_call.1} parent=143 // pred_fallthru
          _
        // Predicated region
        $region157: #{tpu_custom_call.1} parent=143 // pred_check
          %p3721 = pneg %p768
        $region158: #{tpu_custom_call.1} parent=143 // pred_check_branch
          %3723 = sbr.rel (%p3721) target = $region160
        $region159: #{tpu_custom_call.1} parent=143 // pred_region
          %3725 = dma.done [#allocation7], 128
        $region160: #{tpu_custom_call.1} parent=143 // pred_fallthru
          _
      $region144: #{tpu_custom_call.1} parent=5 // pred_fallthru
        _
      %p3726 = scmp.le.s32.totalorder 2, %s73
      // Predicated region
      $region161: #{tpu_custom_call.1} parent=5 // pred_check
        %p3727 = pneg %p3726
      $region162: #{tpu_custom_call.1} parent=5 // pred_check_branch
        %3729 = sbr.rel (%p3727) target = $region164
      $region163: #{tpu_custom_call.1} parent=5 // pred_region
        %s3730 = ssub.s32 %s73, 2
        // Predicated region
        $region165: #{tpu_custom_call.1} parent=163 // pred_check
          %p3731 = pneg %p753
        $region166: #{tpu_custom_call.1} parent=163 // pred_check_branch
          %3733 = sbr.rel (%p3731) target = $region168
        $region167: #{tpu_custom_call.1} parent=163 // pred_region
          %p3734 = scmp.lt.s32.totalorder %s79, 3
          %s3735 = scalar_select %p3734, %s79, 3
          %s3736 = smul.addr %s3735, 8
          %s3737 = scalar_lea.vmem %s63, %s3736
        $region168: #{tpu_custom_call.1} parent=163 // pred_fallthru
          _
      $region164: #{tpu_custom_call.1} parent=5 // pred_fallthru
        _
    $region6: #{tpu_custom_call.1} parent=1 // loop_footer
      %s77 = sadd.s32 1, %s73
    $region7: #{tpu_custom_call.1} parent=1 // loop_footer_branch
      %72 = sbr.rel target = $region3
    $region8: #{tpu_custom_call.1} parent=1 // loop_exit
      _
    %3738 = vsyncpa [#allocation7], 1
    %s3739 = scalar_lea.sflag [#allocation7], 1
    %3740 = vsyncpa %s3739, 1

</llo_original>
